<compile_context>
chip_gen: v7x
topology: tpu7x:2x2x1
jax: 0.10.0
libtpu: 0.0.40
codegen_flags: <defaults>
</compile_context>

<pallas_src>
from functools import partial

import jax
import jax.numpy as jnp
from jax import lax
from jax.experimental import pallas as pl
from jax.experimental.pallas import tpu as pltpu


# ----------------------------------------------------------------------------
# Fused kernel: conv1+bn1+relu -> conv2+bn2+relu -> conv3+bn3+relu -> fc1+relu
# -> fc2.  One batch tile (B_TILE images) per grid step, everything in VMEM.
# Activation layout: (M, W*C) with M = B_TILE*H, row m = h*B_TILE + i
# (h = image row, i = image index within the tile), lane = w*C + c.
# ----------------------------------------------------------------------------
def fused_cnn_kernel(x_ref,
                     wb1_ref, b1_ref,
                     wb2_ref, b2_ref,
                     wb3_ref, b3_ref,
                     fc1w_ref, fc1b_ref,
                     fc2w_ref, fc2b_ref,
                     o_ref):
    f32 = jnp.float32
    bf16 = jnp.bfloat16
    M = x_ref.shape[0]                # B_TILE * H
    H = fc1w_ref.shape[0]
    B = M // H                        # images per grid step (B_TILE)

    # Row h-1 / h+1 of the same image: because rows are ordered (h, image),
    # a vertical neighbour is B sublanes away.  B is a multiple of 8 for the
    # production tile size, so these are tile-aligned slice+concat (plain
    # vreg moves) and the zero block doubles as the 'same' row padding.
    def shift_down(act):              # row h-1; zeros where h == 0
        return jnp.concatenate(
            [jnp.zeros((B, act.shape[1]), f32), act[:M - B, :]], axis=0)

    def shift_up(act):                # row h+1; zeros where h == H-1
        return jnp.concatenate(
            [act[B:, :], jnp.zeros((B, act.shape[1]), f32)], axis=0)

    def conv3x3_bn_relu(act, wb_ref, b_ref):
        # 3x3 'same' conv as 3 MXU matmuls (one per kernel row) against
        # banded (W*Cin, W*Cout) weights: the width direction of the conv
        # (incl. its zero padding) is folded into K, and the BN scale is
        # folded into the weights at prep time.  Chained `acc +=` keeps the
        # f32 accumulation on the MXU result path (MRB in-place on v7x).
        acc = jnp.dot(shift_down(act).astype(bf16), wb_ref[0],
                      preferred_element_type=f32)
        acc += jnp.dot(act.astype(bf16), wb_ref[1],
                       preferred_element_type=f32)
        acc += jnp.dot(shift_up(act).astype(bf16), wb_ref[2],
                       preferred_element_type=f32)
        return jnp.maximum(acc + b_ref[...], 0.0)     # folded BN bias + ReLU

    a = conv3x3_bn_relu(x_ref[...], wb1_ref, b1_ref)  # (M, W*16)
    a = conv3x3_bn_relu(a, wb2_ref, b2_ref)           # (M, W*32)
    a = conv3x3_bn_relu(a, wb3_ref, b3_ref)           # (M, W*32)

    # fc1: the flatten is implicit.  Row h of every image in the tile is the
    # contiguous sublane slice a[h*B:(h+1)*B], so each of the H dots has
    # M = B_TILE and full K = W*32 depth (same total MXU work as one
    # K = H*W*32 matmul, without a sublane->lane relayout of `a`).
    acc = jnp.dot(a[0:B, :].astype(bf16), fc1w_ref[0],
                  preferred_element_type=f32)
    for r in range(1, H):
        acc += jnp.dot(a[r * B:(r + 1) * B, :].astype(bf16), fc1w_ref[r],
                       preferred_element_type=f32)
    h = jnp.maximum(acc + fc1b_ref[...], 0.0)         # (B, hidden)

    o_ref[...] = (jnp.dot(h.astype(bf16), fc2w_ref[...],
                          preferred_element_type=f32) + fc2b_ref[...])


# ----------------------------------------------------------------------------
# One-time parameter preparation (host/XLA side, outside the hot path).
# ----------------------------------------------------------------------------
def _fold_bn(conv_b, gamma, beta, mean, var, eps=1e-5):
    inv_std = 1.0 / jnp.sqrt(var + eps)
    scale = gamma * inv_std
    bias = beta + (conv_b - mean) * scale
    return scale, bias


def _banded_conv_weight(w_oihw, width):
    """(Cout, Cin, 3, 3) torch conv weight -> (3, width*Cin, width*Cout).

    band[kh][wi*Cin+ci, wo*Cout+co] = w[co, ci, kh, wi-wo+1] when |wi-wo| <= 1,
    else 0: the width direction of the 3x3 'same' conv (incl. its zero
    padding) is folded into the matmul contraction dimension.
    """
    cout, cin, _, _ = w_oihw.shape
    w_hwio = jnp.transpose(w_oihw, (2, 3, 1, 0))            # (3, 3, Cin, Cout)
    wi = jnp.arange(width)[:, None]
    wo = jnp.arange(width)[None, :]
    kw = wi - wo + 1                                        # (W, W)
    valid = ((kw >= 0) & (kw <= 2)).astype(w_hwio.dtype)
    band = w_hwio[:, jnp.clip(kw, 0, 2), :, :]              # (3, W, W, Cin, Cout)
    band = band * valid[None, :, :, None, None]
    band = jnp.transpose(band, (0, 1, 3, 2, 4))             # (3, W, Cin, W, Cout)
    return band.reshape(3, width * cin, width * cout)


def prepare_params(params, input_shape, hidden_dim):
    H, W, _ = input_shape
    prep = {}
    for i, cout in zip((1, 2, 3), (16, 32, 32)):
        w, b, gamma, beta, mean, var = params[f"block{i}"]
        scale, bias = _fold_bn(b, gamma, beta, mean, var)
        band = _banded_conv_weight(w, W)                    # (3, W*Cin, W*Cout) f32
        band = band * jnp.tile(scale, W)[None, None, :]     # fold BN scale into W
        prep[f"wb{i}"] = band.astype(jnp.bfloat16)
        prep[f"b{i}"] = jnp.tile(bias, W).reshape(1, W * cout).astype(jnp.float32)

    # fc1: torch weight is (hidden, 32*H*W) with column index c*H*W + h*W + w
    # (NCHW flatten).  Re-order to the kernel's (h, w*32+c) activation layout
    # so the NHWC->NCHW transpose before flatten disappears.
    fc1_w = params["fc1_w"].reshape(hidden_dim, 32, H, W)   # (j, c, h, w)
    fc1_w = jnp.transpose(fc1_w, (2, 3, 1, 0))              # (h, w, c, j)
    prep["fc1_w"] = fc1_w.reshape(H, W * 32, hidden_dim).astype(jnp.bfloat16)
    prep["fc1_b"] = params["fc1_b"].reshape(1, hidden_dim).astype(jnp.float32)
    prep["fc2_w"] = jnp.transpose(params["fc2_w"]).astype(jnp.bfloat16)
    prep["fc2_b"] = params["fc2_b"].reshape(1, -1).astype(jnp.float32)
    return prep


# ----------------------------------------------------------------------------
# Forward wrapper (mirrors the PyTorch module's forward()).
# batch_tile: images per grid step.  16 -> M = 128 (v5e MXU); use 32 on
# v6e/v7x for M = 256 when the batch allows (keep >= 2 grid steps on v7x).
# ----------------------------------------------------------------------------
@partial(jax.jit, static_argnames=("output_shape", "batch_tile"))
def cnn_forward(x_nchw, prep, output_shape, batch_tile=16):
    N, Cin, H, W = x_nchw.shape
    out_dim = prep["fc2_w"].shape[-1]

    bt = min(batch_tile, N)
    n_pad = (-N) % bt
    if n_pad:
        x_nchw = jnp.concatenate(
            [x_nchw, jnp.zeros((n_pad,) + x_nchw.shape[1:], x_nchw.dtype)],
            axis=0)
    Np = N + n_pad
    G = Np // bt

    # NCHW -> per-tile row-major (h, image) layout:
    #   global row = g*(H*bt) + h*bt + i,   lane = w*Cin + c   (lane-dense).
    x2d = (jnp.transpose(x_nchw, (0, 2, 3, 1))              # (Np, H, W, Cin)
           .reshape(G, bt, H, W * Cin)
           .transpose(0, 2, 1, 3)                           # (G, H, bt, W*Cin)
           .reshape(G * H * bt, W * Cin))

    def const_spec(a):
        # Constant block index across the grid -> Pallas fetches it once.
        return pl.BlockSpec(a.shape, lambda n: (0,) * a.ndim)

    weights = (prep["wb1"], prep["b1"], prep["wb2"], prep["b2"],
               prep["wb3"], prep["b3"], prep["fc1_w"], prep["fc1_b"],
               prep["fc2_w"], prep["fc2_b"])

    out = pl.pallas_call(
        fused_cnn_kernel,
        out_shape=jax.ShapeDtypeStruct((Np, out_dim), jnp.float32),
        grid=(G,),
        in_specs=[pl.BlockSpec((bt * H, W * Cin), lambda n: (n, 0))]
                 + [const_spec(w) for w in weights],
        out_specs=pl.BlockSpec((bt, out_dim), lambda n: (n, 0)),
        compiler_params=pltpu.CompilerParams(
            dimension_semantics=("parallel",)),
    )(x2d, *weights)

    return out[:N].reshape((N,) + tuple(output_shape))


# ----------------------------------------------------------------------------
# Pure-JAX float32 reference (eval-mode BN), for a parity check.
# ----------------------------------------------------------------------------
def reference_forward(x, params, output_shape, eps=1e-5):
    def block(y, p):
        w, b, gamma, beta, mean, var = p
        y = lax.conv_general_dilated(
            y, w, (1, 1), "SAME",
            dimension_numbers=("NCHW", "OIHW", "NCHW"))
        y = y + b[None, :, None, None]
        y = (y - mean[None, :, None, None]) / jnp.sqrt(
            var[None, :, None, None] + eps)
        y = gamma[None, :, None, None] * y + beta[None, :, None, None]
        return jnp.maximum(y, 0.0)

    y = block(x, params["block1"])
    y = block(y, params["block2"])
    y = block(y, params["block3"])
    N = x.shape[0]
    y = y.reshape(N, -1)                                    # NCHW flatten
    y = jnp.maximum(y @ params["fc1_w"].T + params["fc1_b"], 0.0)
    y = y @ params["fc2_w"].T + params["fc2_b"]
    return y.reshape((N,) + tuple(output_shape))


# ----------------------------------------------------------------------------
# Parameter construction in PyTorch layouts (OIHW conv, (out,in) Linear).
# ----------------------------------------------------------------------------
def make_params(key, input_shape, output_shape, hidden_dim):
    H, W, Cin = input_shape
    ks = iter(jax.random.split(key, 32))

    def conv_block(cin, cout):
        w = 0.1 * jax.random.normal(next(ks), (cout, cin, 3, 3), jnp.float32)
        b = 0.1 * jax.random.normal(next(ks), (cout,), jnp.float32)
        gamma = 1.0 + 0.1 * jax.random.normal(next(ks), (cout,), jnp.float32)
        beta = 0.1 * jax.random.normal(next(ks), (cout,), jnp.float32)
        rmean = 0.1 * jax.random.normal(next(ks), (cout,), jnp.float32)
        rvar = 0.5 + jnp.abs(jax.random.normal(next(ks), (cout,), jnp.float32))
        return (w, b, gamma, beta, rmean, rvar)

    params = {
        "block1": conv_block(Cin, 16),
        "block2": conv_block(16, 32),
        "block3": conv_block(32, 32),
    }
    F = H * W * 32
    out_dim = 1
    for d in output_shape:
        out_dim *= d
    params["fc1_w"] = 0.05 * jax.random.normal(next(ks), (hidden_dim, F),
                                               jnp.float32)
    params["fc1_b"] = 0.05 * jax.random.normal(next(ks), (hidden_dim,),
                                               jnp.float32)
    params["fc2_w"] = 0.05 * jax.random.normal(next(ks), (out_dim, hidden_dim),
                                               jnp.float32)
    params["fc2_b"] = 0.05 * jax.random.normal(next(ks), (out_dim,),
                                               jnp.float32)
    return params


if __name__ == "__main__":
    # input_shape = (H, W, C) as implied by the module:
    #   conv1 in_channels = input_shape[2], fc1 in = H * W * 32
    input_shape = (8, 8, 4)
    output_shape = (2, 3)
    hidden_dim = 128            # module default
    N = 32                      # 2 grid steps of B_TILE=16 -> M=128 per conv matmul

    key = jax.random.PRNGKey(0)
    kx, kp = jax.random.split(key)
    H, W, Cin = input_shape
    x = jax.random.normal(kx, (N, Cin, H, W), jnp.float32)  # NCHW like PyTorch

    params = make_params(kp, input_shape, output_shape, hidden_dim)
    prep = prepare_params(params, input_shape, hidden_dim)  # one-time weight prep

    y = cnn_forward(x, prep, output_shape=output_shape, batch_tile=16)
    y = jax.block_until_ready(y)
    assert y.shape == (N,) + output_shape, y.shape
    assert y.dtype == jnp.float32

    # Parity vs. float32 reference (bf16 MXU operands -> loose tolerance).
    y_ref = reference_forward(x, params, output_shape)
    rel = float(jnp.linalg.norm(y - y_ref) / jnp.linalg.norm(y_ref))
    assert rel < 0.1, f"relative error too large: {rel}"
    print("KERNEL_OK")
</pallas_src>

<mosaic_0001>
module attributes {stable_mosaic.version = 11 : i64} {
  func.func @fused_cnn_kernel(%arg0: i32, %arg1: memref<128x32xf32, #tpu.memory_space<vmem>>, %arg2: memref<3x32x128xbf16, #tpu.memory_space<vmem>>, %arg3: memref<1x128xf32, #tpu.memory_space<vmem>>, %arg4: memref<3x128x256xbf16, #tpu.memory_space<vmem>>, %arg5: memref<1x256xf32, #tpu.memory_space<vmem>>, %arg6: memref<3x256x256xbf16, #tpu.memory_space<vmem>>, %arg7: memref<1x256xf32, #tpu.memory_space<vmem>>, %arg8: memref<8x256x128xbf16, #tpu.memory_space<vmem>>, %arg9: memref<1x128xf32, #tpu.memory_space<vmem>>, %arg10: memref<128x6xbf16, #tpu.memory_space<vmem>>, %arg11: memref<1x6xf32, #tpu.memory_space<vmem>>, %arg12: memref<16x6xf32, #tpu.memory_space<vmem>>) attributes {dimension_semantics = [#tpu.dimension_semantics<parallel>], iteration_bounds = array<i64: 2>, scalar_prefetch = 0 : i64, scratch_operands = 0 : i64, tpu.core_type = #tpu.core_type<tc>, window_params = [{transform_indices = @transform_0, window_bounds = array<i64: 128, 32>}, {pipeline_mode = #tpu.pipeline_mode<synchronous>, transform_indices = @transform_1, window_bounds = array<i64: 3, 32, 128>}, {pipeline_mode = #tpu.pipeline_mode<synchronous>, transform_indices = @transform_2, window_bounds = array<i64: 1, 128>}, {pipeline_mode = #tpu.pipeline_mode<synchronous>, transform_indices = @transform_3, window_bounds = array<i64: 3, 128, 256>}, {pipeline_mode = #tpu.pipeline_mode<synchronous>, transform_indices = @transform_4, window_bounds = array<i64: 1, 256>}, {pipeline_mode = #tpu.pipeline_mode<synchronous>, transform_indices = @transform_5, window_bounds = array<i64: 3, 256, 256>}, {pipeline_mode = #tpu.pipeline_mode<synchronous>, transform_indices = @transform_6, window_bounds = array<i64: 1, 256>}, {pipeline_mode = #tpu.pipeline_mode<synchronous>, transform_indices = @transform_7, window_bounds = array<i64: 8, 256, 128>}, {pipeline_mode = #tpu.pipeline_mode<synchronous>, transform_indices = @transform_8, window_bounds = array<i64: 1, 128>}, {pipeline_mode = #tpu.pipeline_mode<synchronous>, transform_indices = @transform_9, window_bounds = array<i64: 128, 6>}, {pipeline_mode = #tpu.pipeline_mode<synchronous>, transform_indices = @transform_10, window_bounds = array<i64: 1, 6>}, {transform_indices = @transform_11, window_bounds = array<i64: 16, 6>}]} {
    %c0 = arith.constant 0 : index
    %c0_0 = arith.constant 0 : index
    %0 = vector.load %arg1[%c0, %c0_0] : memref<128x32xf32, #tpu.memory_space<vmem>>, vector<128x32xf32>
    %cst = arith.constant 0.000000e+00 : f32
    %1 = vector.broadcast %cst : f32 to vector<16x32xf32>
    %2 = vector.extract_strided_slice %0 {offsets = [0, 0], sizes = [112, 32], strides = [1, 1]} : vector<128x32xf32> to vector<112x32xf32>
    %3 = tpu.concatenate %1, %2 in 0 : vector<16x32xf32>, vector<112x32xf32> -> vector<128x32xf32>
    %4 = arith.truncf %3 : vector<128x32xf32> to vector<128x32xbf16>
    %c0_1 = arith.constant 0 : index
    %c0_2 = arith.constant 0 : index
    %c0_3 = arith.constant 0 : index
    %5 = vector.load %arg2[%c0_1, %c0_2, %c0_3] : memref<3x32x128xbf16, #tpu.memory_space<vmem>>, vector<1x32x128xbf16>
    %6 = vector.shape_cast %5 : vector<1x32x128xbf16> to vector<32x128xbf16>
    %cst_4 = arith.constant dense<0.000000e+00> : vector<128x128xf32>
    %7 = tpu.matmul %4, %6, %cst_4 {dimension_numbers = #tpu.dot_dimension_numbers<[1], [0], [0], [1], [0, 0, 1, 1], [], []>} : vector<128x32xbf16>, vector<32x128xbf16>, vector<128x128xf32> -> vector<128x128xf32>
    %8 = arith.truncf %0 : vector<128x32xf32> to vector<128x32xbf16>
    %c1 = arith.constant 1 : index
    %c0_5 = arith.constant 0 : index
    %c0_6 = arith.constant 0 : index
    %9 = vector.load %arg2[%c1, %c0_5, %c0_6] : memref<3x32x128xbf16, #tpu.memory_space<vmem>>, vector<1x32x128xbf16>
    %10 = vector.shape_cast %9 : vector<1x32x128xbf16> to vector<32x128xbf16>
    %cst_7 = arith.constant dense<0.000000e+00> : vector<128x128xf32>
    %11 = tpu.matmul %8, %10, %cst_7 {dimension_numbers = #tpu.dot_dimension_numbers<[1], [0], [0], [1], [0, 0, 1, 1], [], []>} : vector<128x32xbf16>, vector<32x128xbf16>, vector<128x128xf32> -> vector<128x128xf32>
    %12 = arith.addf %7, %11 : vector<128x128xf32>
    %13 = vector.extract_strided_slice %0 {offsets = [16, 0], sizes = [112, 32], strides = [1, 1]} : vector<128x32xf32> to vector<112x32xf32>
    %cst_8 = arith.constant 0.000000e+00 : f32
    %14 = vector.broadcast %cst_8 : f32 to vector<16x32xf32>
    %15 = tpu.concatenate %13, %14 in 0 : vector<112x32xf32>, vector<16x32xf32> -> vector<128x32xf32>
    %16 = arith.truncf %15 : vector<128x32xf32> to vector<128x32xbf16>
    %c2 = arith.constant 2 : index
    %c0_9 = arith.constant 0 : index
    %c0_10 = arith.constant 0 : index
    %17 = vector.load %arg2[%c2, %c0_9, %c0_10] : memref<3x32x128xbf16, #tpu.memory_space<vmem>>, vector<1x32x128xbf16>
    %18 = vector.shape_cast %17 : vector<1x32x128xbf16> to vector<32x128xbf16>
    %cst_11 = arith.constant dense<0.000000e+00> : vector<128x128xf32>
    %19 = tpu.matmul %16, %18, %cst_11 {dimension_numbers = #tpu.dot_dimension_numbers<[1], [0], [0], [1], [0, 0, 1, 1], [], []>} : vector<128x32xbf16>, vector<32x128xbf16>, vector<128x128xf32> -> vector<128x128xf32>
    %20 = arith.addf %12, %19 : vector<128x128xf32>
    %c0_12 = arith.constant 0 : index
    %c0_13 = arith.constant 0 : index
    %21 = vector.load %arg3[%c0_12, %c0_13] : memref<1x128xf32, #tpu.memory_space<vmem>>, vector<1x128xf32>
    %22 = vector.broadcast %21 : vector<1x128xf32> to vector<128x128xf32>
    %23 = arith.addf %20, %22 : vector<128x128xf32>
    %cst_14 = arith.constant 0.000000e+00 : f32
    %24 = vector.broadcast %cst_14 : f32 to vector<128x128xf32>
    %25 = arith.maximumf %23, %24 : vector<128x128xf32>
    %cst_15 = arith.constant 0.000000e+00 : f32
    %26 = vector.broadcast %cst_15 : f32 to vector<16x128xf32>
    %27 = vector.extract_strided_slice %25 {offsets = [0, 0], sizes = [112, 128], strides = [1, 1]} : vector<128x128xf32> to vector<112x128xf32>
    %28 = tpu.concatenate %26, %27 in 0 : vector<16x128xf32>, vector<112x128xf32> -> vector<128x128xf32>
    %29 = arith.truncf %28 : vector<128x128xf32> to vector<128x128xbf16>
    %c0_16 = arith.constant 0 : index
    %c0_17 = arith.constant 0 : index
    %c0_18 = arith.constant 0 : index
    %30 = vector.load %arg4[%c0_16, %c0_17, %c0_18] : memref<3x128x256xbf16, #tpu.memory_space<vmem>>, vector<1x128x256xbf16>
    %31 = vector.shape_cast %30 : vector<1x128x256xbf16> to vector<128x256xbf16>
    %cst_19 = arith.constant dense<0.000000e+00> : vector<128x256xf32>
    %32 = tpu.matmul %29, %31, %cst_19 {dimension_numbers = #tpu.dot_dimension_numbers<[1], [0], [0], [1], [0, 0, 1, 1], [], []>} : vector<128x128xbf16>, vector<128x256xbf16>, vector<128x256xf32> -> vector<128x256xf32>
    %33 = arith.truncf %25 : vector<128x128xf32> to vector<128x128xbf16>
    %c1_20 = arith.constant 1 : index
    %c0_21 = arith.constant 0 : index
    %c0_22 = arith.constant 0 : index
    %34 = vector.load %arg4[%c1_20, %c0_21, %c0_22] : memref<3x128x256xbf16, #tpu.memory_space<vmem>>, vector<1x128x256xbf16>
    %35 = vector.shape_cast %34 : vector<1x128x256xbf16> to vector<128x256xbf16>
    %cst_23 = arith.constant dense<0.000000e+00> : vector<128x256xf32>
    %36 = tpu.matmul %33, %35, %cst_23 {dimension_numbers = #tpu.dot_dimension_numbers<[1], [0], [0], [1], [0, 0, 1, 1], [], []>} : vector<128x128xbf16>, vector<128x256xbf16>, vector<128x256xf32> -> vector<128x256xf32>
    %37 = arith.addf %32, %36 : vector<128x256xf32>
    %38 = vector.extract_strided_slice %25 {offsets = [16, 0], sizes = [112, 128], strides = [1, 1]} : vector<128x128xf32> to vector<112x128xf32>
    %cst_24 = arith.constant 0.000000e+00 : f32
    %39 = vector.broadcast %cst_24 : f32 to vector<16x128xf32>
    %40 = tpu.concatenate %38, %39 in 0 : vector<112x128xf32>, vector<16x128xf32> -> vector<128x128xf32>
    %41 = arith.truncf %40 : vector<128x128xf32> to vector<128x128xbf16>
    %c2_25 = arith.constant 2 : index
    %c0_26 = arith.constant 0 : index
    %c0_27 = arith.constant 0 : index
    %42 = vector.load %arg4[%c2_25, %c0_26, %c0_27] : memref<3x128x256xbf16, #tpu.memory_space<vmem>>, vector<1x128x256xbf16>
    %43 = vector.shape_cast %42 : vector<1x128x256xbf16> to vector<128x256xbf16>
    %cst_28 = arith.constant dense<0.000000e+00> : vector<128x256xf32>
    %44 = tpu.matmul %41, %43, %cst_28 {dimension_numbers = #tpu.dot_dimension_numbers<[1], [0], [0], [1], [0, 0, 1, 1], [], []>} : vector<128x128xbf16>, vector<128x256xbf16>, vector<128x256xf32> -> vector<128x256xf32>
    %45 = arith.addf %37, %44 : vector<128x256xf32>
    %c0_29 = arith.constant 0 : index
    %c0_30 = arith.constant 0 : index
    %46 = vector.load %arg5[%c0_29, %c0_30] : memref<1x256xf32, #tpu.memory_space<vmem>>, vector<1x256xf32>
    %47 = vector.broadcast %46 : vector<1x256xf32> to vector<128x256xf32>
    %48 = arith.addf %45, %47 : vector<128x256xf32>
    %cst_31 = arith.constant 0.000000e+00 : f32
    %49 = vector.broadcast %cst_31 : f32 to vector<128x256xf32>
    %50 = arith.maximumf %48, %49 : vector<128x256xf32>
    %cst_32 = arith.constant 0.000000e+00 : f32
    %51 = vector.broadcast %cst_32 : f32 to vector<16x256xf32>
    %52 = vector.extract_strided_slice %50 {offsets = [0, 0], sizes = [112, 256], strides = [1, 1]} : vector<128x256xf32> to vector<112x256xf32>
    %53 = tpu.concatenate %51, %52 in 0 : vector<16x256xf32>, vector<112x256xf32> -> vector<128x256xf32>
    %54 = arith.truncf %53 : vector<128x256xf32> to vector<128x256xbf16>
    %c0_33 = arith.constant 0 : index
    %c0_34 = arith.constant 0 : index
    %c0_35 = arith.constant 0 : index
    %55 = vector.load %arg6[%c0_33, %c0_34, %c0_35] : memref<3x256x256xbf16, #tpu.memory_space<vmem>>, vector<1x256x256xbf16>
    %56 = vector.shape_cast %55 : vector<1x256x256xbf16> to vector<256x256xbf16>
    %cst_36 = arith.constant dense<0.000000e+00> : vector<128x256xf32>
    %57 = tpu.matmul %54, %56, %cst_36 {dimension_numbers = #tpu.dot_dimension_numbers<[1], [0], [0], [1], [0, 0, 1, 1], [], []>} : vector<128x256xbf16>, vector<256x256xbf16>, vector<128x256xf32> -> vector<128x256xf32>
    %58 = arith.truncf %50 : vector<128x256xf32> to vector<128x256xbf16>
    %c1_37 = arith.constant 1 : index
    %c0_38 = arith.constant 0 : index
    %c0_39 = arith.constant 0 : index
    %59 = vector.load %arg6[%c1_37, %c0_38, %c0_39] : memref<3x256x256xbf16, #tpu.memory_space<vmem>>, vector<1x256x256xbf16>
    %60 = vector.shape_cast %59 : vector<1x256x256xbf16> to vector<256x256xbf16>
    %cst_40 = arith.constant dense<0.000000e+00> : vector<128x256xf32>
    %61 = tpu.matmul %58, %60, %cst_40 {dimension_numbers = #tpu.dot_dimension_numbers<[1], [0], [0], [1], [0, 0, 1, 1], [], []>} : vector<128x256xbf16>, vector<256x256xbf16>, vector<128x256xf32> -> vector<128x256xf32>
    %62 = arith.addf %57, %61 : vector<128x256xf32>
    %63 = vector.extract_strided_slice %50 {offsets = [16, 0], sizes = [112, 256], strides = [1, 1]} : vector<128x256xf32> to vector<112x256xf32>
    %cst_41 = arith.constant 0.000000e+00 : f32
    %64 = vector.broadcast %cst_41 : f32 to vector<16x256xf32>
    %65 = tpu.concatenate %63, %64 in 0 : vector<112x256xf32>, vector<16x256xf32> -> vector<128x256xf32>
    %66 = arith.truncf %65 : vector<128x256xf32> to vector<128x256xbf16>
    %c2_42 = arith.constant 2 : index
    %c0_43 = arith.constant 0 : index
    %c0_44 = arith.constant 0 : index
    %67 = vector.load %arg6[%c2_42, %c0_43, %c0_44] : memref<3x256x256xbf16, #tpu.memory_space<vmem>>, vector<1x256x256xbf16>
    %68 = vector.shape_cast %67 : vector<1x256x256xbf16> to vector<256x256xbf16>
    %cst_45 = arith.constant dense<0.000000e+00> : vector<128x256xf32>
    %69 = tpu.matmul %66, %68, %cst_45 {dimension_numbers = #tpu.dot_dimension_numbers<[1], [0], [0], [1], [0, 0, 1, 1], [], []>} : vector<128x256xbf16>, vector<256x256xbf16>, vector<128x256xf32> -> vector<128x256xf32>
    %70 = arith.addf %62, %69 : vector<128x256xf32>
    %c0_46 = arith.constant 0 : index
    %c0_47 = arith.constant 0 : index
    %71 = vector.load %arg7[%c0_46, %c0_47] : memref<1x256xf32, #tpu.memory_space<vmem>>, vector<1x256xf32>
    %72 = vector.broadcast %71 : vector<1x256xf32> to vector<128x256xf32>
    %73 = arith.addf %70, %72 : vector<128x256xf32>
    %cst_48 = arith.constant 0.000000e+00 : f32
    %74 = vector.broadcast %cst_48 : f32 to vector<128x256xf32>
    %75 = arith.maximumf %73, %74 : vector<128x256xf32>
    %76 = vector.extract_strided_slice %75 {offsets = [0, 0], sizes = [16, 256], strides = [1, 1]} : vector<128x256xf32> to vector<16x256xf32>
    %77 = arith.truncf %76 : vector<16x256xf32> to vector<16x256xbf16>
    %c0_49 = arith.constant 0 : index
    %c0_50 = arith.constant 0 : index
    %c0_51 = arith.constant 0 : index
    %78 = vector.load %arg8[%c0_49, %c0_50, %c0_51] : memref<8x256x128xbf16, #tpu.memory_space<vmem>>, vector<1x256x128xbf16>
    %79 = vector.shape_cast %78 : vector<1x256x128xbf16> to vector<256x128xbf16>
    %cst_52 = arith.constant dense<0.000000e+00> : vector<16x128xf32>
    %80 = tpu.matmul %77, %79, %cst_52 {dimension_numbers = #tpu.dot_dimension_numbers<[1], [0], [0], [1], [0, 0, 1, 1], [], []>} : vector<16x256xbf16>, vector<256x128xbf16>, vector<16x128xf32> -> vector<16x128xf32>
    %81 = vector.extract_strided_slice %75 {offsets = [16, 0], sizes = [16, 256], strides = [1, 1]} : vector<128x256xf32> to vector<16x256xf32>
    %82 = arith.truncf %81 : vector<16x256xf32> to vector<16x256xbf16>
    %c1_53 = arith.constant 1 : index
    %c0_54 = arith.constant 0 : index
    %c0_55 = arith.constant 0 : index
    %83 = vector.load %arg8[%c1_53, %c0_54, %c0_55] : memref<8x256x128xbf16, #tpu.memory_space<vmem>>, vector<1x256x128xbf16>
    %84 = vector.shape_cast %83 : vector<1x256x128xbf16> to vector<256x128xbf16>
    %cst_56 = arith.constant dense<0.000000e+00> : vector<16x128xf32>
    %85 = tpu.matmul %82, %84, %cst_56 {dimension_numbers = #tpu.dot_dimension_numbers<[1], [0], [0], [1], [0, 0, 1, 1], [], []>} : vector<16x256xbf16>, vector<256x128xbf16>, vector<16x128xf32> -> vector<16x128xf32>
    %86 = arith.addf %80, %85 : vector<16x128xf32>
    %87 = vector.extract_strided_slice %75 {offsets = [32, 0], sizes = [16, 256], strides = [1, 1]} : vector<128x256xf32> to vector<16x256xf32>
    %88 = arith.truncf %87 : vector<16x256xf32> to vector<16x256xbf16>
    %c2_57 = arith.constant 2 : index
    %c0_58 = arith.constant 0 : index
    %c0_59 = arith.constant 0 : index
    %89 = vector.load %arg8[%c2_57, %c0_58, %c0_59] : memref<8x256x128xbf16, #tpu.memory_space<vmem>>, vector<1x256x128xbf16>
    %90 = vector.shape_cast %89 : vector<1x256x128xbf16> to vector<256x128xbf16>
    %cst_60 = arith.constant dense<0.000000e+00> : vector<16x128xf32>
    %91 = tpu.matmul %88, %90, %cst_60 {dimension_numbers = #tpu.dot_dimension_numbers<[1], [0], [0], [1], [0, 0, 1, 1], [], []>} : vector<16x256xbf16>, vector<256x128xbf16>, vector<16x128xf32> -> vector<16x128xf32>
    %92 = arith.addf %86, %91 : vector<16x128xf32>
    %93 = vector.extract_strided_slice %75 {offsets = [48, 0], sizes = [16, 256], strides = [1, 1]} : vector<128x256xf32> to vector<16x256xf32>
    %94 = arith.truncf %93 : vector<16x256xf32> to vector<16x256xbf16>
    %c3 = arith.constant 3 : index
    %c0_61 = arith.constant 0 : index
    %c0_62 = arith.constant 0 : index
    %95 = vector.load %arg8[%c3, %c0_61, %c0_62] : memref<8x256x128xbf16, #tpu.memory_space<vmem>>, vector<1x256x128xbf16>
    %96 = vector.shape_cast %95 : vector<1x256x128xbf16> to vector<256x128xbf16>
    %cst_63 = arith.constant dense<0.000000e+00> : vector<16x128xf32>
    %97 = tpu.matmul %94, %96, %cst_63 {dimension_numbers = #tpu.dot_dimension_numbers<[1], [0], [0], [1], [0, 0, 1, 1], [], []>} : vector<16x256xbf16>, vector<256x128xbf16>, vector<16x128xf32> -> vector<16x128xf32>
    %98 = arith.addf %92, %97 : vector<16x128xf32>
    %99 = vector.extract_strided_slice %75 {offsets = [64, 0], sizes = [16, 256], strides = [1, 1]} : vector<128x256xf32> to vector<16x256xf32>
    %100 = arith.truncf %99 : vector<16x256xf32> to vector<16x256xbf16>
    %c4 = arith.constant 4 : index
    %c0_64 = arith.constant 0 : index
    %c0_65 = arith.constant 0 : index
    %101 = vector.load %arg8[%c4, %c0_64, %c0_65] : memref<8x256x128xbf16, #tpu.memory_space<vmem>>, vector<1x256x128xbf16>
    %102 = vector.shape_cast %101 : vector<1x256x128xbf16> to vector<256x128xbf16>
    %cst_66 = arith.constant dense<0.000000e+00> : vector<16x128xf32>
    %103 = tpu.matmul %100, %102, %cst_66 {dimension_numbers = #tpu.dot_dimension_numbers<[1], [0], [0], [1], [0, 0, 1, 1], [], []>} : vector<16x256xbf16>, vector<256x128xbf16>, vector<16x128xf32> -> vector<16x128xf32>
    %104 = arith.addf %98, %103 : vector<16x128xf32>
    %105 = vector.extract_strided_slice %75 {offsets = [80, 0], sizes = [16, 256], strides = [1, 1]} : vector<128x256xf32> to vector<16x256xf32>
    %106 = arith.truncf %105 : vector<16x256xf32> to vector<16x256xbf16>
    %c5 = arith.constant 5 : index
    %c0_67 = arith.constant 0 : index
    %c0_68 = arith.constant 0 : index
    %107 = vector.load %arg8[%c5, %c0_67, %c0_68] : memref<8x256x128xbf16, #tpu.memory_space<vmem>>, vector<1x256x128xbf16>
    %108 = vector.shape_cast %107 : vector<1x256x128xbf16> to vector<256x128xbf16>
    %cst_69 = arith.constant dense<0.000000e+00> : vector<16x128xf32>
    %109 = tpu.matmul %106, %108, %cst_69 {dimension_numbers = #tpu.dot_dimension_numbers<[1], [0], [0], [1], [0, 0, 1, 1], [], []>} : vector<16x256xbf16>, vector<256x128xbf16>, vector<16x128xf32> -> vector<16x128xf32>
    %110 = arith.addf %104, %109 : vector<16x128xf32>
    %111 = vector.extract_strided_slice %75 {offsets = [96, 0], sizes = [16, 256], strides = [1, 1]} : vector<128x256xf32> to vector<16x256xf32>
    %112 = arith.truncf %111 : vector<16x256xf32> to vector<16x256xbf16>
    %c6 = arith.constant 6 : index
    %c0_70 = arith.constant 0 : index
    %c0_71 = arith.constant 0 : index
    %113 = vector.load %arg8[%c6, %c0_70, %c0_71] : memref<8x256x128xbf16, #tpu.memory_space<vmem>>, vector<1x256x128xbf16>
    %114 = vector.shape_cast %113 : vector<1x256x128xbf16> to vector<256x128xbf16>
    %cst_72 = arith.constant dense<0.000000e+00> : vector<16x128xf32>
    %115 = tpu.matmul %112, %114, %cst_72 {dimension_numbers = #tpu.dot_dimension_numbers<[1], [0], [0], [1], [0, 0, 1, 1], [], []>} : vector<16x256xbf16>, vector<256x128xbf16>, vector<16x128xf32> -> vector<16x128xf32>
    %116 = arith.addf %110, %115 : vector<16x128xf32>
    %117 = vector.extract_strided_slice %75 {offsets = [112, 0], sizes = [16, 256], strides = [1, 1]} : vector<128x256xf32> to vector<16x256xf32>
    %118 = arith.truncf %117 : vector<16x256xf32> to vector<16x256xbf16>
    %c7 = arith.constant 7 : index
    %c0_73 = arith.constant 0 : index
    %c0_74 = arith.constant 0 : index
    %119 = vector.load %arg8[%c7, %c0_73, %c0_74] : memref<8x256x128xbf16, #tpu.memory_space<vmem>>, vector<1x256x128xbf16>
    %120 = vector.shape_cast %119 : vector<1x256x128xbf16> to vector<256x128xbf16>
    %cst_75 = arith.constant dense<0.000000e+00> : vector<16x128xf32>
    %121 = tpu.matmul %118, %120, %cst_75 {dimension_numbers = #tpu.dot_dimension_numbers<[1], [0], [0], [1], [0, 0, 1, 1], [], []>} : vector<16x256xbf16>, vector<256x128xbf16>, vector<16x128xf32> -> vector<16x128xf32>
    %122 = arith.addf %116, %121 : vector<16x128xf32>
    %c0_76 = arith.constant 0 : index
    %c0_77 = arith.constant 0 : index
    %123 = vector.load %arg9[%c0_76, %c0_77] : memref<1x128xf32, #tpu.memory_space<vmem>>, vector<1x128xf32>
    %124 = vector.broadcast %123 : vector<1x128xf32> to vector<16x128xf32>
    %125 = arith.addf %122, %124 : vector<16x128xf32>
    %cst_78 = arith.constant 0.000000e+00 : f32
    %126 = vector.broadcast %cst_78 : f32 to vector<16x128xf32>
    %127 = arith.maximumf %125, %126 : vector<16x128xf32>
    %128 = arith.truncf %127 : vector<16x128xf32> to vector<16x128xbf16>
    %c0_79 = arith.constant 0 : index
    %c0_80 = arith.constant 0 : index
    %129 = vector.load %arg10[%c0_79, %c0_80] : memref<128x6xbf16, #tpu.memory_space<vmem>>, vector<128x6xbf16>
    %cst_81 = arith.constant dense<0.000000e+00> : vector<16x6xf32>
    %130 = tpu.matmul %128, %129, %cst_81 {dimension_numbers = #tpu.dot_dimension_numbers<[1], [0], [0], [1], [0, 0, 1, 1], [], []>} : vector<16x128xbf16>, vector<128x6xbf16>, vector<16x6xf32> -> vector<16x6xf32>
    %c0_82 = arith.constant 0 : index
    %c0_83 = arith.constant 0 : index
    %131 = vector.load %arg11[%c0_82, %c0_83] : memref<1x6xf32, #tpu.memory_space<vmem>>, vector<1x6xf32>
    %132 = vector.broadcast %131 : vector<1x6xf32> to vector<16x6xf32>
    %133 = arith.addf %130, %132 : vector<16x6xf32>
    %c0_84 = arith.constant 0 : index
    %c0_85 = arith.constant 0 : index
    %134 = vector.load %arg12[%c0_84, %c0_85] : memref<16x6xf32, #tpu.memory_space<vmem>>, vector<16x6xf32>
    tpu.vector_store %arg12[%c0_84, %c0_85], %133 {strides = array<i32>} : memref<16x6xf32, #tpu.memory_space<vmem>>, vector<16x6xf32>,
    return
  }
  func.func @transform_0(%arg0: i32) -> (i32, i32) {
    %c0_i32 = arith.constant 0 : i32
    %c0_i32_0 = arith.constant 0 : i32
    return %arg0, %c0_i32 : i32, i32
  }
  func.func @transform_1(%arg0: i32) -> (i32, i32, i32) {
    %c0_i32 = arith.constant 0 : i32
    %c0_i32_0 = arith.constant 0 : i32
    %c0_i32_1 = arith.constant 0 : i32
    %c0_i32_2 = arith.constant 0 : i32
    return %c0_i32, %c0_i32_0, %c0_i32_1 : i32, i32, i32
  }
  func.func @transform_2(%arg0: i32) -> (i32, i32) {
    %c0_i32 = arith.constant 0 : i32
    %c0_i32_0 = arith.constant 0 : i32
    %c0_i32_1 = arith.constant 0 : i32
    return %c0_i32, %c0_i32_0 : i32, i32
  }
  func.func @transform_3(%arg0: i32) -> (i32, i32, i32) {
    %c0_i32 = arith.constant 0 : i32
    %c0_i32_0 = arith.constant 0 : i32
    %c0_i32_1 = arith.constant 0 : i32
    %c0_i32_2 = arith.constant 0 : i32
    return %c0_i32, %c0_i32_0, %c0_i32_1 : i32, i32, i32
  }
  func.func @transform_4(%arg0: i32) -> (i32, i32) {
    %c0_i32 = arith.constant 0 : i32
    %c0_i32_0 = arith.constant 0 : i32
    %c0_i32_1 = arith.constant 0 : i32
    return %c0_i32, %c0_i32_0 : i32, i32
  }
  func.func @transform_5(%arg0: i32) -> (i32, i32, i32) {
    %c0_i32 = arith.constant 0 : i32
    %c0_i32_0 = arith.constant 0 : i32
    %c0_i32_1 = arith.constant 0 : i32
    %c0_i32_2 = arith.constant 0 : i32
    return %c0_i32, %c0_i32_0, %c0_i32_1 : i32, i32, i32
  }
  func.func @transform_6(%arg0: i32) -> (i32, i32) {
    %c0_i32 = arith.constant 0 : i32
    %c0_i32_0 = arith.constant 0 : i32
    %c0_i32_1 = arith.constant 0 : i32
    return %c0_i32, %c0_i32_0 : i32, i32
  }
  func.func @transform_7(%arg0: i32) -> (i32, i32, i32) {
    %c0_i32 = arith.constant 0 : i32
    %c0_i32_0 = arith.constant 0 : i32
    %c0_i32_1 = arith.constant 0 : i32
    %c0_i32_2 = arith.constant 0 : i32
    return %c0_i32, %c0_i32_0, %c0_i32_1 : i32, i32, i32
  }
  func.func @transform_8(%arg0: i32) -> (i32, i32) {
    %c0_i32 = arith.constant 0 : i32
    %c0_i32_0 = arith.constant 0 : i32
    %c0_i32_1 = arith.constant 0 : i32
    return %c0_i32, %c0_i32_0 : i32, i32
  }
  func.func @transform_9(%arg0: i32) -> (i32, i32) {
    %c0_i32 = arith.constant 0 : i32
    %c0_i32_0 = arith.constant 0 : i32
    %c0_i32_1 = arith.constant 0 : i32
    return %c0_i32, %c0_i32_0 : i32, i32
  }
  func.func @transform_10(%arg0: i32) -> (i32, i32) {
    %c0_i32 = arith.constant 0 : i32
    %c0_i32_0 = arith.constant 0 : i32
    %c0_i32_1 = arith.constant 0 : i32
    return %c0_i32, %c0_i32_0 : i32, i32
  }
  func.func @transform_11(%arg0: i32) -> (i32, i32) {
    %c0_i32 = arith.constant 0 : i32
    %c0_i32_0 = arith.constant 0 : i32
    return %arg0, %c0_i32 : i32, i32
  }
}

</mosaic_0001>

<llo_original>
// kernel: cnn_forward.1
$region0: #{cnn_forward.1}
  #allocation0 [shape = 'u32[]', space=smem, size = 0x4, offset = 0x4, fixed_abs, tag = 'smem constant byte address 0x4 - core index']
  #allocation1 [shape = 'u32[144,128]{1,0:T(1,128)}', space=vmem, size = 0x12000, scoped, tag = 'internal scratch']
  %s0 = inlined_call_operand.vmem [shape: f32[256,32], index: 0, kind: input, shape index: {}]
  %s1 = inlined_call_operand.vmem [shape: bf16[3,32,128], index: 1, kind: input, shape index: {}]
  %s2 = inlined_call_operand.vmem [shape: f32[1,128], index: 2, kind: input, shape index: {}]
  %s3 = inlined_call_operand.hbm [shape: bf16[3,128,256], index: 3, kind: input, shape index: {}]
  %s4 = inlined_call_operand.vmem [shape: f32[1,256], index: 4, kind: input, shape index: {}]
  %s5 = inlined_call_operand.vmem [shape: bf16[3,256,256], index: 5, kind: input, shape index: {}]
  %s6 = inlined_call_operand.vmem [shape: f32[1,256], index: 6, kind: input, shape index: {}]
  %s7 = inlined_call_operand.vmem [shape: bf16[8,256,128], index: 7, kind: input, shape index: {}]
  %s8 = inlined_call_operand.vmem [shape: f32[1,128], index: 8, kind: input, shape index: {}]
  %s9 = inlined_call_operand.vmem [shape: bf16[128,6], index: 9, kind: input, shape index: {}]
  %s10 = inlined_call_operand.vmem [shape: f32[1,6], index: 10, kind: input, shape index: {}]
  %s11 = inlined_call_operand.vmem [shape: f32[32,6], index: 11, kind: output, shape index: {}]
  %s12 = sld [smem:[#allocation0]]
  $region81: #{cnn_forward.1} parent=0
    _
  %s14 = ssub.s32 1, %s12
  %s15 = scalar_select 0, %s14, %s12
  $region1: #{cnn_forward.1} parent=0
    #allocation2 [shape = 'u8[196608]{0}', space=vmem, size = 0x30000, scoped, tag = 'input window, operand 3, single buffered']
    #allocation3 [shape = 's32[2]{0}', space=sflag, size = 0x8, scoped, tag = 'scoped memory for cnn_forward.1']
    %16 = vsyncpa [#allocation3], 0
    loop: start=0, step=1, limit=4
    $region2: #{cnn_forward.1} parent=1 // loop_pre_header
      _
    $region3: #{cnn_forward.1} parent=1 // loop_header
      %s18 = sphi 0, %s22
      %p19 = scmp.ge.s32.totalorder %s18, 4
      %s28 = sphi 0, %s30
      %s31 = sphi 0, %s28
      %s32 = sphi 0, %s31
      %s48 = sphi 0, %s32
      %s52 = sphi 0, %s52
      %s54 = sphi 0, %s52
      %s55 = sphi 0, %s54
      %s69 = sphi 0, %s55
      %s73 = sphi 0, %s73
      %s75 = sphi 0, %s73
      %s76 = sphi 0, %s75
      %s90 = sphi 0, %s76
      %s94 = sphi 0, %s94
      %s96 = sphi 0, %s94
      %s97 = sphi 0, %s96
      %s111 = sphi 0, %s97
      %s115 = sphi 0, %s115
      %s117 = sphi 0, %s115
      %s118 = sphi 0, %s117
      %s132 = sphi 0, %s118
      %s136 = sphi 0, %s136
      %s138 = sphi 0, %s136
      %s139 = sphi 0, %s138
      %s153 = sphi 0, %s139
      %s157 = sphi 0, %s157
      %s159 = sphi 0, %s157
      %s160 = sphi 0, %s159
      %s174 = sphi 0, %s160
      %s178 = sphi 0, %s178
      %s180 = sphi 0, %s178
      %s181 = sphi 0, %s180
      %s195 = sphi 0, %s181
      %s199 = sphi 0, %s199
      %s201 = sphi 0, %s199
      %s202 = sphi 0, %s201
      %s216 = sphi 0, %s202
      %s220 = sphi 0, %s220
      %s222 = sphi 0, %s220
      %s223 = sphi 0, %s222
      %s237 = sphi 0, %s223
      %s241 = sphi 0, %s241
      %s243 = sphi 0, %s241
      %s244 = sphi 0, %s243
      %s258 = sphi 0, %s244
      %s264 = sphi 0, %s266
      %s267 = sphi 0, %s264
      %s268 = sphi 0, %s267
      %s284 = sphi 0, %s268
    $region4: #{cnn_forward.1} parent=1 // loop_header_branch
      %21 = sbr.rel (%p19) target = $region8
    $region5: #{cnn_forward.1} parent=1 // loop_body
      %s23 = ssub.s32 %s18, 1
      %s24 = ssub.s32 %s18, 2
      %s25 = sadd.s32 %s18, 1
      %s26 = ssub.s32 %s18, %s25
      %p27 = scmp.eq.s32.totalorder %s26, 0
      %s29 = sadd.s32 %s28, 1
      %s30 = scalar_select %p27, %s28, %s29
      %p33 = pneg %p27
      %p34 = scmp.eq.s32.totalorder %s18, 1
      %p35 = por %p33, %p34
      %p36 = scmp.ne.s32.totalorder %s28, %s31
      %p37 = scmp.eq.s32.totalorder %s18, 0
      %p38 = por %p36, %p37
      %p39 = scmp.ne.s32.totalorder %s28, %s31
      %p40 = scmp.eq.s32.totalorder %s23, 1
      %p41 = por %p39, %p40
      %p42 = scmp.ne.s32.totalorder %s31, %s32
      %p43 = scmp.eq.s32.totalorder %s23, 0
      %p44 = por %p42, %p43
      %p45 = scmp.ne.s32.totalorder %s31, %s32
      %p46 = scmp.eq.s32.totalorder %s24, 1
      %p47 = por %p45, %p46
      %p49 = scmp.ne.s32.totalorder %s32, %s48
      %p50 = scmp.eq.s32.totalorder %s24, 0
      %p51 = por %p49, %p50
      %s53 = sadd.s32 %s52, 1
      %p56 = scmp.eq.s32.totalorder %s18, 1
      %p57 = scmp.ne.s32.totalorder %s52, %s54
      %p58 = scmp.eq.s32.totalorder %s18, 0
      %p59 = por %p57, %p58
      %p60 = scmp.ne.s32.totalorder %s52, %s54
      %p61 = scmp.eq.s32.totalorder %s23, 1
      %p62 = por %p60, %p61
      %p63 = scmp.ne.s32.totalorder %s54, %s55
      %p64 = scmp.eq.s32.totalorder %s23, 0
      %p65 = por %p63, %p64
      %p66 = scmp.ne.s32.totalorder %s54, %s55
      %p67 = scmp.eq.s32.totalorder %s24, 1
      %p68 = por %p66, %p67
      %p70 = scmp.ne.s32.totalorder %s55, %s69
      %p71 = scmp.eq.s32.totalorder %s24, 0
      %p72 = por %p70, %p71
      %s74 = sadd.s32 %s73, 1
      %p77 = scmp.eq.s32.totalorder %s18, 1
      %p78 = scmp.ne.s32.totalorder %s73, %s75
      %p79 = scmp.eq.s32.totalorder %s18, 0
      %p80 = por %p78, %p79
      %p81 = scmp.ne.s32.totalorder %s73, %s75
      %p82 = scmp.eq.s32.totalorder %s23, 1
      %p83 = por %p81, %p82
      %p84 = scmp.ne.s32.totalorder %s75, %s76
      %p85 = scmp.eq.s32.totalorder %s23, 0
      %p86 = por %p84, %p85
      %p87 = scmp.ne.s32.totalorder %s75, %s76
      %p88 = scmp.eq.s32.totalorder %s24, 1
      %p89 = por %p87, %p88
      %p91 = scmp.ne.s32.totalorder %s76, %s90
      %p92 = scmp.eq.s32.totalorder %s24, 0
      %p93 = por %p91, %p92
      %s95 = sadd.s32 %s94, 1
      %p98 = scmp.eq.s32.totalorder %s18, 1
      %p99 = scmp.ne.s32.totalorder %s94, %s96
      %p100 = scmp.eq.s32.totalorder %s18, 0
      %p101 = por %p99, %p100
      %p102 = scmp.ne.s32.totalorder %s94, %s96
      %p103 = scmp.eq.s32.totalorder %s23, 1
      %p104 = por %p102, %p103
      %p105 = scmp.ne.s32.totalorder %s96, %s97
      %p106 = scmp.eq.s32.totalorder %s23, 0
      %p107 = por %p105, %p106
      %p108 = scmp.ne.s32.totalorder %s96, %s97
      %p109 = scmp.eq.s32.totalorder %s24, 1
      %p110 = por %p108, %p109
      %p112 = scmp.ne.s32.totalorder %s97, %s111
      %p113 = scmp.eq.s32.totalorder %s24, 0
      %p114 = por %p112, %p113
      %s116 = sadd.s32 %s115, 1
      %p119 = scmp.eq.s32.totalorder %s18, 1
      %p120 = scmp.ne.s32.totalorder %s115, %s117
      %p121 = scmp.eq.s32.totalorder %s18, 0
      %p122 = por %p120, %p121
      %p123 = scmp.ne.s32.totalorder %s115, %s117
      %p124 = scmp.eq.s32.totalorder %s23, 1
      %p125 = por %p123, %p124
      %p126 = scmp.ne.s32.totalorder %s117, %s118
      %p127 = scmp.eq.s32.totalorder %s23, 0
      %p128 = por %p126, %p127
      %p129 = scmp.ne.s32.totalorder %s117, %s118
      %p130 = scmp.eq.s32.totalorder %s24, 1
      %p131 = por %p129, %p130
      %p133 = scmp.ne.s32.totalorder %s118, %s132
      %p134 = scmp.eq.s32.totalorder %s24, 0
      %p135 = por %p133, %p134
      %s137 = sadd.s32 %s136, 1
      %p140 = scmp.eq.s32.totalorder %s18, 1
      %p141 = scmp.ne.s32.totalorder %s136, %s138
      %p142 = scmp.eq.s32.totalorder %s18, 0
      %p143 = por %p141, %p142
      %p144 = scmp.ne.s32.totalorder %s136, %s138
      %p145 = scmp.eq.s32.totalorder %s23, 1
      %p146 = por %p144, %p145
      %p147 = scmp.ne.s32.totalorder %s138, %s139
      %p148 = scmp.eq.s32.totalorder %s23, 0
      %p149 = por %p147, %p148
      %p150 = scmp.ne.s32.totalorder %s138, %s139
      %p151 = scmp.eq.s32.totalorder %s24, 1
      %p152 = por %p150, %p151
      %p154 = scmp.ne.s32.totalorder %s139, %s153
      %p155 = scmp.eq.s32.totalorder %s24, 0
      %p156 = por %p154, %p155
      %s158 = sadd.s32 %s157, 1
      %p161 = scmp.eq.s32.totalorder %s18, 1
      %p162 = scmp.ne.s32.totalorder %s157, %s159
      %p163 = scmp.eq.s32.totalorder %s18, 0
      %p164 = por %p162, %p163
      %p165 = scmp.ne.s32.totalorder %s157, %s159
      %p166 = scmp.eq.s32.totalorder %s23, 1
      %p167 = por %p165, %p166
      %p168 = scmp.ne.s32.totalorder %s159, %s160
      %p169 = scmp.eq.s32.totalorder %s23, 0
      %p170 = por %p168, %p169
      %p171 = scmp.ne.s32.totalorder %s159, %s160
      %p172 = scmp.eq.s32.totalorder %s24, 1
      %p173 = por %p171, %p172
      %p175 = scmp.ne.s32.totalorder %s160, %s174
      %p176 = scmp.eq.s32.totalorder %s24, 0
      %p177 = por %p175, %p176
      %s179 = sadd.s32 %s178, 1
      %p182 = scmp.eq.s32.totalorder %s18, 1
      %p183 = scmp.ne.s32.totalorder %s178, %s180
      %p184 = scmp.eq.s32.totalorder %s18, 0
      %p185 = por %p183, %p184
      %p186 = scmp.ne.s32.totalorder %s178, %s180
      %p187 = scmp.eq.s32.totalorder %s23, 1
      %p188 = por %p186, %p187
      %p189 = scmp.ne.s32.totalorder %s180, %s181
      %p190 = scmp.eq.s32.totalorder %s23, 0
      %p191 = por %p189, %p190
      %p192 = scmp.ne.s32.totalorder %s180, %s181
      %p193 = scmp.eq.s32.totalorder %s24, 1
      %p194 = por %p192, %p193
      %p196 = scmp.ne.s32.totalorder %s181, %s195
      %p197 = scmp.eq.s32.totalorder %s24, 0
      %p198 = por %p196, %p197
      %s200 = sadd.s32 %s199, 1
      %p203 = scmp.eq.s32.totalorder %s18, 1
      %p204 = scmp.ne.s32.totalorder %s199, %s201
      %p205 = scmp.eq.s32.totalorder %s18, 0
      %p206 = por %p204, %p205
      %p207 = scmp.ne.s32.totalorder %s199, %s201
      %p208 = scmp.eq.s32.totalorder %s23, 1
      %p209 = por %p207, %p208
      %p210 = scmp.ne.s32.totalorder %s201, %s202
      %p211 = scmp.eq.s32.totalorder %s23, 0
      %p212 = por %p210, %p211
      %p213 = scmp.ne.s32.totalorder %s201, %s202
      %p214 = scmp.eq.s32.totalorder %s24, 1
      %p215 = por %p213, %p214
      %p217 = scmp.ne.s32.totalorder %s202, %s216
      %p218 = scmp.eq.s32.totalorder %s24, 0
      %p219 = por %p217, %p218
      %s221 = sadd.s32 %s220, 1
      %p224 = scmp.eq.s32.totalorder %s18, 1
      %p225 = scmp.ne.s32.totalorder %s220, %s222
      %p226 = scmp.eq.s32.totalorder %s18, 0
      %p227 = por %p225, %p226
      %p228 = scmp.ne.s32.totalorder %s220, %s222
      %p229 = scmp.eq.s32.totalorder %s23, 1
      %p230 = por %p228, %p229
      %p231 = scmp.ne.s32.totalorder %s222, %s223
      %p232 = scmp.eq.s32.totalorder %s23, 0
      %p233 = por %p231, %p232
      %p234 = scmp.ne.s32.totalorder %s222, %s223
      %p235 = scmp.eq.s32.totalorder %s24, 1
      %p236 = por %p234, %p235
      %p238 = scmp.ne.s32.totalorder %s223, %s237
      %p239 = scmp.eq.s32.totalorder %s24, 0
      %p240 = por %p238, %p239
      %s242 = sadd.s32 %s241, 1
      %p245 = scmp.eq.s32.totalorder %s18, 1
      %p246 = scmp.ne.s32.totalorder %s241, %s243
      %p247 = scmp.eq.s32.totalorder %s18, 0
      %p248 = por %p246, %p247
      %p249 = scmp.ne.s32.totalorder %s241, %s243
      %p250 = scmp.eq.s32.totalorder %s23, 1
      %p251 = por %p249, %p250
      %p252 = scmp.ne.s32.totalorder %s243, %s244
      %p253 = scmp.eq.s32.totalorder %s23, 0
      %p254 = por %p252, %p253
      %p255 = scmp.ne.s32.totalorder %s243, %s244
      %p256 = scmp.eq.s32.totalorder %s24, 1
      %p257 = por %p255, %p256
      %p259 = scmp.ne.s32.totalorder %s244, %s258
      %p260 = scmp.eq.s32.totalorder %s24, 0
      %p261 = por %p259, %p260
      %s262 = ssub.s32 %s18, %s25
      %p263 = scmp.eq.s32.totalorder %s262, 0
      %s265 = sadd.s32 %s264, 1
      %s266 = scalar_select %p263, %s264, %s265
      %p269 = pneg %p263
      %p270 = scmp.eq.s32.totalorder %s18, 1
      %p271 = por %p269, %p270
      %p272 = scmp.ne.s32.totalorder %s264, %s267
      %p273 = scmp.eq.s32.totalorder %s18, 0
      %p274 = por %p272, %p273
      %p275 = scmp.ne.s32.totalorder %s264, %s267
      %p276 = scmp.eq.s32.totalorder %s23, 1
      %p277 = por %p275, %p276
      %p278 = scmp.ne.s32.totalorder %s267, %s268
      %p279 = scmp.eq.s32.totalorder %s23, 0
      %p280 = por %p278, %p279
      %p281 = scmp.ne.s32.totalorder %s267, %s268
      %p282 = scmp.eq.s32.totalorder %s24, 1
      %p283 = por %p281, %p282
      %p285 = scmp.ne.s32.totalorder %s268, %s284
      %p286 = scmp.eq.s32.totalorder %s24, 0
      %p287 = por %p285, %p286
      %p288 = scmp.le.s32.totalorder 1, %s18
      %p289 = scmp.lt.s32.totalorder %s18, 3
      %p290 = pnand %p288, %p289
      %p291 = pneg %p290
      // Predicated region
      $region9: #{cnn_forward.1} parent=5 // pred_check
        _
      $region10: #{cnn_forward.1} parent=5 // pred_check_branch
        %293 = sbr.rel (%p290) target = $region12
      $region11: #{cnn_forward.1} parent=5 // pred_region
        %s294 = ssub.s32 %s18, 1
        // Predicated region
        $region13: #{cnn_forward.1} parent=11 // pred_check
          %p295 = pneg %p65
        $region14: #{cnn_forward.1} parent=11 // pred_check_branch
          %297 = sbr.rel (%p295) target = $region16
        $region15: #{cnn_forward.1} parent=11 // pred_region
          _
        $region16: #{cnn_forward.1} parent=11 // pred_fallthru
          _
        // Predicated region
        $region17: #{cnn_forward.1} parent=11 // pred_check
          %p298 = pneg %p86
        $region18: #{cnn_forward.1} parent=11 // pred_check_branch
          %300 = sbr.rel (%p298) target = $region20
        $region19: #{cnn_forward.1} parent=11 // pred_region
          _
        $region20: #{cnn_forward.1} parent=11 // pred_fallthru
          _
        // Predicated region
        $region21: #{cnn_forward.1} parent=11 // pred_check
          %p301 = pneg %p107
        $region22: #{cnn_forward.1} parent=11 // pred_check_branch
          %303 = sbr.rel (%p301) target = $region24
        $region23: #{cnn_forward.1} parent=11 // pred_region
          %s305 = ssub.s32 6144, 6144
          %306 = vsyncadd [#allocation3], %s305
          %s307 = sshll.u32 [#allocation2], 4
          %s308 = int_to_ptr.vmem [resolvable:$true] %s307
          %313 = dma.hbm_to_vmem [thread:$0]  %s3, 6144, %s308, [#allocation3], 128, 128, 8
        $region24: #{cnn_forward.1} parent=11 // pred_fallthru
          _
        // Predicated region
        $region25: #{cnn_forward.1} parent=11 // pred_check
          %p314 = pneg %p128
        $region26: #{cnn_forward.1} parent=11 // pred_check_branch
          %316 = sbr.rel (%p314) target = $region28
        $region27: #{cnn_forward.1} parent=11 // pred_region
          _
        $region28: #{cnn_forward.1} parent=11 // pred_fallthru
          _
        // Predicated region
        $region29: #{cnn_forward.1} parent=11 // pred_check
          %p317 = pneg %p149
        $region30: #{cnn_forward.1} parent=11 // pred_check_branch
          %319 = sbr.rel (%p317) target = $region32
        $region31: #{cnn_forward.1} parent=11 // pred_region
          _
        $region32: #{cnn_forward.1} parent=11 // pred_fallthru
          _
        // Predicated region
        $region33: #{cnn_forward.1} parent=11 // pred_check
          %p320 = pneg %p170
        $region34: #{cnn_forward.1} parent=11 // pred_check_branch
          %322 = sbr.rel (%p320) target = $region36
        $region35: #{cnn_forward.1} parent=11 // pred_region
          _
        $region36: #{cnn_forward.1} parent=11 // pred_fallthru
          _
        // Predicated region
        $region37: #{cnn_forward.1} parent=11 // pred_check
          %p323 = pneg %p191
        $region38: #{cnn_forward.1} parent=11 // pred_check_branch
          %325 = sbr.rel (%p323) target = $region40
        $region39: #{cnn_forward.1} parent=11 // pred_region
          _
        $region40: #{cnn_forward.1} parent=11 // pred_fallthru
          _
        // Predicated region
        $region41: #{cnn_forward.1} parent=11 // pred_check
          %p326 = pneg %p212
        $region42: #{cnn_forward.1} parent=11 // pred_check_branch
          %328 = sbr.rel (%p326) target = $region44
        $region43: #{cnn_forward.1} parent=11 // pred_region
          _
        $region44: #{cnn_forward.1} parent=11 // pred_fallthru
          _
        // Predicated region
        $region45: #{cnn_forward.1} parent=11 // pred_check
          %p329 = pneg %p233
        $region46: #{cnn_forward.1} parent=11 // pred_check_branch
          %331 = sbr.rel (%p329) target = $region48
        $region47: #{cnn_forward.1} parent=11 // pred_region
          _
        $region48: #{cnn_forward.1} parent=11 // pred_fallthru
          _
        // Predicated region
        $region49: #{cnn_forward.1} parent=11 // pred_check
          %p332 = pneg %p254
        $region50: #{cnn_forward.1} parent=11 // pred_check_branch
          %334 = sbr.rel (%p332) target = $region52
        $region51: #{cnn_forward.1} parent=11 // pred_region
          _
        $region52: #{cnn_forward.1} parent=11 // pred_fallthru
          _
      $region12: #{cnn_forward.1} parent=5 // pred_fallthru
        _
      %p335 = scmp.lt.s32.totalorder %s18, 2
      // Predicated region
      $region53: #{cnn_forward.1} parent=5 // pred_check
        %p336 = pneg %p335
      $region54: #{cnn_forward.1} parent=5 // pred_check_branch
        %338 = sbr.rel (%p336) target = $region56
      $region55: #{cnn_forward.1} parent=5 // pred_region
        // Predicated region
        $region57: #{cnn_forward.1} parent=55 // pred_check
          %p339 = pneg %p38
        $region58: #{cnn_forward.1} parent=55 // pred_check_branch
          %341 = sbr.rel (%p339) target = $region60
        $region59: #{cnn_forward.1} parent=55 // pred_region
          %s342 = smul.u32 16, %s18
          %p343 = scmp.lt.s32.totalorder %s342, 31
          %s344 = scalar_select %p343, %s342, 31
          %s345 = smul.addr %s344, 8
          %s346 = scalar_lea.vmem %s0, %s345
          %s347 = smul.u32 16, %s18
        $region60: #{cnn_forward.1} parent=55 // pred_fallthru
          _
      $region56: #{cnn_forward.1} parent=5 // pred_fallthru
        _
      %p348 = scmp.le.s32.totalorder 1, %s18
      %p349 = scmp.lt.s32.totalorder %s18, 3
      %p350 = pnand %p348, %p349
      %p351 = pneg %p350
      // Predicated region
      $region61: #{cnn_forward.1} parent=5 // pred_check
        _
      $region62: #{cnn_forward.1} parent=5 // pred_check_branch
        %353 = sbr.rel (%p350) target = $region64
      $region63: #{cnn_forward.1} parent=5 // pred_region
        %s354 = ssub.s32 %s18, 1
        // Predicated region
        $region65: #{cnn_forward.1} parent=63 // pred_check
          %p355 = pneg %p107
        $region66: #{cnn_forward.1} parent=63 // pred_check_branch
          %357 = sbr.rel (%p355) target = $region68
        $region67: #{cnn_forward.1} parent=63 // pred_region
          %358 = dma.done [#allocation3], 6144
        $region68: #{cnn_forward.1} parent=63 // pred_fallthru
          _
        %s359 = smul.u32 16, %s23
        %p360 = scmp.lt.s32.totalorder %s359, 31
        %s361 = scalar_select %p360, %s359, 31
        %s362 = smul.addr %s361, 8
        %s363 = scalar_lea.vmem %s0, %s362
        %p364 = pneg %p44
        %p365 = pneg %p41
        %p366 = pneg %p65
        %p367 = pneg %p62
        %p368 = pneg %p86
        %p369 = pneg %p83
        %p370 = pneg %p107
        %p371 = pneg %p104
        %p372 = pneg %p128
        %p373 = pneg %p125
        %p374 = pneg %p149
        %p375 = pneg %p146
        %p376 = pneg %p170
        %p377 = pneg %p167
        %p378 = pneg %p191
        %p379 = pneg %p188
        %p380 = pneg %p212
        %p381 = pneg %p209
        %p382 = pneg %p233
        %p383 = pneg %p230
        %p384 = pneg %p254
        %p385 = pneg %p251
        %p386 = pneg %p280
        %p387 = pneg %p277
        %s388 = smul.u32 2, %s23
        %p389 = scmp.lt.s32.totalorder %s388, 3
        %s390 = scalar_select %p389, %s388, 3
        %s391 = smul.addr %s390, 8
        %s392 = scalar_lea.vmem %s11, %s391
        %s393 = smul.u32 16, %s23
        %p394 = scmp.lt.s32.totalorder %s393, 31
        %s395 = scalar_select %p394, %s393, 31
        %s396 = smul.addr %s395, 8
        %s397 = scalar_lea.vmem %s0, %s396
        %s398 = smul.u32 16, %s23
        %s399 = smul.u32 2, %s23
        %p400 = scmp.lt.s32.totalorder %s399, 3
        %s401 = scalar_select %p400, %s399, 3
        %s402 = smul.addr %s401, 8
        %s403 = scalar_lea.vmem %s11, %s402
        %s404 = smul.u32 2, %s23
        %v406 = vld [vmem:[%s397] sm:$0xff]
        %v407 = vld [vmem:[%s397 + $0x8] sm:$0xff]
        %v408 = vld [vmem:[%s397 + $0x10] sm:$0xff]
        %v409 = vld [vmem:[%s397 + $0x18] sm:$0xff]
        %v410 = vld [vmem:[%s397 + $0x20] sm:$0xff]
        %v411 = vld [vmem:[%s397 + $0x28] sm:$0xff]
        %v412 = vld [vmem:[%s397 + $0x30] sm:$0xff]
        %v413 = vld [vmem:[%s397 + $0x38] sm:$0xff]
        %v414 = vld [vmem:[%s397 + $0x40] sm:$0xff]
        %v415 = vld [vmem:[%s397 + $0x48] sm:$0xff]
        %v416 = vld [vmem:[%s397 + $0x50] sm:$0xff]
        %v417 = vld [vmem:[%s397 + $0x58] sm:$0xff]
        %v418 = vld [vmem:[%s397 + $0x60] sm:$0xff]
        %v419 = vld [vmem:[%s397 + $0x68] sm:$0xff]
        %v420 = vld [vmem:[%s397 + $0x70] sm:$0xff]
        %v421 = vld [vmem:[%s397 + $0x78] sm:$0xff]
        %v422 = vpack.c.bf16 0.0, 0.0
        %v423 = vpack.c.bf16 %v407, %v406
        %v424 = vpack.c.bf16 %v409, %v408
        %v425 = vpack.c.bf16 %v411, %v410
        %v426 = vpack.c.bf16 %v413, %v412
        %v427 = vpack.c.bf16 %v415, %v414
        %v428 = vpack.c.bf16 %v417, %v416
        %v429 = vpack.c.bf16 %v419, %v418
        %v430 = vld [vmem:[%s1] sm:$0xf]
        %v431 = vld [vmem:[%s1 + $0x4] sm:$0xf]
        %v432 = vld [vmem:[%s1 + $0x8] sm:$0xf]
        %v433 = vld [vmem:[%s1 + $0xc] sm:$0xf]
        %v434 = vpack.c.bf16 %v421, %v420
        %s435 = scalar_lea.vmem %s1, 16
        %v436 = vld [vmem:[%s435] sm:$0xf]
        %v437 = vld [vmem:[%s435 + $0x4] sm:$0xf]
        %v438 = vld [vmem:[%s435 + $0x8] sm:$0xf]
        %v439 = vld [vmem:[%s435 + $0xc] sm:$0xf]
        %v444 = vunpack.c.l.b16 %v436
        %v445 = vunpack.c.l.b16 %v437
        %v446 = vunpack.c.l.b16 %v438
        %v447 = vunpack.c.l.b16 %v439
        %v448 = vpack.c.b16 %v445, %v444
        %v449 = vpack.c.b16 %v447, %v446
        %vm452 = vcmask 261120
        %v454 = vsel %vm452, %v423, 0
        %v457 = vsel %vm452, %v424, 0
        %v460 = vsel %vm452, %v425, 0
        %v463 = vsel %vm452, %v426, 0
        %v466 = vsel %vm452, %v427, 0
        %v469 = vsel %vm452, %v428, 0
        %v472 = vsel %vm452, %v429, 0
        %v475 = vsel %vm452, %v434, 0
        %477 = vmatprep.subr.bf16.mxu0 0
        %478 = vmatpush1.bf16.msra.mxu0 %v448
        %479 = vmatprep.subr.bf16.mxu0 0
        %480 = vmatpush1.bf16.msra.mxu0 %v449
        %481 = vmatprep.subr.bf16.mxu0 0
        %482 = vmatpush1.bf16.msra.mxu0 0
        %483 = vmatprep.subr.bf16.mxu0 0
        %484 = vmatpush1.bf16.msra.mxu0 0
        %485 = vmatprep.subr.bf16.mxu0 0
        %486 = vmatpush1.bf16.msra.mxu0 0
        %487 = vmatprep.subr.bf16.mxu0 0
        %488 = vmatpush1.bf16.msra.mxu0 0
        %489 = vmatprep.subr.bf16.mxu0 0
        %490 = vmatpush1.bf16.msra.mxu0 0
        %491 = vmatprep.subr.bf16.mxu0 0
        %492 = vmatpush1.bf16.msra.mxu0 0
        %493 = vmatprep.subr.bf16.mxu0 0
        %494 = vmatpush1.bf16.msra.mxu0 0
        %495 = vmatprep.subr.bf16.mxu0 0
        %496 = vmatpush1.bf16.msra.mxu0 0
        %497 = vmatprep.subr.bf16.mxu0 0
        %498 = vmatpush1.bf16.msra.mxu0 0
        %499 = vmatprep.subr.bf16.mxu0 0
        %500 = vmatpush1.bf16.msra.mxu0 0
        %501 = vmatprep.subr.bf16.mxu0 0
        %502 = vmatpush1.bf16.msra.mxu0 0
        %503 = vmatprep.subr.bf16.mxu0 0
        %504 = vmatpush1.bf16.msra.mxu0 0
        %505 = vmatprep.subr.bf16.mxu0 0
        %506 = vmatpush1.bf16.msra.mxu0 0
        %507 = vmatprep.subr.bf16.mxu0 0
        %508 = vmatpush1.bf16.msra.mxu0 0
        %509 = vmatprep.mubr.bf16.mxu0 0
        %510 = vmatmul.mubr.bf16.gmra.mrb[0].mxu0 %v454
        %v511 = vpop.f32.mrb[0].mxu0
        %v512 = vadd.f32 0.0, %v511
        %v513 = vpop.f32.mrb[0].mxu0
        %v514 = vpop.f32.mrb[0].mxu0
        %v515 = vadd.f32 0.0, %v514
        %v516 = vpop.f32.mrb[0].mxu0
        %517 = vmatprep.mubr.bf16.mxu0 0
        %518 = vmatmul.mubr.bf16.gmra.mrb[0].mxu0 %v457
        %v519 = vpop.f32.mrb[0].mxu0
        %v520 = vadd.f32 0.0, %v519
        %v521 = vpop.f32.mrb[0].mxu0
        %v522 = vpop.f32.mrb[0].mxu0
        %v523 = vadd.f32 0.0, %v522
        %v524 = vpop.f32.mrb[0].mxu0
        %525 = vmatprep.mubr.bf16.mxu0 0
        %526 = vmatmul.mubr.bf16.gmra.mrb[0].mxu0 %v460
        %v527 = vpop.f32.mrb[0].mxu0
        %v528 = vadd.f32 0.0, %v527
        %v529 = vpop.f32.mrb[0].mxu0
        %v530 = vpop.f32.mrb[0].mxu0
        %v531 = vadd.f32 0.0, %v530
        %v532 = vpop.f32.mrb[0].mxu0
        %533 = vmatprep.mubr.bf16.mxu0 0
        %534 = vmatmul.mubr.bf16.gmra.mrb[0].mxu0 %v463
        %v535 = vpop.f32.mrb[0].mxu0
        %v536 = vadd.f32 0.0, %v535
        %v537 = vpop.f32.mrb[0].mxu0
        %v538 = vpop.f32.mrb[0].mxu0
        %v539 = vadd.f32 0.0, %v538
        %v540 = vpop.f32.mrb[0].mxu0
        %541 = vmatprep.mubr.bf16.mxu0 0
        %542 = vmatmul.mubr.bf16.gmra.mrb[0].mxu0 %v466
        %v543 = vpop.f32.mrb[0].mxu0
        %v544 = vadd.f32 0.0, %v543
        %v545 = vpop.f32.mrb[0].mxu0
        %v546 = vpop.f32.mrb[0].mxu0
        %v547 = vadd.f32 0.0, %v546
        %v548 = vpop.f32.mrb[0].mxu0
        %549 = vmatprep.mubr.bf16.mxu0 0
        %550 = vmatmul.mubr.bf16.gmra.mrb[0].mxu0 %v469
        %v551 = vpop.f32.mrb[0].mxu0
        %v552 = vadd.f32 0.0, %v551
        %v553 = vpop.f32.mrb[0].mxu0
        %v554 = vpop.f32.mrb[0].mxu0
        %v555 = vadd.f32 0.0, %v554
        %v556 = vpop.f32.mrb[0].mxu0
        %557 = vmatprep.mubr.bf16.mxu0 0
        %558 = vmatmul.mubr.bf16.gmra.mrb[0].mxu0 %v472
        %v559 = vpop.f32.mrb[0].mxu0
        %v560 = vadd.f32 0.0, %v559
        %v561 = vpop.f32.mrb[0].mxu0
        %v562 = vpop.f32.mrb[0].mxu0
        %v563 = vadd.f32 0.0, %v562
        %v564 = vpop.f32.mrb[0].mxu0
        %565 = vmatprep.mubr.bf16.mxu0 0
        %566 = vmatmul.mubr.bf16.gmra.mrb[0].mxu0 %v475
        %v567 = vpop.f32.mrb[0].mxu0
        %v568 = vadd.f32 0.0, %v567
        %v569 = vpop.f32.mrb[0].mxu0
        %v570 = vpop.f32.mrb[0].mxu0
        %v571 = vadd.f32 0.0, %v570
        %v572 = vpop.f32.mrb[0].mxu0
        %573 = vdwg.mxu0
        %v578 = vunpack.c.l.b16 %v430
        %v579 = vunpack.c.l.b16 %v431
        %v580 = vunpack.c.l.b16 %v432
        %v581 = vunpack.c.l.b16 %v433
        %v582 = vpack.c.b16 %v579, %v578
        %v583 = vpack.c.b16 %v581, %v580
        %v587 = vsel %vm452, %v422, 0
        %589 = vmatprep.subr.bf16.mxu0 0
        %590 = vmatpush1.bf16.msra.mxu0 %v582
        %591 = vmatprep.subr.bf16.mxu0 0
        %592 = vmatpush1.bf16.msra.mxu0 %v583
        %593 = vmatprep.subr.bf16.mxu0 0
        %594 = vmatpush1.bf16.msra.mxu0 0
        %595 = vmatprep.subr.bf16.mxu0 0
        %596 = vmatpush1.bf16.msra.mxu0 0
        %597 = vmatprep.subr.bf16.mxu0 0
        %598 = vmatpush1.bf16.msra.mxu0 0
        %599 = vmatprep.subr.bf16.mxu0 0
        %600 = vmatpush1.bf16.msra.mxu0 0
        %601 = vmatprep.subr.bf16.mxu0 0
        %602 = vmatpush1.bf16.msra.mxu0 0
        %603 = vmatprep.subr.bf16.mxu0 0
        %604 = vmatpush1.bf16.msra.mxu0 0
        %605 = vmatprep.subr.bf16.mxu0 0
        %606 = vmatpush1.bf16.msra.mxu0 0
        %607 = vmatprep.subr.bf16.mxu0 0
        %608 = vmatpush1.bf16.msra.mxu0 0
        %609 = vmatprep.subr.bf16.mxu0 0
        %610 = vmatpush1.bf16.msra.mxu0 0
        %611 = vmatprep.subr.bf16.mxu0 0
        %612 = vmatpush1.bf16.msra.mxu0 0
        %613 = vmatprep.subr.bf16.mxu0 0
        %614 = vmatpush1.bf16.msra.mxu0 0
        %615 = vmatprep.subr.bf16.mxu0 0
        %616 = vmatpush1.bf16.msra.mxu0 0
        %617 = vmatprep.subr.bf16.mxu0 0
        %618 = vmatpush1.bf16.msra.mxu0 0
        %619 = vmatprep.subr.bf16.mxu0 0
        %620 = vmatpush1.bf16.msra.mxu0 0
        %621 = vmatprep.mubr.bf16.mxu0 0
        %622 = vmatmul.mubr.bf16.gmra.mrb[0].mxu0 %v587
        %v623 = vpop.f32.mrb[0].mxu0
        %v624 = vadd.f32 %v512, %v623
        %v625 = vpop.f32.mrb[0].mxu0
        %v626 = vpop.f32.mrb[0].mxu0
        %v627 = vadd.f32 %v515, %v626
        %v628 = vpop.f32.mrb[0].mxu0
        %629 = vmatprep.mubr.bf16.mxu0 0
        %630 = vmatmul.mubr.bf16.gmra.mrb[0].mxu0 %v454
        %v631 = vpop.f32.mrb[0].mxu0
        %v632 = vadd.f32 %v520, %v631
        %v633 = vpop.f32.mrb[0].mxu0
        %v634 = vpop.f32.mrb[0].mxu0
        %v635 = vadd.f32 %v523, %v634
        %v636 = vpop.f32.mrb[0].mxu0
        %637 = vmatprep.mubr.bf16.mxu0 0
        %638 = vmatmul.mubr.bf16.gmra.mrb[0].mxu0 %v457
        %v639 = vpop.f32.mrb[0].mxu0
        %v640 = vadd.f32 %v528, %v639
        %v641 = vpop.f32.mrb[0].mxu0
        %v642 = vpop.f32.mrb[0].mxu0
        %v643 = vadd.f32 %v531, %v642
        %v644 = vpop.f32.mrb[0].mxu0
        %645 = vmatprep.mubr.bf16.mxu0 0
        %646 = vmatmul.mubr.bf16.gmra.mrb[0].mxu0 %v460
        %v647 = vpop.f32.mrb[0].mxu0
        %v648 = vadd.f32 %v536, %v647
        %v649 = vpop.f32.mrb[0].mxu0
        %v650 = vpop.f32.mrb[0].mxu0
        %v651 = vadd.f32 %v539, %v650
        %v652 = vpop.f32.mrb[0].mxu0
        %653 = vmatprep.mubr.bf16.mxu0 0
        %654 = vmatmul.mubr.bf16.gmra.mrb[0].mxu0 %v463
        %v655 = vpop.f32.mrb[0].mxu0
        %v656 = vadd.f32 %v544, %v655
        %v657 = vpop.f32.mrb[0].mxu0
        %v658 = vpop.f32.mrb[0].mxu0
        %v659 = vadd.f32 %v547, %v658
        %v660 = vpop.f32.mrb[0].mxu0
        %661 = vmatprep.mubr.bf16.mxu0 0
        %662 = vmatmul.mubr.bf16.gmra.mrb[0].mxu0 %v466
        %v663 = vpop.f32.mrb[0].mxu0
        %v664 = vadd.f32 %v552, %v663
        %v665 = vpop.f32.mrb[0].mxu0
        %v666 = vpop.f32.mrb[0].mxu0
        %v667 = vadd.f32 %v555, %v666
        %v668 = vpop.f32.mrb[0].mxu0
        %669 = vmatprep.mubr.bf16.mxu0 0
        %670 = vmatmul.mubr.bf16.gmra.mrb[0].mxu0 %v469
        %v671 = vpop.f32.mrb[0].mxu0
        %v672 = vadd.f32 %v560, %v671
        %v673 = vpop.f32.mrb[0].mxu0
        %v674 = vpop.f32.mrb[0].mxu0
        %v675 = vadd.f32 %v563, %v674
        %v676 = vpop.f32.mrb[0].mxu0
        %677 = vmatprep.mubr.bf16.mxu0 0
        %678 = vmatmul.mubr.bf16.gmra.mrb[0].mxu0 %v472
        %v679 = vpop.f32.mrb[0].mxu0
        %v680 = vadd.f32 %v568, %v679
        %v681 = vpop.f32.mrb[0].mxu0
        %v682 = vpop.f32.mrb[0].mxu0
        %v683 = vadd.f32 %v571, %v682
        %v684 = vpop.f32.mrb[0].mxu0
        %685 = vdwg.mxu0
        %s686 = scalar_lea.vmem %s1, 32
        %v687 = vld [vmem:[%s686] sm:$0xf]
        %v688 = vld [vmem:[%s686 + $0x4] sm:$0xf]
        %v689 = vld [vmem:[%s686 + $0x8] sm:$0xf]
        %v690 = vld [vmem:[%s686 + $0xc] sm:$0xf]
        %v695 = vunpack.c.l.b16 %v687
        %v696 = vunpack.c.l.b16 %v688
        %v697 = vunpack.c.l.b16 %v689
        %v698 = vunpack.c.l.b16 %v690
        %v699 = vpack.c.b16 %v696, %v695
        %v700 = vpack.c.b16 %v698, %v697
        %703 = vmatprep.subr.bf16.mxu0 0
        %704 = vmatpush1.bf16.msra.mxu0 %v699
        %705 = vmatprep.subr.bf16.mxu0 0
        %706 = vmatpush1.bf16.msra.mxu0 %v700
        %707 = vmatprep.subr.bf16.mxu0 0
        %708 = vmatpush1.bf16.msra.mxu0 0
        %709 = vmatprep.subr.bf16.mxu0 0
        %710 = vmatpush1.bf16.msra.mxu0 0
        %711 = vmatprep.subr.bf16.mxu0 0
        %712 = vmatpush1.bf16.msra.mxu0 0
        %713 = vmatprep.subr.bf16.mxu0 0
        %714 = vmatpush1.bf16.msra.mxu0 0
        %715 = vmatprep.subr.bf16.mxu0 0
        %716 = vmatpush1.bf16.msra.mxu0 0
        %717 = vmatprep.subr.bf16.mxu0 0
        %718 = vmatpush1.bf16.msra.mxu0 0
        %719 = vmatprep.subr.bf16.mxu0 0
        %720 = vmatpush1.bf16.msra.mxu0 0
        %721 = vmatprep.subr.bf16.mxu0 0
        %722 = vmatpush1.bf16.msra.mxu0 0
        %723 = vmatprep.subr.bf16.mxu0 0
        %724 = vmatpush1.bf16.msra.mxu0 0
        %725 = vmatprep.subr.bf16.mxu0 0
        %726 = vmatpush1.bf16.msra.mxu0 0
        %727 = vmatprep.subr.bf16.mxu0 0
        %728 = vmatpush1.bf16.msra.mxu0 0
        %729 = vmatprep.subr.bf16.mxu0 0
        %730 = vmatpush1.bf16.msra.mxu0 0
        %731 = vmatprep.subr.bf16.mxu0 0
        %732 = vmatpush1.bf16.msra.mxu0 0
        %733 = vmatprep.subr.bf16.mxu0 0
        %734 = vmatpush1.bf16.msra.mxu0 0
        %735 = vmatprep.mubr.bf16.mxu0 0
        %736 = vmatmul.mubr.bf16.gmra.mrb[0].mxu0 %v457
        %v737 = vpop.f32.mrb[0].mxu0
        %v738 = vadd.f32 0.0, %v737
        %v739 = vpop.f32.mrb[0].mxu0
        %v740 = vpop.f32.mrb[0].mxu0
        %v741 = vadd.f32 0.0, %v740
        %v742 = vpop.f32.mrb[0].mxu0
        %743 = vmatprep.mubr.bf16.mxu0 0
        %744 = vmatmul.mubr.bf16.gmra.mrb[0].mxu0 %v460
        %v745 = vpop.f32.mrb[0].mxu0
        %v746 = vadd.f32 0.0, %v745
        %v747 = vpop.f32.mrb[0].mxu0
        %v748 = vpop.f32.mrb[0].mxu0
        %v749 = vadd.f32 0.0, %v748
        %v750 = vpop.f32.mrb[0].mxu0
        %751 = vmatprep.mubr.bf16.mxu0 0
        %752 = vmatmul.mubr.bf16.gmra.mrb[0].mxu0 %v463
        %v753 = vpop.f32.mrb[0].mxu0
        %v754 = vadd.f32 0.0, %v753
        %v755 = vpop.f32.mrb[0].mxu0
        %v756 = vpop.f32.mrb[0].mxu0
        %v757 = vadd.f32 0.0, %v756
        %v758 = vpop.f32.mrb[0].mxu0
        %759 = vmatprep.mubr.bf16.mxu0 0
        %760 = vmatmul.mubr.bf16.gmra.mrb[0].mxu0 %v466
        %v761 = vpop.f32.mrb[0].mxu0
        %v762 = vadd.f32 0.0, %v761
        %v763 = vpop.f32.mrb[0].mxu0
        %v764 = vpop.f32.mrb[0].mxu0
        %v765 = vadd.f32 0.0, %v764
        %v766 = vpop.f32.mrb[0].mxu0
        %767 = vmatprep.mubr.bf16.mxu0 0
        %768 = vmatmul.mubr.bf16.gmra.mrb[0].mxu0 %v469
        %v769 = vpop.f32.mrb[0].mxu0
        %v770 = vadd.f32 0.0, %v769
        %v771 = vpop.f32.mrb[0].mxu0
        %v772 = vpop.f32.mrb[0].mxu0
        %v773 = vadd.f32 0.0, %v772
        %v774 = vpop.f32.mrb[0].mxu0
        %775 = vmatprep.mubr.bf16.mxu0 0
        %776 = vmatmul.mubr.bf16.gmra.mrb[0].mxu0 %v472
        %v777 = vpop.f32.mrb[0].mxu0
        %v778 = vadd.f32 0.0, %v777
        %v779 = vpop.f32.mrb[0].mxu0
        %v780 = vpop.f32.mrb[0].mxu0
        %v781 = vadd.f32 0.0, %v780
        %v782 = vpop.f32.mrb[0].mxu0
        %783 = vmatprep.mubr.bf16.mxu0 0
        %784 = vmatmul.mubr.bf16.gmra.mrb[0].mxu0 %v475
        %v785 = vpop.f32.mrb[0].mxu0
        %v786 = vadd.f32 0.0, %v785
        %v787 = vpop.f32.mrb[0].mxu0
        %v788 = vpop.f32.mrb[0].mxu0
        %v789 = vadd.f32 0.0, %v788
        %v790 = vpop.f32.mrb[0].mxu0
        %791 = vmatprep.mubr.bf16.mxu0 0
        %792 = vmatmul.mubr.bf16.gmra.mrb[0].mxu0 %v587
        %v793 = vpop.f32.mrb[0].mxu0
        %v794 = vadd.f32 0.0, %v793
        %v795 = vpop.f32.mrb[0].mxu0
        %v796 = vpop.f32.mrb[0].mxu0
        %v797 = vadd.f32 0.0, %v796
        %v798 = vpop.f32.mrb[0].mxu0
        %799 = vdwg.mxu0
        %v800 = vadd.f32 %v624, %v738
        %v801 = vadd.f32 %v627, %v741
        %v802 = vadd.f32 %v632, %v746
        %v803 = vadd.f32 %v635, %v749
        %v804 = vadd.f32 %v640, %v754
        %v805 = vadd.f32 %v643, %v757
        %v806 = vadd.f32 %v648, %v762
        %v807 = vadd.f32 %v651, %v765
        %v808 = vadd.f32 %v656, %v770
        %v809 = vadd.f32 %v659, %v773
        %v810 = vadd.f32 %v664, %v778
        %v811 = vadd.f32 %v667, %v781
        %v812 = vadd.f32 %v672, %v786
        %v813 = vadd.f32 %v675, %v789
        %v814 = vadd.f32 %v680, %v794
        %v815 = vadd.f32 %v683, %v797
        %v816 = vld [vmem:[%s2] sm:$0x1]
        %v818 = vlaneseq
        %v819 = vshrl.u32 %v818, 7
        %v820 = vsub.s32 0, %v819
        %v821 = vrot.slane %v816, %v820
        %v823 = vadd.f32 %v800, %v821
        %v824 = vadd.f32 %v801, %v821
        %v825 = vadd.f32 %v802, %v821
        %v826 = vadd.f32 %v803, %v821
        %v827 = vadd.f32 %v804, %v821
        %v828 = vadd.f32 %v805, %v821
        %v829 = vadd.f32 %v806, %v821
        %v830 = vadd.f32 %v807, %v821
        %v831 = vadd.f32 %v808, %v821
        %v832 = vadd.f32 %v809, %v821
        %v833 = vadd.f32 %v810, %v821
        %v834 = vadd.f32 %v811, %v821
        %v835 = vadd.f32 %v812, %v821
        %v836 = vadd.f32 %v813, %v821
        %v837 = vadd.f32 %v814, %v821
        %v838 = vadd.f32 %v815, %v821
        %v839 = vmax.f32 %v823, 0.0
        %v840 = vmax.f32 %v824, 0.0
        %v841 = vmax.f32 %v825, 0.0
        %v842 = vmax.f32 %v826, 0.0
        %v843 = vmax.f32 %v827, 0.0
        %v844 = vmax.f32 %v828, 0.0
        %v845 = vmax.f32 %v829, 0.0
        %v846 = vmax.f32 %v830, 0.0
        %v847 = vmax.f32 %v831, 0.0
        %v848 = vmax.f32 %v832, 0.0
        %v849 = vmax.f32 %v833, 0.0
        %v850 = vmax.f32 %v834, 0.0
        %v851 = vmax.f32 %v835, 0.0
        %v852 = vmax.f32 %v836, 0.0
        %v853 = vmax.f32 %v837, 0.0
        %v854 = vmax.f32 %v838, 0.0
        %v855 = vpack.c.bf16 %v840, %v839
        %v856 = vpack.c.bf16 %v842, %v841
        %v857 = vpack.c.bf16 %v844, %v843
        %v858 = vpack.c.bf16 %v846, %v845
        %v859 = vpack.c.bf16 %v848, %v847
        %v860 = vpack.c.bf16 %v850, %v849
        %v861 = vpack.c.bf16 %v852, %v851
        %v862 = vld [vmem:[#allocation2] sm:$0xff]
        %v863 = vld [vmem:[#allocation2 + $0x8] sm:$0xff]
        %v864 = vld [vmem:[#allocation2 + $0x10] sm:$0xff]
        %v865 = vld [vmem:[#allocation2 + $0x18] sm:$0xff]
        %v866 = vld [vmem:[#allocation2 + $0x20] sm:$0xff]
        %v867 = vld [vmem:[#allocation2 + $0x28] sm:$0xff]
        %v868 = vld [vmem:[#allocation2 + $0x30] sm:$0xff]
        %v869 = vld [vmem:[#allocation2 + $0x38] sm:$0xff]
        %v870 = vld [vmem:[#allocation2 + $0x40] sm:$0xff]
        %v871 = vld [vmem:[#allocation2 + $0x48] sm:$0xff]
        %v872 = vld [vmem:[#allocation2 + $0x50] sm:$0xff]
        %v873 = vld [vmem:[#allocation2 + $0x58] sm:$0xff]
        %v874 = vld [vmem:[#allocation2 + $0x60] sm:$0xff]
        %v875 = vld [vmem:[#allocation2 + $0x68] sm:$0xff]
        %v876 = vld [vmem:[#allocation2 + $0x70] sm:$0xff]
        %v877 = vld [vmem:[#allocation2 + $0x78] sm:$0xff]
        %v878 = vpack.c.bf16 %v854, %v853
        %s879 = scalar_lea.vmem [#allocation2], 128
        %v880 = vld [vmem:[%s879] sm:$0xff]
        %v881 = vld [vmem:[%s879 + $0x8] sm:$0xff]
        %v882 = vld [vmem:[%s879 + $0x10] sm:$0xff]
        %v883 = vld [vmem:[%s879 + $0x18] sm:$0xff]
        %v884 = vld [vmem:[%s879 + $0x20] sm:$0xff]
        %v885 = vld [vmem:[%s879 + $0x28] sm:$0xff]
        %v886 = vld [vmem:[%s879 + $0x30] sm:$0xff]
        %v887 = vld [vmem:[%s879 + $0x38] sm:$0xff]
        %v888 = vld [vmem:[%s879 + $0x40] sm:$0xff]
        %v889 = vld [vmem:[%s879 + $0x48] sm:$0xff]
        %v890 = vld [vmem:[%s879 + $0x50] sm:$0xff]
        %v891 = vld [vmem:[%s879 + $0x58] sm:$0xff]
        %v892 = vld [vmem:[%s879 + $0x60] sm:$0xff]
        %v893 = vld [vmem:[%s879 + $0x68] sm:$0xff]
        %v894 = vld [vmem:[%s879 + $0x70] sm:$0xff]
        %v895 = vld [vmem:[%s879 + $0x78] sm:$0xff]
        %v912 = vunpack.c.l.b16 %v880
        %v913 = vunpack.c.h.b16 %v880
        %v914 = vunpack.c.l.b16 %v881
        %v915 = vunpack.c.h.b16 %v881
        %v916 = vunpack.c.l.b16 %v882
        %v917 = vunpack.c.h.b16 %v882
        %v918 = vunpack.c.l.b16 %v883
        %v919 = vunpack.c.h.b16 %v883
        %v920 = vunpack.c.l.b16 %v884
        %v921 = vunpack.c.h.b16 %v884
        %v922 = vunpack.c.l.b16 %v885
        %v923 = vunpack.c.h.b16 %v885
        %v924 = vunpack.c.l.b16 %v886
        %v925 = vunpack.c.h.b16 %v886
        %v926 = vunpack.c.l.b16 %v887
        %v927 = vunpack.c.h.b16 %v887
        %v928 = vunpack.c.l.b16 %v888
        %v929 = vunpack.c.h.b16 %v888
        %v930 = vunpack.c.l.b16 %v889
        %v931 = vunpack.c.h.b16 %v889
        %v932 = vunpack.c.l.b16 %v890
        %v933 = vunpack.c.h.b16 %v890
        %v934 = vunpack.c.l.b16 %v891
        %v935 = vunpack.c.h.b16 %v891
        %v936 = vunpack.c.l.b16 %v892
        %v937 = vunpack.c.h.b16 %v892
        %v938 = vunpack.c.l.b16 %v893
        %v939 = vunpack.c.h.b16 %v893
        %v940 = vunpack.c.l.b16 %v894
        %v941 = vunpack.c.h.b16 %v894
        %v942 = vunpack.c.l.b16 %v895
        %v943 = vunpack.c.h.b16 %v895
        %v944 = vpack.c.b16 %v914, %v912
        %v945 = vpack.c.b16 %v915, %v913
        %v946 = vpack.c.b16 %v918, %v916
        %v947 = vpack.c.b16 %v919, %v917
        %v948 = vpack.c.b16 %v922, %v920
        %v949 = vpack.c.b16 %v923, %v921
        %v950 = vpack.c.b16 %v926, %v924
        %v951 = vpack.c.b16 %v927, %v925
        %v952 = vpack.c.b16 %v930, %v928
        %v953 = vpack.c.b16 %v931, %v929
        %v954 = vpack.c.b16 %v934, %v932
        %v955 = vpack.c.b16 %v935, %v933
        %v956 = vpack.c.b16 %v938, %v936
        %v957 = vpack.c.b16 %v939, %v937
        %v958 = vpack.c.b16 %v942, %v940
        %v959 = vpack.c.b16 %v943, %v941
        %976 = vmatprep.subr.bf16.mxu0 %v945
        %977 = vmatpush1.bf16.msra.mxu0 %v944
        %978 = vmatprep.subr.bf16.mxu0 %v947
        %979 = vmatpush1.bf16.msra.mxu0 %v946
        %980 = vmatprep.subr.bf16.mxu0 %v949
        %981 = vmatpush1.bf16.msra.mxu0 %v948
        %982 = vmatprep.subr.bf16.mxu0 %v951
        %983 = vmatpush1.bf16.msra.mxu0 %v950
        %984 = vmatprep.subr.bf16.mxu0 %v953
        %985 = vmatpush1.bf16.msra.mxu0 %v952
        %986 = vmatprep.subr.bf16.mxu0 %v955
        %987 = vmatpush1.bf16.msra.mxu0 %v954
        %988 = vmatprep.subr.bf16.mxu0 %v957
        %989 = vmatpush1.bf16.msra.mxu0 %v956
        %990 = vmatprep.subr.bf16.mxu0 %v959
        %991 = vmatpush1.bf16.msra.mxu0 %v958
        %992 = vmatprep.subr.bf16.mxu0 0
        %993 = vmatpush1.bf16.msra.mxu0 0
        %994 = vmatprep.subr.bf16.mxu0 0
        %995 = vmatpush1.bf16.msra.mxu0 0
        %996 = vmatprep.subr.bf16.mxu0 0
        %997 = vmatpush1.bf16.msra.mxu0 0
        %998 = vmatprep.subr.bf16.mxu0 0
        %999 = vmatpush1.bf16.msra.mxu0 0
        %1000 = vmatprep.subr.bf16.mxu0 0
        %1001 = vmatpush1.bf16.msra.mxu0 0
        %1002 = vmatprep.subr.bf16.mxu0 0
        %1003 = vmatpush1.bf16.msra.mxu0 0
        %1004 = vmatprep.subr.bf16.mxu0 0
        %1005 = vmatpush1.bf16.msra.mxu0 0
        %1006 = vmatprep.subr.bf16.mxu0 0
        %1007 = vmatpush1.bf16.msra.mxu0 0
        %1008 = vmatprep.mubr.bf16.mxu0 0
        %1009 = vmatmul.mubr.bf16.gmra.mrb[0].mxu0 %v855
        %v1010 = vpop.f32.mrb[0].mxu0
        %v1011 = vadd.f32 0.0, %v1010
        %v1012 = vpop.f32.mrb[0].mxu0
        %v1013 = vadd.f32 0.0, %v1012
        %v1014 = vpop.f32.mrb[0].mxu0
        %v1015 = vadd.f32 0.0, %v1014
        %v1016 = vpop.f32.mrb[0].mxu0
        %v1017 = vadd.f32 0.0, %v1016
        %1018 = vmatprep.mubr.bf16.mxu0 0
        %1019 = vmatmul.mubr.bf16.gmra.mrb[0].mxu0 %v856
        %v1020 = vpop.f32.mrb[0].mxu0
        %v1021 = vadd.f32 0.0, %v1020
        %v1022 = vpop.f32.mrb[0].mxu0
        %v1023 = vadd.f32 0.0, %v1022
        %v1024 = vpop.f32.mrb[0].mxu0
        %v1025 = vadd.f32 0.0, %v1024
        %v1026 = vpop.f32.mrb[0].mxu0
        %v1027 = vadd.f32 0.0, %v1026
        %1028 = vmatprep.mubr.bf16.mxu0 0
        %1029 = vmatmul.mubr.bf16.gmra.mrb[0].mxu0 %v857
        %v1030 = vpop.f32.mrb[0].mxu0
        %v1031 = vadd.f32 0.0, %v1030
        %v1032 = vpop.f32.mrb[0].mxu0
        %v1033 = vadd.f32 0.0, %v1032
        %v1034 = vpop.f32.mrb[0].mxu0
        %v1035 = vadd.f32 0.0, %v1034
        %v1036 = vpop.f32.mrb[0].mxu0
        %v1037 = vadd.f32 0.0, %v1036
        %1038 = vmatprep.mubr.bf16.mxu0 0
        %1039 = vmatmul.mubr.bf16.gmra.mrb[0].mxu0 %v858
        %v1040 = vpop.f32.mrb[0].mxu0
        %v1041 = vadd.f32 0.0, %v1040
        %v1042 = vpop.f32.mrb[0].mxu0
        %v1043 = vadd.f32 0.0, %v1042
        %v1044 = vpop.f32.mrb[0].mxu0
        %v1045 = vadd.f32 0.0, %v1044
        %v1046 = vpop.f32.mrb[0].mxu0
        %v1047 = vadd.f32 0.0, %v1046
        %1048 = vmatprep.mubr.bf16.mxu0 0
        %1049 = vmatmul.mubr.bf16.gmra.mrb[0].mxu0 %v859
        %v1050 = vpop.f32.mrb[0].mxu0
        %v1051 = vadd.f32 0.0, %v1050
        %v1052 = vpop.f32.mrb[0].mxu0
        %v1053 = vadd.f32 0.0, %v1052
        %v1054 = vpop.f32.mrb[0].mxu0
        %v1055 = vadd.f32 0.0, %v1054
        %v1056 = vpop.f32.mrb[0].mxu0
        %v1057 = vadd.f32 0.0, %v1056
        %1058 = vmatprep.mubr.bf16.mxu0 0
        %1059 = vmatmul.mubr.bf16.gmra.mrb[0].mxu0 %v860
        %v1060 = vpop.f32.mrb[0].mxu0
        %v1061 = vadd.f32 0.0, %v1060
        %v1062 = vpop.f32.mrb[0].mxu0
        %v1063 = vadd.f32 0.0, %v1062
        %v1064 = vpop.f32.mrb[0].mxu0
        %v1065 = vadd.f32 0.0, %v1064
        %v1066 = vpop.f32.mrb[0].mxu0
        %v1067 = vadd.f32 0.0, %v1066
        %1068 = vmatprep.mubr.bf16.mxu0 0
        %1069 = vmatmul.mubr.bf16.gmra.mrb[0].mxu0 %v861
        %v1070 = vpop.f32.mrb[0].mxu0
        %v1071 = vadd.f32 0.0, %v1070
        %v1072 = vpop.f32.mrb[0].mxu0
        %v1073 = vadd.f32 0.0, %v1072
        %v1074 = vpop.f32.mrb[0].mxu0
        %v1075 = vadd.f32 0.0, %v1074
        %v1076 = vpop.f32.mrb[0].mxu0
        %v1077 = vadd.f32 0.0, %v1076
        %1078 = vmatprep.mubr.bf16.mxu0 0
        %1079 = vmatmul.mubr.bf16.gmra.mrb[0].mxu0 %v878
        %v1080 = vpop.f32.mrb[0].mxu0
        %v1081 = vadd.f32 0.0, %v1080
        %v1082 = vpop.f32.mrb[0].mxu0
        %v1083 = vadd.f32 0.0, %v1082
        %v1084 = vpop.f32.mrb[0].mxu0
        %v1085 = vadd.f32 0.0, %v1084
        %v1086 = vpop.f32.mrb[0].mxu0
        %v1087 = vadd.f32 0.0, %v1086
        %1088 = vdwg.mxu0
        %v1105 = vunpack.c.l.b16 %v862
        %v1106 = vunpack.c.h.b16 %v862
        %v1107 = vunpack.c.l.b16 %v863
        %v1108 = vunpack.c.h.b16 %v863
        %v1109 = vunpack.c.l.b16 %v864
        %v1110 = vunpack.c.h.b16 %v864
        %v1111 = vunpack.c.l.b16 %v865
        %v1112 = vunpack.c.h.b16 %v865
        %v1113 = vunpack.c.l.b16 %v866
        %v1114 = vunpack.c.h.b16 %v866
        %v1115 = vunpack.c.l.b16 %v867
        %v1116 = vunpack.c.h.b16 %v867
        %v1117 = vunpack.c.l.b16 %v868
        %v1118 = vunpack.c.h.b16 %v868
        %v1119 = vunpack.c.l.b16 %v869
        %v1120 = vunpack.c.h.b16 %v869
        %v1121 = vunpack.c.l.b16 %v870
        %v1122 = vunpack.c.h.b16 %v870
        %v1123 = vunpack.c.l.b16 %v871
        %v1124 = vunpack.c.h.b16 %v871
        %v1125 = vunpack.c.l.b16 %v872
        %v1126 = vunpack.c.h.b16 %v872
        %v1127 = vunpack.c.l.b16 %v873
        %v1128 = vunpack.c.h.b16 %v873
        %v1129 = vunpack.c.l.b16 %v874
        %v1130 = vunpack.c.h.b16 %v874
        %v1131 = vunpack.c.l.b16 %v875
        %v1132 = vunpack.c.h.b16 %v875
        %v1133 = vunpack.c.l.b16 %v876
        %v1134 = vunpack.c.h.b16 %v876
        %v1135 = vunpack.c.l.b16 %v877
        %v1136 = vunpack.c.h.b16 %v877
        %v1137 = vpack.c.b16 %v1107, %v1105
        %v1138 = vpack.c.b16 %v1108, %v1106
        %v1139 = vpack.c.b16 %v1111, %v1109
        %v1140 = vpack.c.b16 %v1112, %v1110
        %v1141 = vpack.c.b16 %v1115, %v1113
        %v1142 = vpack.c.b16 %v1116, %v1114
        %v1143 = vpack.c.b16 %v1119, %v1117
        %v1144 = vpack.c.b16 %v1120, %v1118
        %v1145 = vpack.c.b16 %v1123, %v1121
        %v1146 = vpack.c.b16 %v1124, %v1122
        %v1147 = vpack.c.b16 %v1127, %v1125
        %v1148 = vpack.c.b16 %v1128, %v1126
        %v1149 = vpack.c.b16 %v1131, %v1129
        %v1150 = vpack.c.b16 %v1132, %v1130
        %v1151 = vpack.c.b16 %v1135, %v1133
        %v1152 = vpack.c.b16 %v1136, %v1134
        %1169 = vmatprep.subr.bf16.mxu0 %v1138
        %1170 = vmatpush1.bf16.msra.mxu0 %v1137
        %1171 = vmatprep.subr.bf16.mxu0 %v1140
        %1172 = vmatpush1.bf16.msra.mxu0 %v1139
        %1173 = vmatprep.subr.bf16.mxu0 %v1142
        %1174 = vmatpush1.bf16.msra.mxu0 %v1141
        %1175 = vmatprep.subr.bf16.mxu0 %v1144
        %1176 = vmatpush1.bf16.msra.mxu0 %v1143
        %1177 = vmatprep.subr.bf16.mxu0 %v1146
        %1178 = vmatpush1.bf16.msra.mxu0 %v1145
        %1179 = vmatprep.subr.bf16.mxu0 %v1148
        %1180 = vmatpush1.bf16.msra.mxu0 %v1147
        %1181 = vmatprep.subr.bf16.mxu0 %v1150
        %1182 = vmatpush1.bf16.msra.mxu0 %v1149
        %1183 = vmatprep.subr.bf16.mxu0 %v1152
        %1184 = vmatpush1.bf16.msra.mxu0 %v1151
        %1185 = vmatprep.subr.bf16.mxu0 0
        %1186 = vmatpush1.bf16.msra.mxu0 0
        %1187 = vmatprep.subr.bf16.mxu0 0
        %1188 = vmatpush1.bf16.msra.mxu0 0
        %1189 = vmatprep.subr.bf16.mxu0 0
        %1190 = vmatpush1.bf16.msra.mxu0 0
        %1191 = vmatprep.subr.bf16.mxu0 0
        %1192 = vmatpush1.bf16.msra.mxu0 0
        %1193 = vmatprep.subr.bf16.mxu0 0
        %1194 = vmatpush1.bf16.msra.mxu0 0
        %1195 = vmatprep.subr.bf16.mxu0 0
        %1196 = vmatpush1.bf16.msra.mxu0 0
        %1197 = vmatprep.subr.bf16.mxu0 0
        %1198 = vmatpush1.bf16.msra.mxu0 0
        %1199 = vmatprep.subr.bf16.mxu0 0
        %1200 = vmatpush1.bf16.msra.mxu0 0
        %1201 = vmatprep.mubr.bf16.mxu0 0
        %1202 = vmatmul.mubr.bf16.gmra.mrb[0].mxu0 %v422
        %v1203 = vpop.f32.mrb[0].mxu0
        %v1204 = vadd.f32 %v1011, %v1203
        %v1205 = vpop.f32.mrb[0].mxu0
        %v1206 = vadd.f32 %v1013, %v1205
        %v1207 = vpop.f32.mrb[0].mxu0
        %v1208 = vadd.f32 %v1015, %v1207
        %v1209 = vpop.f32.mrb[0].mxu0
        %v1210 = vadd.f32 %v1017, %v1209
        %1211 = vmatprep.mubr.bf16.mxu0 0
        %1212 = vmatmul.mubr.bf16.gmra.mrb[0].mxu0 %v855
        %v1213 = vpop.f32.mrb[0].mxu0
        %v1214 = vadd.f32 %v1021, %v1213
        %v1215 = vpop.f32.mrb[0].mxu0
        %v1216 = vadd.f32 %v1023, %v1215
        %v1217 = vpop.f32.mrb[0].mxu0
        %v1218 = vadd.f32 %v1025, %v1217
        %v1219 = vpop.f32.mrb[0].mxu0
        %v1220 = vadd.f32 %v1027, %v1219
        %1221 = vmatprep.mubr.bf16.mxu0 0
        %1222 = vmatmul.mubr.bf16.gmra.mrb[0].mxu0 %v856
        %v1223 = vpop.f32.mrb[0].mxu0
        %v1224 = vadd.f32 %v1031, %v1223
        %v1225 = vpop.f32.mrb[0].mxu0
        %v1226 = vadd.f32 %v1033, %v1225
        %v1227 = vpop.f32.mrb[0].mxu0
        %v1228 = vadd.f32 %v1035, %v1227
        %v1229 = vpop.f32.mrb[0].mxu0
        %v1230 = vadd.f32 %v1037, %v1229
        %1231 = vmatprep.mubr.bf16.mxu0 0
        %1232 = vmatmul.mubr.bf16.gmra.mrb[0].mxu0 %v857
        %v1233 = vpop.f32.mrb[0].mxu0
        %v1234 = vadd.f32 %v1041, %v1233
        %v1235 = vpop.f32.mrb[0].mxu0
        %v1236 = vadd.f32 %v1043, %v1235
        %v1237 = vpop.f32.mrb[0].mxu0
        %v1238 = vadd.f32 %v1045, %v1237
        %v1239 = vpop.f32.mrb[0].mxu0
        %v1240 = vadd.f32 %v1047, %v1239
        %1241 = vmatprep.mubr.bf16.mxu0 0
        %1242 = vmatmul.mubr.bf16.gmra.mrb[0].mxu0 %v858
        %v1243 = vpop.f32.mrb[0].mxu0
        %v1244 = vadd.f32 %v1051, %v1243
        %v1245 = vpop.f32.mrb[0].mxu0
        %v1246 = vadd.f32 %v1053, %v1245
        %v1247 = vpop.f32.mrb[0].mxu0
        %v1248 = vadd.f32 %v1055, %v1247
        %v1249 = vpop.f32.mrb[0].mxu0
        %v1250 = vadd.f32 %v1057, %v1249
        %1251 = vmatprep.mubr.bf16.mxu0 0
        %1252 = vmatmul.mubr.bf16.gmra.mrb[0].mxu0 %v859
        %v1253 = vpop.f32.mrb[0].mxu0
        %v1254 = vadd.f32 %v1061, %v1253
        %v1255 = vpop.f32.mrb[0].mxu0
        %v1256 = vadd.f32 %v1063, %v1255
        %v1257 = vpop.f32.mrb[0].mxu0
        %v1258 = vadd.f32 %v1065, %v1257
        %v1259 = vpop.f32.mrb[0].mxu0
        %v1260 = vadd.f32 %v1067, %v1259
        %1261 = vmatprep.mubr.bf16.mxu0 0
        %1262 = vmatmul.mubr.bf16.gmra.mrb[0].mxu0 %v860
        %v1263 = vpop.f32.mrb[0].mxu0
        %v1264 = vadd.f32 %v1071, %v1263
        %v1265 = vpop.f32.mrb[0].mxu0
        %v1266 = vadd.f32 %v1073, %v1265
        %v1267 = vpop.f32.mrb[0].mxu0
        %v1268 = vadd.f32 %v1075, %v1267
        %v1269 = vpop.f32.mrb[0].mxu0
        %v1270 = vadd.f32 %v1077, %v1269
        %1271 = vmatprep.mubr.bf16.mxu0 0
        %1272 = vmatmul.mubr.bf16.gmra.mrb[0].mxu0 %v861
        %v1273 = vpop.f32.mrb[0].mxu0
        %v1274 = vadd.f32 %v1081, %v1273
        %v1275 = vpop.f32.mrb[0].mxu0
        %v1276 = vadd.f32 %v1083, %v1275
        %v1277 = vpop.f32.mrb[0].mxu0
        %v1278 = vadd.f32 %v1085, %v1277
        %v1279 = vpop.f32.mrb[0].mxu0
        %v1280 = vadd.f32 %v1087, %v1279
        %1281 = vdwg.mxu0
        %s1282 = scalar_lea.vmem [#allocation2], 256
        %v1283 = vld [vmem:[%s1282] sm:$0xff]
        %v1284 = vld [vmem:[%s1282 + $0x8] sm:$0xff]
        %v1285 = vld [vmem:[%s1282 + $0x10] sm:$0xff]
        %v1286 = vld [vmem:[%s1282 + $0x18] sm:$0xff]
        %v1287 = vld [vmem:[%s1282 + $0x20] sm:$0xff]
        %v1288 = vld [vmem:[%s1282 + $0x28] sm:$0xff]
        %v1289 = vld [vmem:[%s1282 + $0x30] sm:$0xff]
        %v1290 = vld [vmem:[%s1282 + $0x38] sm:$0xff]
        %v1291 = vld [vmem:[%s1282 + $0x40] sm:$0xff]
        %v1292 = vld [vmem:[%s1282 + $0x48] sm:$0xff]
        %v1293 = vld [vmem:[%s1282 + $0x50] sm:$0xff]
        %v1294 = vld [vmem:[%s1282 + $0x58] sm:$0xff]
        %v1295 = vld [vmem:[%s1282 + $0x60] sm:$0xff]
        %v1296 = vld [vmem:[%s1282 + $0x68] sm:$0xff]
        %v1297 = vld [vmem:[%s1282 + $0x70] sm:$0xff]
        %v1298 = vld [vmem:[%s1282 + $0x78] sm:$0xff]
        %v1315 = vunpack.c.l.b16 %v1283
        %v1316 = vunpack.c.h.b16 %v1283
        %v1317 = vunpack.c.l.b16 %v1284
        %v1318 = vunpack.c.h.b16 %v1284
        %v1319 = vunpack.c.l.b16 %v1285
        %v1320 = vunpack.c.h.b16 %v1285
        %v1321 = vunpack.c.l.b16 %v1286
        %v1322 = vunpack.c.h.b16 %v1286
        %v1323 = vunpack.c.l.b16 %v1287
        %v1324 = vunpack.c.h.b16 %v1287
        %v1325 = vunpack.c.l.b16 %v1288
        %v1326 = vunpack.c.h.b16 %v1288
        %v1327 = vunpack.c.l.b16 %v1289
        %v1328 = vunpack.c.h.b16 %v1289
        %v1329 = vunpack.c.l.b16 %v1290
        %v1330 = vunpack.c.h.b16 %v1290
        %v1331 = vunpack.c.l.b16 %v1291
        %v1332 = vunpack.c.h.b16 %v1291
        %v1333 = vunpack.c.l.b16 %v1292
        %v1334 = vunpack.c.h.b16 %v1292
        %v1335 = vunpack.c.l.b16 %v1293
        %v1336 = vunpack.c.h.b16 %v1293
        %v1337 = vunpack.c.l.b16 %v1294
        %v1338 = vunpack.c.h.b16 %v1294
        %v1339 = vunpack.c.l.b16 %v1295
        %v1340 = vunpack.c.h.b16 %v1295
        %v1341 = vunpack.c.l.b16 %v1296
        %v1342 = vunpack.c.h.b16 %v1296
        %v1343 = vunpack.c.l.b16 %v1297
        %v1344 = vunpack.c.h.b16 %v1297
        %v1345 = vunpack.c.l.b16 %v1298
        %v1346 = vunpack.c.h.b16 %v1298
        %v1347 = vpack.c.b16 %v1317, %v1315
        %v1348 = vpack.c.b16 %v1318, %v1316
        %v1349 = vpack.c.b16 %v1321, %v1319
        %v1350 = vpack.c.b16 %v1322, %v1320
        %v1351 = vpack.c.b16 %v1325, %v1323
        %v1352 = vpack.c.b16 %v1326, %v1324
        %v1353 = vpack.c.b16 %v1329, %v1327
        %v1354 = vpack.c.b16 %v1330, %v1328
        %v1355 = vpack.c.b16 %v1333, %v1331
        %v1356 = vpack.c.b16 %v1334, %v1332
        %v1357 = vpack.c.b16 %v1337, %v1335
        %v1358 = vpack.c.b16 %v1338, %v1336
        %v1359 = vpack.c.b16 %v1341, %v1339
        %v1360 = vpack.c.b16 %v1342, %v1340
        %v1361 = vpack.c.b16 %v1345, %v1343
        %v1362 = vpack.c.b16 %v1346, %v1344
        %1379 = vmatprep.subr.bf16.mxu0 %v1348
        %1380 = vmatpush1.bf16.msra.mxu0 %v1347
        %1381 = vmatprep.subr.bf16.mxu0 %v1350
        %1382 = vmatpush1.bf16.msra.mxu0 %v1349
        %1383 = vmatprep.subr.bf16.mxu0 %v1352
        %1384 = vmatpush1.bf16.msra.mxu0 %v1351
        %1385 = vmatprep.subr.bf16.mxu0 %v1354
        %1386 = vmatpush1.bf16.msra.mxu0 %v1353
        %1387 = vmatprep.subr.bf16.mxu0 %v1356
        %1388 = vmatpush1.bf16.msra.mxu0 %v1355
        %1389 = vmatprep.subr.bf16.mxu0 %v1358
        %1390 = vmatpush1.bf16.msra.mxu0 %v1357
        %1391 = vmatprep.subr.bf16.mxu0 %v1360
        %1392 = vmatpush1.bf16.msra.mxu0 %v1359
        %1393 = vmatprep.subr.bf16.mxu0 %v1362
        %1394 = vmatpush1.bf16.msra.mxu0 %v1361
        %1395 = vmatprep.subr.bf16.mxu0 0
        %1396 = vmatpush1.bf16.msra.mxu0 0
        %1397 = vmatprep.subr.bf16.mxu0 0
        %1398 = vmatpush1.bf16.msra.mxu0 0
        %1399 = vmatprep.subr.bf16.mxu0 0
        %1400 = vmatpush1.bf16.msra.mxu0 0
        %1401 = vmatprep.subr.bf16.mxu0 0
        %1402 = vmatpush1.bf16.msra.mxu0 0
        %1403 = vmatprep.subr.bf16.mxu0 0
        %1404 = vmatpush1.bf16.msra.mxu0 0
        %1405 = vmatprep.subr.bf16.mxu0 0
        %1406 = vmatpush1.bf16.msra.mxu0 0
        %1407 = vmatprep.subr.bf16.mxu0 0
        %1408 = vmatpush1.bf16.msra.mxu0 0
        %1409 = vmatprep.subr.bf16.mxu0 0
        %1410 = vmatpush1.bf16.msra.mxu0 0
        %1411 = vmatprep.mubr.bf16.mxu0 0
        %1412 = vmatmul.mubr.bf16.gmra.mrb[0].mxu0 %v856
        %v1413 = vpop.f32.mrb[0].mxu0
        %v1414 = vadd.f32 0.0, %v1413
        %v1415 = vpop.f32.mrb[0].mxu0
        %v1416 = vadd.f32 0.0, %v1415
        %v1417 = vpop.f32.mrb[0].mxu0
        %v1418 = vadd.f32 0.0, %v1417
        %v1419 = vpop.f32.mrb[0].mxu0
        %v1420 = vadd.f32 0.0, %v1419
        %1421 = vmatprep.mubr.bf16.mxu0 0
        %1422 = vmatmul.mubr.bf16.gmra.mrb[0].mxu0 %v857
        %v1423 = vpop.f32.mrb[0].mxu0
        %v1424 = vadd.f32 0.0, %v1423
        %v1425 = vpop.f32.mrb[0].mxu0
        %v1426 = vadd.f32 0.0, %v1425
        %v1427 = vpop.f32.mrb[0].mxu0
        %v1428 = vadd.f32 0.0, %v1427
        %v1429 = vpop.f32.mrb[0].mxu0
        %v1430 = vadd.f32 0.0, %v1429
        %1431 = vmatprep.mubr.bf16.mxu0 0
        %1432 = vmatmul.mubr.bf16.gmra.mrb[0].mxu0 %v858
        %v1433 = vpop.f32.mrb[0].mxu0
        %v1434 = vadd.f32 0.0, %v1433
        %v1435 = vpop.f32.mrb[0].mxu0
        %v1436 = vadd.f32 0.0, %v1435
        %v1437 = vpop.f32.mrb[0].mxu0
        %v1438 = vadd.f32 0.0, %v1437
        %v1439 = vpop.f32.mrb[0].mxu0
        %v1440 = vadd.f32 0.0, %v1439
        %1441 = vmatprep.mubr.bf16.mxu0 0
        %1442 = vmatmul.mubr.bf16.gmra.mrb[0].mxu0 %v859
        %v1443 = vpop.f32.mrb[0].mxu0
        %v1444 = vadd.f32 0.0, %v1443
        %v1445 = vpop.f32.mrb[0].mxu0
        %v1446 = vadd.f32 0.0, %v1445
        %v1447 = vpop.f32.mrb[0].mxu0
        %v1448 = vadd.f32 0.0, %v1447
        %v1449 = vpop.f32.mrb[0].mxu0
        %v1450 = vadd.f32 0.0, %v1449
        %1451 = vmatprep.mubr.bf16.mxu0 0
        %1452 = vmatmul.mubr.bf16.gmra.mrb[0].mxu0 %v860
        %v1453 = vpop.f32.mrb[0].mxu0
        %v1454 = vadd.f32 0.0, %v1453
        %v1455 = vpop.f32.mrb[0].mxu0
        %v1456 = vadd.f32 0.0, %v1455
        %v1457 = vpop.f32.mrb[0].mxu0
        %v1458 = vadd.f32 0.0, %v1457
        %v1459 = vpop.f32.mrb[0].mxu0
        %v1460 = vadd.f32 0.0, %v1459
        %1461 = vmatprep.mubr.bf16.mxu0 0
        %1462 = vmatmul.mubr.bf16.gmra.mrb[0].mxu0 %v861
        %v1463 = vpop.f32.mrb[0].mxu0
        %v1464 = vadd.f32 0.0, %v1463
        %v1465 = vpop.f32.mrb[0].mxu0
        %v1466 = vadd.f32 0.0, %v1465
        %v1467 = vpop.f32.mrb[0].mxu0
        %v1468 = vadd.f32 0.0, %v1467
        %v1469 = vpop.f32.mrb[0].mxu0
        %v1470 = vadd.f32 0.0, %v1469
        %1471 = vmatprep.mubr.bf16.mxu0 0
        %1472 = vmatmul.mubr.bf16.gmra.mrb[0].mxu0 %v878
        %v1473 = vpop.f32.mrb[0].mxu0
        %v1474 = vadd.f32 0.0, %v1473
        %v1475 = vpop.f32.mrb[0].mxu0
        %v1476 = vadd.f32 0.0, %v1475
        %v1477 = vpop.f32.mrb[0].mxu0
        %v1478 = vadd.f32 0.0, %v1477
        %v1479 = vpop.f32.mrb[0].mxu0
        %v1480 = vadd.f32 0.0, %v1479
        %1481 = vmatprep.mubr.bf16.mxu0 0
        %1482 = vmatmul.mubr.bf16.gmra.mrb[0].mxu0 %v422
        %v1483 = vpop.f32.mrb[0].mxu0
        %v1484 = vadd.f32 0.0, %v1483
        %v1485 = vpop.f32.mrb[0].mxu0
        %v1486 = vadd.f32 0.0, %v1485
        %v1487 = vpop.f32.mrb[0].mxu0
        %v1488 = vadd.f32 0.0, %v1487
        %v1489 = vpop.f32.mrb[0].mxu0
        %v1490 = vadd.f32 0.0, %v1489
        %1491 = vdwg.mxu0
        %v1492 = vadd.f32 %v1204, %v1414
        %v1493 = vadd.f32 %v1206, %v1416
        %v1494 = vadd.f32 %v1208, %v1418
        %v1495 = vadd.f32 %v1210, %v1420
        %v1496 = vadd.f32 %v1214, %v1424
        %v1497 = vadd.f32 %v1216, %v1426
        %v1498 = vadd.f32 %v1218, %v1428
        %v1499 = vadd.f32 %v1220, %v1430
        %v1500 = vadd.f32 %v1224, %v1434
        %v1501 = vadd.f32 %v1226, %v1436
        %v1502 = vadd.f32 %v1228, %v1438
        %v1503 = vadd.f32 %v1230, %v1440
        %v1504 = vadd.f32 %v1234, %v1444
        %v1505 = vadd.f32 %v1236, %v1446
        %v1506 = vadd.f32 %v1238, %v1448
        %v1507 = vadd.f32 %v1240, %v1450
        %v1508 = vadd.f32 %v1244, %v1454
        %v1509 = vadd.f32 %v1246, %v1456
        %v1510 = vadd.f32 %v1248, %v1458
        %v1511 = vadd.f32 %v1250, %v1460
        %v1512 = vadd.f32 %v1254, %v1464
        %v1513 = vadd.f32 %v1256, %v1466
        %v1514 = vadd.f32 %v1258, %v1468
        %v1515 = vadd.f32 %v1260, %v1470
        %v1516 = vadd.f32 %v1264, %v1474
        %v1517 = vadd.f32 %v1266, %v1476
        %v1518 = vadd.f32 %v1268, %v1478
        %v1519 = vadd.f32 %v1270, %v1480
        %v1520 = vadd.f32 %v1274, %v1484
        %v1521 = vadd.f32 %v1276, %v1486
        %v1522 = vadd.f32 %v1278, %v1488
        %v1523 = vadd.f32 %v1280, %v1490
        %v1524 = vld [vmem:[%s4] sm:$0x3]
        %v1526 = vlaneseq
        %v1527 = vshrl.u32 %v1526, 7
        %v1528 = vsub.s32 0, %v1527
        %v1529 = vrot.slane %v1524, %v1528
        %v1530 = vlaneseq
        %v1531 = vshrl.u32 %v1530, 7
        %v1532 = vsub.s32 1, %v1531
        %v1533 = vrot.slane %v1524, %v1532
        %v1536 = vadd.f32 %v1492, %v1529
        %v1537 = vadd.f32 %v1493, %v1533
        %v1538 = vadd.f32 %v1494, %v1529
        %v1539 = vadd.f32 %v1495, %v1533
        %v1540 = vadd.f32 %v1496, %v1529
        %v1541 = vadd.f32 %v1497, %v1533
        %v1542 = vadd.f32 %v1498, %v1529
        %v1543 = vadd.f32 %v1499, %v1533
        %v1544 = vadd.f32 %v1500, %v1529
        %v1545 = vadd.f32 %v1501, %v1533
        %v1546 = vadd.f32 %v1502, %v1529
        %v1547 = vadd.f32 %v1503, %v1533
        %v1548 = vadd.f32 %v1504, %v1529
        %v1549 = vadd.f32 %v1505, %v1533
        %v1550 = vadd.f32 %v1506, %v1529
        %v1551 = vadd.f32 %v1507, %v1533
        %v1552 = vadd.f32 %v1508, %v1529
        %v1553 = vadd.f32 %v1509, %v1533
        %v1554 = vadd.f32 %v1510, %v1529
        %v1555 = vadd.f32 %v1511, %v1533
        %v1556 = vadd.f32 %v1512, %v1529
        %v1557 = vadd.f32 %v1513, %v1533
        %v1558 = vadd.f32 %v1514, %v1529
        %v1559 = vadd.f32 %v1515, %v1533
        %v1560 = vadd.f32 %v1516, %v1529
        %v1561 = vadd.f32 %v1517, %v1533
        %v1562 = vadd.f32 %v1518, %v1529
        %v1563 = vadd.f32 %v1519, %v1533
        %v1564 = vadd.f32 %v1520, %v1529
        %v1565 = vadd.f32 %v1521, %v1533
        %v1566 = vadd.f32 %v1522, %v1529
        %v1567 = vadd.f32 %v1523, %v1533
        %v1568 = vmax.f32 %v1536, 0.0
        %v1569 = vmax.f32 %v1537, 0.0
        %v1570 = vmax.f32 %v1538, 0.0
        %v1571 = vmax.f32 %v1539, 0.0
        %v1572 = vmax.f32 %v1540, 0.0
        %v1573 = vmax.f32 %v1541, 0.0
        %v1574 = vmax.f32 %v1542, 0.0
        %v1575 = vmax.f32 %v1543, 0.0
        %v1576 = vmax.f32 %v1544, 0.0
        %v1577 = vmax.f32 %v1545, 0.0
        %v1578 = vmax.f32 %v1546, 0.0
        %v1579 = vmax.f32 %v1547, 0.0
        %v1580 = vmax.f32 %v1548, 0.0
        %v1581 = vmax.f32 %v1549, 0.0
        %v1582 = vmax.f32 %v1550, 0.0
        %v1583 = vmax.f32 %v1551, 0.0
        %v1584 = vmax.f32 %v1552, 0.0
        %v1585 = vmax.f32 %v1553, 0.0
        %v1586 = vmax.f32 %v1554, 0.0
        %v1587 = vmax.f32 %v1555, 0.0
        %v1588 = vmax.f32 %v1556, 0.0
        %v1589 = vmax.f32 %v1557, 0.0
        %v1590 = vmax.f32 %v1558, 0.0
        %v1591 = vmax.f32 %v1559, 0.0
        %v1592 = vmax.f32 %v1560, 0.0
        %v1593 = vmax.f32 %v1561, 0.0
        %v1594 = vmax.f32 %v1562, 0.0
        %v1595 = vmax.f32 %v1563, 0.0
        %v1596 = vmax.f32 %v1564, 0.0
        %v1597 = vmax.f32 %v1565, 0.0
        %v1598 = vmax.f32 %v1566, 0.0
        %v1599 = vmax.f32 %v1567, 0.0
        %v1600 = vpack.c.bf16 %v1570, %v1568
        %v1601 = vpack.c.bf16 %v1571, %v1569
        %v1602 = vpack.c.bf16 %v1574, %v1572
        %v1603 = vpack.c.bf16 %v1575, %v1573
        %v1604 = vpack.c.bf16 %v1578, %v1576
        %v1605 = vpack.c.bf16 %v1579, %v1577
        %v1606 = vpack.c.bf16 %v1582, %v1580
        %v1607 = vpack.c.bf16 %v1583, %v1581
        %v1608 = vpack.c.bf16 %v1586, %v1584
        %v1609 = vpack.c.bf16 %v1587, %v1585
        %v1610 = vpack.c.bf16 %v1590, %v1588
        %v1611 = vpack.c.bf16 %v1591, %v1589
        %v1612 = vpack.c.bf16 %v1594, %v1592
        %v1613 = vpack.c.bf16 %v1595, %v1593
        %v1614 = vld [vmem:[%s5] sm:$0xff]
        %v1615 = vld [vmem:[%s5 + $0x8] sm:$0xff]
        %v1616 = vld [vmem:[%s5 + $0x10] sm:$0xff]
        %v1617 = vld [vmem:[%s5 + $0x18] sm:$0xff]
        %v1618 = vld [vmem:[%s5 + $0x20] sm:$0xff]
        %v1619 = vld [vmem:[%s5 + $0x28] sm:$0xff]
        %v1620 = vld [vmem:[%s5 + $0x30] sm:$0xff]
        %v1621 = vld [vmem:[%s5 + $0x38] sm:$0xff]
        %v1622 = vld [vmem:[%s5 + $0x40] sm:$0xff]
        %v1623 = vld [vmem:[%s5 + $0x48] sm:$0xff]
        %v1624 = vld [vmem:[%s5 + $0x50] sm:$0xff]
        %v1625 = vld [vmem:[%s5 + $0x58] sm:$0xff]
        %v1626 = vld [vmem:[%s5 + $0x60] sm:$0xff]
        %v1627 = vld [vmem:[%s5 + $0x68] sm:$0xff]
        %v1628 = vld [vmem:[%s5 + $0x70] sm:$0xff]
        %v1629 = vld [vmem:[%s5 + $0x78] sm:$0xff]
        %v1630 = vld [vmem:[%s5 + $0x80] sm:$0xff]
        %v1631 = vld [vmem:[%s5 + $0x88] sm:$0xff]
        %v1632 = vld [vmem:[%s5 + $0x90] sm:$0xff]
        %v1633 = vld [vmem:[%s5 + $0x98] sm:$0xff]
        %v1634 = vld [vmem:[%s5 + $0xa0] sm:$0xff]
        %v1635 = vld [vmem:[%s5 + $0xa8] sm:$0xff]
        %v1636 = vld [vmem:[%s5 + $0xb0] sm:$0xff]
        %v1637 = vld [vmem:[%s5 + $0xb8] sm:$0xff]
        %v1638 = vld [vmem:[%s5 + $0xc0] sm:$0xff]
        %v1639 = vld [vmem:[%s5 + $0xc8] sm:$0xff]
        %v1640 = vld [vmem:[%s5 + $0xd0] sm:$0xff]
        %v1641 = vld [vmem:[%s5 + $0xd8] sm:$0xff]
        %v1642 = vld [vmem:[%s5 + $0xe0] sm:$0xff]
        %v1643 = vld [vmem:[%s5 + $0xe8] sm:$0xff]
        %v1644 = vld [vmem:[%s5 + $0xf0] sm:$0xff]
        %v1645 = vld [vmem:[%s5 + $0xf8] sm:$0xff]
        %v1646 = vpack.c.bf16 %v1598, %v1596
        %v1647 = vpack.c.bf16 %v1599, %v1597
        %s1648 = scalar_lea.vmem %s5, 256
        %v1649 = vld [vmem:[%s1648] sm:$0xff]
        %v1650 = vld [vmem:[%s1648 + $0x8] sm:$0xff]
        %v1651 = vld [vmem:[%s1648 + $0x10] sm:$0xff]
        %v1652 = vld [vmem:[%s1648 + $0x18] sm:$0xff]
        %v1653 = vld [vmem:[%s1648 + $0x20] sm:$0xff]
        %v1654 = vld [vmem:[%s1648 + $0x28] sm:$0xff]
        %v1655 = vld [vmem:[%s1648 + $0x30] sm:$0xff]
        %v1656 = vld [vmem:[%s1648 + $0x38] sm:$0xff]
        %v1657 = vld [vmem:[%s1648 + $0x40] sm:$0xff]
        %v1658 = vld [vmem:[%s1648 + $0x48] sm:$0xff]
        %v1659 = vld [vmem:[%s1648 + $0x50] sm:$0xff]
        %v1660 = vld [vmem:[%s1648 + $0x58] sm:$0xff]
        %v1661 = vld [vmem:[%s1648 + $0x60] sm:$0xff]
        %v1662 = vld [vmem:[%s1648 + $0x68] sm:$0xff]
        %v1663 = vld [vmem:[%s1648 + $0x70] sm:$0xff]
        %v1664 = vld [vmem:[%s1648 + $0x78] sm:$0xff]
        %v1665 = vld [vmem:[%s1648 + $0x80] sm:$0xff]
        %v1666 = vld [vmem:[%s1648 + $0x88] sm:$0xff]
        %v1667 = vld [vmem:[%s1648 + $0x90] sm:$0xff]
        %v1668 = vld [vmem:[%s1648 + $0x98] sm:$0xff]
        %v1669 = vld [vmem:[%s1648 + $0xa0] sm:$0xff]
        %v1670 = vld [vmem:[%s1648 + $0xa8] sm:$0xff]
        %v1671 = vld [vmem:[%s1648 + $0xb0] sm:$0xff]
        %v1672 = vld [vmem:[%s1648 + $0xb8] sm:$0xff]
        %v1673 = vld [vmem:[%s1648 + $0xc0] sm:$0xff]
        %v1674 = vld [vmem:[%s1648 + $0xc8] sm:$0xff]
        %v1675 = vld [vmem:[%s1648 + $0xd0] sm:$0xff]
        %v1676 = vld [vmem:[%s1648 + $0xd8] sm:$0xff]
        %v1677 = vld [vmem:[%s1648 + $0xe0] sm:$0xff]
        %v1678 = vld [vmem:[%s1648 + $0xe8] sm:$0xff]
        %v1679 = vld [vmem:[%s1648 + $0xf0] sm:$0xff]
        %v1680 = vld [vmem:[%s1648 + $0xf8] sm:$0xff]
        %v1713 = vunpack.c.l.b16 %v1649
        %v1714 = vunpack.c.h.b16 %v1649
        %v1715 = vunpack.c.l.b16 %v1650
        %v1716 = vunpack.c.h.b16 %v1650
        %v1717 = vunpack.c.l.b16 %v1651
        %v1718 = vunpack.c.h.b16 %v1651
        %v1719 = vunpack.c.l.b16 %v1652
        %v1720 = vunpack.c.h.b16 %v1652
        %v1721 = vunpack.c.l.b16 %v1653
        %v1722 = vunpack.c.h.b16 %v1653
        %v1723 = vunpack.c.l.b16 %v1654
        %v1724 = vunpack.c.h.b16 %v1654
        %v1725 = vunpack.c.l.b16 %v1655
        %v1726 = vunpack.c.h.b16 %v1655
        %v1727 = vunpack.c.l.b16 %v1656
        %v1728 = vunpack.c.h.b16 %v1656
        %v1729 = vunpack.c.l.b16 %v1657
        %v1730 = vunpack.c.h.b16 %v1657
        %v1731 = vunpack.c.l.b16 %v1658
        %v1732 = vunpack.c.h.b16 %v1658
        %v1733 = vunpack.c.l.b16 %v1659
        %v1734 = vunpack.c.h.b16 %v1659
        %v1735 = vunpack.c.l.b16 %v1660
        %v1736 = vunpack.c.h.b16 %v1660
        %v1737 = vunpack.c.l.b16 %v1661
        %v1738 = vunpack.c.h.b16 %v1661
        %v1739 = vunpack.c.l.b16 %v1662
        %v1740 = vunpack.c.h.b16 %v1662
        %v1741 = vunpack.c.l.b16 %v1663
        %v1742 = vunpack.c.h.b16 %v1663
        %v1743 = vunpack.c.l.b16 %v1664
        %v1744 = vunpack.c.h.b16 %v1664
        %v1745 = vunpack.c.l.b16 %v1665
        %v1746 = vunpack.c.h.b16 %v1665
        %v1747 = vunpack.c.l.b16 %v1666
        %v1748 = vunpack.c.h.b16 %v1666
        %v1749 = vunpack.c.l.b16 %v1667
        %v1750 = vunpack.c.h.b16 %v1667
        %v1751 = vunpack.c.l.b16 %v1668
        %v1752 = vunpack.c.h.b16 %v1668
        %v1753 = vunpack.c.l.b16 %v1669
        %v1754 = vunpack.c.h.b16 %v1669
        %v1755 = vunpack.c.l.b16 %v1670
        %v1756 = vunpack.c.h.b16 %v1670
        %v1757 = vunpack.c.l.b16 %v1671
        %v1758 = vunpack.c.h.b16 %v1671
        %v1759 = vunpack.c.l.b16 %v1672
        %v1760 = vunpack.c.h.b16 %v1672
        %v1761 = vunpack.c.l.b16 %v1673
        %v1762 = vunpack.c.h.b16 %v1673
        %v1763 = vunpack.c.l.b16 %v1674
        %v1764 = vunpack.c.h.b16 %v1674
        %v1765 = vunpack.c.l.b16 %v1675
        %v1766 = vunpack.c.h.b16 %v1675
        %v1767 = vunpack.c.l.b16 %v1676
        %v1768 = vunpack.c.h.b16 %v1676
        %v1769 = vunpack.c.l.b16 %v1677
        %v1770 = vunpack.c.h.b16 %v1677
        %v1771 = vunpack.c.l.b16 %v1678
        %v1772 = vunpack.c.h.b16 %v1678
        %v1773 = vunpack.c.l.b16 %v1679
        %v1774 = vunpack.c.h.b16 %v1679
        %v1775 = vunpack.c.l.b16 %v1680
        %v1776 = vunpack.c.h.b16 %v1680
        %v1777 = vpack.c.b16 %v1715, %v1713
        %v1778 = vpack.c.b16 %v1716, %v1714
        %v1779 = vpack.c.b16 %v1719, %v1717
        %v1780 = vpack.c.b16 %v1720, %v1718
        %v1781 = vpack.c.b16 %v1723, %v1721
        %v1782 = vpack.c.b16 %v1724, %v1722
        %v1783 = vpack.c.b16 %v1727, %v1725
        %v1784 = vpack.c.b16 %v1728, %v1726
        %v1785 = vpack.c.b16 %v1731, %v1729
        %v1786 = vpack.c.b16 %v1732, %v1730
        %v1787 = vpack.c.b16 %v1735, %v1733
        %v1788 = vpack.c.b16 %v1736, %v1734
        %v1789 = vpack.c.b16 %v1739, %v1737
        %v1790 = vpack.c.b16 %v1740, %v1738
        %v1791 = vpack.c.b16 %v1743, %v1741
        %v1792 = vpack.c.b16 %v1744, %v1742
        %v1793 = vpack.c.b16 %v1747, %v1745
        %v1794 = vpack.c.b16 %v1748, %v1746
        %v1795 = vpack.c.b16 %v1751, %v1749
        %v1796 = vpack.c.b16 %v1752, %v1750
        %v1797 = vpack.c.b16 %v1755, %v1753
        %v1798 = vpack.c.b16 %v1756, %v1754
        %v1799 = vpack.c.b16 %v1759, %v1757
        %v1800 = vpack.c.b16 %v1760, %v1758
        %v1801 = vpack.c.b16 %v1763, %v1761
        %v1802 = vpack.c.b16 %v1764, %v1762
        %v1803 = vpack.c.b16 %v1767, %v1765
        %v1804 = vpack.c.b16 %v1768, %v1766
        %v1805 = vpack.c.b16 %v1771, %v1769
        %v1806 = vpack.c.b16 %v1772, %v1770
        %v1807 = vpack.c.b16 %v1775, %v1773
        %v1808 = vpack.c.b16 %v1776, %v1774
        %1841 = vmatprep.subr.bf16.mxu0 %v1778
        %1842 = vmatpush1.bf16.msra.mxu0 %v1777
        %1843 = vmatprep.subr.bf16.mxu0 %v1780
        %1844 = vmatpush1.bf16.msra.mxu0 %v1779
        %1845 = vmatprep.subr.bf16.mxu0 %v1782
        %1846 = vmatpush1.bf16.msra.mxu0 %v1781
        %1847 = vmatprep.subr.bf16.mxu0 %v1784
        %1848 = vmatpush1.bf16.msra.mxu0 %v1783
        %1849 = vmatprep.subr.bf16.mxu0 %v1786
        %1850 = vmatpush1.bf16.msra.mxu0 %v1785
        %1851 = vmatprep.subr.bf16.mxu0 %v1788
        %1852 = vmatpush1.bf16.msra.mxu0 %v1787
        %1853 = vmatprep.subr.bf16.mxu0 %v1790
        %1854 = vmatpush1.bf16.msra.mxu0 %v1789
        %1855 = vmatprep.subr.bf16.mxu0 %v1792
        %1856 = vmatpush1.bf16.msra.mxu0 %v1791
        %1857 = vmatprep.subr.bf16.mxu0 %v1794
        %1858 = vmatpush1.bf16.msra.mxu0 %v1793
        %1859 = vmatprep.subr.bf16.mxu0 %v1796
        %1860 = vmatpush1.bf16.msra.mxu0 %v1795
        %1861 = vmatprep.subr.bf16.mxu0 %v1798
        %1862 = vmatpush1.bf16.msra.mxu0 %v1797
        %1863 = vmatprep.subr.bf16.mxu0 %v1800
        %1864 = vmatpush1.bf16.msra.mxu0 %v1799
        %1865 = vmatprep.subr.bf16.mxu0 %v1802
        %1866 = vmatpush1.bf16.msra.mxu0 %v1801
        %1867 = vmatprep.subr.bf16.mxu0 %v1804
        %1868 = vmatpush1.bf16.msra.mxu0 %v1803
        %1869 = vmatprep.subr.bf16.mxu0 %v1806
        %1870 = vmatpush1.bf16.msra.mxu0 %v1805
        %1871 = vmatprep.subr.bf16.mxu0 %v1808
        %1872 = vmatpush1.bf16.msra.mxu0 %v1807
        %1873 = vmatprep.mubr.bf16.mxu0 %v1601
        %1874 = vmatmul.mubr.bf16.gmra.mrb[0].mxu0 %v1600
        %v1875 = vpop.f32.mrb[0].mxu0
        %v1876 = vadd.f32 0.0, %v1875
        %v1877 = vpop.f32.mrb[0].mxu0
        %v1878 = vadd.f32 0.0, %v1877
        %v1879 = vpop.f32.mrb[0].mxu0
        %v1880 = vadd.f32 0.0, %v1879
        %v1881 = vpop.f32.mrb[0].mxu0
        %v1882 = vadd.f32 0.0, %v1881
        %1883 = vmatprep.mubr.bf16.mxu0 %v1603
        %1884 = vmatmul.mubr.bf16.gmra.mrb[0].mxu0 %v1602
        %v1885 = vpop.f32.mrb[0].mxu0
        %v1886 = vadd.f32 0.0, %v1885
        %v1887 = vpop.f32.mrb[0].mxu0
        %v1888 = vadd.f32 0.0, %v1887
        %v1889 = vpop.f32.mrb[0].mxu0
        %v1890 = vadd.f32 0.0, %v1889
        %v1891 = vpop.f32.mrb[0].mxu0
        %v1892 = vadd.f32 0.0, %v1891
        %1893 = vmatprep.mubr.bf16.mxu0 %v1605
        %1894 = vmatmul.mubr.bf16.gmra.mrb[0].mxu0 %v1604
        %v1895 = vpop.f32.mrb[0].mxu0
        %v1896 = vadd.f32 0.0, %v1895
        %v1897 = vpop.f32.mrb[0].mxu0
        %v1898 = vadd.f32 0.0, %v1897
        %v1899 = vpop.f32.mrb[0].mxu0
        %v1900 = vadd.f32 0.0, %v1899
        %v1901 = vpop.f32.mrb[0].mxu0
        %v1902 = vadd.f32 0.0, %v1901
        %1903 = vmatprep.mubr.bf16.mxu0 %v1607
        %1904 = vmatmul.mubr.bf16.gmra.mrb[0].mxu0 %v1606
        %v1905 = vpop.f32.mrb[0].mxu0
        %v1906 = vadd.f32 0.0, %v1905
        %v1907 = vpop.f32.mrb[0].mxu0
        %v1908 = vadd.f32 0.0, %v1907
        %v1909 = vpop.f32.mrb[0].mxu0
        %v1910 = vadd.f32 0.0, %v1909
        %v1911 = vpop.f32.mrb[0].mxu0
        %v1912 = vadd.f32 0.0, %v1911
        %1913 = vmatprep.mubr.bf16.mxu0 %v1609
        %1914 = vmatmul.mubr.bf16.gmra.mrb[0].mxu0 %v1608
        %v1915 = vpop.f32.mrb[0].mxu0
        %v1916 = vadd.f32 0.0, %v1915
        %v1917 = vpop.f32.mrb[0].mxu0
        %v1918 = vadd.f32 0.0, %v1917
        %v1919 = vpop.f32.mrb[0].mxu0
        %v1920 = vadd.f32 0.0, %v1919
        %v1921 = vpop.f32.mrb[0].mxu0
        %v1922 = vadd.f32 0.0, %v1921
        %1923 = vmatprep.mubr.bf16.mxu0 %v1611
        %1924 = vmatmul.mubr.bf16.gmra.mrb[0].mxu0 %v1610
        %v1925 = vpop.f32.mrb[0].mxu0
        %v1926 = vadd.f32 0.0, %v1925
        %v1927 = vpop.f32.mrb[0].mxu0
        %v1928 = vadd.f32 0.0, %v1927
        %v1929 = vpop.f32.mrb[0].mxu0
        %v1930 = vadd.f32 0.0, %v1929
        %v1931 = vpop.f32.mrb[0].mxu0
        %v1932 = vadd.f32 0.0, %v1931
        %1933 = vmatprep.mubr.bf16.mxu0 %v1613
        %1934 = vmatmul.mubr.bf16.gmra.mrb[0].mxu0 %v1612
        %v1935 = vpop.f32.mrb[0].mxu0
        %v1936 = vadd.f32 0.0, %v1935
        %v1937 = vpop.f32.mrb[0].mxu0
        %v1938 = vadd.f32 0.0, %v1937
        %v1939 = vpop.f32.mrb[0].mxu0
        %v1940 = vadd.f32 0.0, %v1939
        %v1941 = vpop.f32.mrb[0].mxu0
        %v1942 = vadd.f32 0.0, %v1941
        %1943 = vmatprep.mubr.bf16.mxu0 %v1647
        %1944 = vmatmul.mubr.bf16.gmra.mrb[0].mxu0 %v1646
        %v1945 = vpop.f32.mrb[0].mxu0
        %v1946 = vadd.f32 0.0, %v1945
        %v1947 = vpop.f32.mrb[0].mxu0
        %v1948 = vadd.f32 0.0, %v1947
        %v1949 = vpop.f32.mrb[0].mxu0
        %v1950 = vadd.f32 0.0, %v1949
        %v1951 = vpop.f32.mrb[0].mxu0
        %v1952 = vadd.f32 0.0, %v1951
        %1953 = vdwg.mxu0
        %v1986 = vunpack.c.l.b16 %v1614
        %v1987 = vunpack.c.h.b16 %v1614
        %v1988 = vunpack.c.l.b16 %v1615
        %v1989 = vunpack.c.h.b16 %v1615
        %v1990 = vunpack.c.l.b16 %v1616
        %v1991 = vunpack.c.h.b16 %v1616
        %v1992 = vunpack.c.l.b16 %v1617
        %v1993 = vunpack.c.h.b16 %v1617
        %v1994 = vunpack.c.l.b16 %v1618
        %v1995 = vunpack.c.h.b16 %v1618
        %v1996 = vunpack.c.l.b16 %v1619
        %v1997 = vunpack.c.h.b16 %v1619
        %v1998 = vunpack.c.l.b16 %v1620
        %v1999 = vunpack.c.h.b16 %v1620
        %v2000 = vunpack.c.l.b16 %v1621
        %v2001 = vunpack.c.h.b16 %v1621
        %v2002 = vunpack.c.l.b16 %v1622
        %v2003 = vunpack.c.h.b16 %v1622
        %v2004 = vunpack.c.l.b16 %v1623
        %v2005 = vunpack.c.h.b16 %v1623
        %v2006 = vunpack.c.l.b16 %v1624
        %v2007 = vunpack.c.h.b16 %v1624
        %v2008 = vunpack.c.l.b16 %v1625
        %v2009 = vunpack.c.h.b16 %v1625
        %v2010 = vunpack.c.l.b16 %v1626
        %v2011 = vunpack.c.h.b16 %v1626
        %v2012 = vunpack.c.l.b16 %v1627
        %v2013 = vunpack.c.h.b16 %v1627
        %v2014 = vunpack.c.l.b16 %v1628
        %v2015 = vunpack.c.h.b16 %v1628
        %v2016 = vunpack.c.l.b16 %v1629
        %v2017 = vunpack.c.h.b16 %v1629
        %v2018 = vunpack.c.l.b16 %v1630
        %v2019 = vunpack.c.h.b16 %v1630
        %v2020 = vunpack.c.l.b16 %v1631
        %v2021 = vunpack.c.h.b16 %v1631
        %v2022 = vunpack.c.l.b16 %v1632
        %v2023 = vunpack.c.h.b16 %v1632
        %v2024 = vunpack.c.l.b16 %v1633
        %v2025 = vunpack.c.h.b16 %v1633
        %v2026 = vunpack.c.l.b16 %v1634
        %v2027 = vunpack.c.h.b16 %v1634
        %v2028 = vunpack.c.l.b16 %v1635
        %v2029 = vunpack.c.h.b16 %v1635
        %v2030 = vunpack.c.l.b16 %v1636
        %v2031 = vunpack.c.h.b16 %v1636
        %v2032 = vunpack.c.l.b16 %v1637
        %v2033 = vunpack.c.h.b16 %v1637
        %v2034 = vunpack.c.l.b16 %v1638
        %v2035 = vunpack.c.h.b16 %v1638
        %v2036 = vunpack.c.l.b16 %v1639
        %v2037 = vunpack.c.h.b16 %v1639
        %v2038 = vunpack.c.l.b16 %v1640
        %v2039 = vunpack.c.h.b16 %v1640
        %v2040 = vunpack.c.l.b16 %v1641
        %v2041 = vunpack.c.h.b16 %v1641
        %v2042 = vunpack.c.l.b16 %v1642
        %v2043 = vunpack.c.h.b16 %v1642
        %v2044 = vunpack.c.l.b16 %v1643
        %v2045 = vunpack.c.h.b16 %v1643
        %v2046 = vunpack.c.l.b16 %v1644
        %v2047 = vunpack.c.h.b16 %v1644
        %v2048 = vunpack.c.l.b16 %v1645
        %v2049 = vunpack.c.h.b16 %v1645
        %v2050 = vpack.c.b16 %v1988, %v1986
        %v2051 = vpack.c.b16 %v1989, %v1987
        %v2052 = vpack.c.b16 %v1992, %v1990
        %v2053 = vpack.c.b16 %v1993, %v1991
        %v2054 = vpack.c.b16 %v1996, %v1994
        %v2055 = vpack.c.b16 %v1997, %v1995
        %v2056 = vpack.c.b16 %v2000, %v1998
        %v2057 = vpack.c.b16 %v2001, %v1999
        %v2058 = vpack.c.b16 %v2004, %v2002
        %v2059 = vpack.c.b16 %v2005, %v2003
        %v2060 = vpack.c.b16 %v2008, %v2006
        %v2061 = vpack.c.b16 %v2009, %v2007
        %v2062 = vpack.c.b16 %v2012, %v2010
        %v2063 = vpack.c.b16 %v2013, %v2011
        %v2064 = vpack.c.b16 %v2016, %v2014
        %v2065 = vpack.c.b16 %v2017, %v2015
        %v2066 = vpack.c.b16 %v2020, %v2018
        %v2067 = vpack.c.b16 %v2021, %v2019
        %v2068 = vpack.c.b16 %v2024, %v2022
        %v2069 = vpack.c.b16 %v2025, %v2023
        %v2070 = vpack.c.b16 %v2028, %v2026
        %v2071 = vpack.c.b16 %v2029, %v2027
        %v2072 = vpack.c.b16 %v2032, %v2030
        %v2073 = vpack.c.b16 %v2033, %v2031
        %v2074 = vpack.c.b16 %v2036, %v2034
        %v2075 = vpack.c.b16 %v2037, %v2035
        %v2076 = vpack.c.b16 %v2040, %v2038
        %v2077 = vpack.c.b16 %v2041, %v2039
        %v2078 = vpack.c.b16 %v2044, %v2042
        %v2079 = vpack.c.b16 %v2045, %v2043
        %v2080 = vpack.c.b16 %v2048, %v2046
        %v2081 = vpack.c.b16 %v2049, %v2047
        %2114 = vmatprep.subr.bf16.mxu0 %v2051
        %2115 = vmatpush1.bf16.msra.mxu0 %v2050
        %2116 = vmatprep.subr.bf16.mxu0 %v2053
        %2117 = vmatpush1.bf16.msra.mxu0 %v2052
        %2118 = vmatprep.subr.bf16.mxu0 %v2055
        %2119 = vmatpush1.bf16.msra.mxu0 %v2054
        %2120 = vmatprep.subr.bf16.mxu0 %v2057
        %2121 = vmatpush1.bf16.msra.mxu0 %v2056
        %2122 = vmatprep.subr.bf16.mxu0 %v2059
        %2123 = vmatpush1.bf16.msra.mxu0 %v2058
        %2124 = vmatprep.subr.bf16.mxu0 %v2061
        %2125 = vmatpush1.bf16.msra.mxu0 %v2060
        %2126 = vmatprep.subr.bf16.mxu0 %v2063
        %2127 = vmatpush1.bf16.msra.mxu0 %v2062
        %2128 = vmatprep.subr.bf16.mxu0 %v2065
        %2129 = vmatpush1.bf16.msra.mxu0 %v2064
        %2130 = vmatprep.subr.bf16.mxu0 %v2067
        %2131 = vmatpush1.bf16.msra.mxu0 %v2066
        %2132 = vmatprep.subr.bf16.mxu0 %v2069
        %2133 = vmatpush1.bf16.msra.mxu0 %v2068
        %2134 = vmatprep.subr.bf16.mxu0 %v2071
        %2135 = vmatpush1.bf16.msra.mxu0 %v2070
        %2136 = vmatprep.subr.bf16.mxu0 %v2073
        %2137 = vmatpush1.bf16.msra.mxu0 %v2072
        %2138 = vmatprep.subr.bf16.mxu0 %v2075
        %2139 = vmatpush1.bf16.msra.mxu0 %v2074
        %2140 = vmatprep.subr.bf16.mxu0 %v2077
        %2141 = vmatpush1.bf16.msra.mxu0 %v2076
        %2142 = vmatprep.subr.bf16.mxu0 %v2079
        %2143 = vmatpush1.bf16.msra.mxu0 %v2078
        %2144 = vmatprep.subr.bf16.mxu0 %v2081
        %2145 = vmatpush1.bf16.msra.mxu0 %v2080
        %2146 = vmatprep.mubr.bf16.mxu0 %v422
        %2147 = vmatmul.mubr.bf16.gmra.mrb[0].mxu0 %v422
        %v2148 = vpop.f32.mrb[0].mxu0
        %v2149 = vadd.f32 %v1876, %v2148
        %v2150 = vpop.f32.mrb[0].mxu0
        %v2151 = vadd.f32 %v1878, %v2150
        %v2152 = vpop.f32.mrb[0].mxu0
        %v2153 = vadd.f32 %v1880, %v2152
        %v2154 = vpop.f32.mrb[0].mxu0
        %v2155 = vadd.f32 %v1882, %v2154
        %2156 = vmatprep.mubr.bf16.mxu0 %v1601
        %2157 = vmatmul.mubr.bf16.gmra.mrb[0].mxu0 %v1600
        %v2158 = vpop.f32.mrb[0].mxu0
        %v2159 = vadd.f32 %v1886, %v2158
        %v2160 = vpop.f32.mrb[0].mxu0
        %v2161 = vadd.f32 %v1888, %v2160
        %v2162 = vpop.f32.mrb[0].mxu0
        %v2163 = vadd.f32 %v1890, %v2162
        %v2164 = vpop.f32.mrb[0].mxu0
        %v2165 = vadd.f32 %v1892, %v2164
        %2166 = vmatprep.mubr.bf16.mxu0 %v1603
        %2167 = vmatmul.mubr.bf16.gmra.mrb[0].mxu0 %v1602
        %v2168 = vpop.f32.mrb[0].mxu0
        %v2169 = vadd.f32 %v1896, %v2168
        %v2170 = vpop.f32.mrb[0].mxu0
        %v2171 = vadd.f32 %v1898, %v2170
        %v2172 = vpop.f32.mrb[0].mxu0
        %v2173 = vadd.f32 %v1900, %v2172
        %v2174 = vpop.f32.mrb[0].mxu0
        %v2175 = vadd.f32 %v1902, %v2174
        %2176 = vmatprep.mubr.bf16.mxu0 %v1605
        %2177 = vmatmul.mubr.bf16.gmra.mrb[0].mxu0 %v1604
        %v2178 = vpop.f32.mrb[0].mxu0
        %v2179 = vadd.f32 %v1906, %v2178
        %v2180 = vpop.f32.mrb[0].mxu0
        %v2181 = vadd.f32 %v1908, %v2180
        %v2182 = vpop.f32.mrb[0].mxu0
        %v2183 = vadd.f32 %v1910, %v2182
        %v2184 = vpop.f32.mrb[0].mxu0
        %v2185 = vadd.f32 %v1912, %v2184
        %2186 = vmatprep.mubr.bf16.mxu0 %v1607
        %2187 = vmatmul.mubr.bf16.gmra.mrb[0].mxu0 %v1606
        %v2188 = vpop.f32.mrb[0].mxu0
        %v2189 = vadd.f32 %v1916, %v2188
        %v2190 = vpop.f32.mrb[0].mxu0
        %v2191 = vadd.f32 %v1918, %v2190
        %v2192 = vpop.f32.mrb[0].mxu0
        %v2193 = vadd.f32 %v1920, %v2192
        %v2194 = vpop.f32.mrb[0].mxu0
        %v2195 = vadd.f32 %v1922, %v2194
        %2196 = vmatprep.mubr.bf16.mxu0 %v1609
        %2197 = vmatmul.mubr.bf16.gmra.mrb[0].mxu0 %v1608
        %v2198 = vpop.f32.mrb[0].mxu0
        %v2199 = vadd.f32 %v1926, %v2198
        %v2200 = vpop.f32.mrb[0].mxu0
        %v2201 = vadd.f32 %v1928, %v2200
        %v2202 = vpop.f32.mrb[0].mxu0
        %v2203 = vadd.f32 %v1930, %v2202
        %v2204 = vpop.f32.mrb[0].mxu0
        %v2205 = vadd.f32 %v1932, %v2204
        %2206 = vmatprep.mubr.bf16.mxu0 %v1611
        %2207 = vmatmul.mubr.bf16.gmra.mrb[0].mxu0 %v1610
        %v2208 = vpop.f32.mrb[0].mxu0
        %v2209 = vadd.f32 %v1936, %v2208
        %v2210 = vpop.f32.mrb[0].mxu0
        %v2211 = vadd.f32 %v1938, %v2210
        %v2212 = vpop.f32.mrb[0].mxu0
        %v2213 = vadd.f32 %v1940, %v2212
        %v2214 = vpop.f32.mrb[0].mxu0
        %v2215 = vadd.f32 %v1942, %v2214
        %2216 = vmatprep.mubr.bf16.mxu0 %v1613
        %2217 = vmatmul.mubr.bf16.gmra.mrb[0].mxu0 %v1612
        %v2218 = vpop.f32.mrb[0].mxu0
        %v2219 = vadd.f32 %v1946, %v2218
        %v2220 = vpop.f32.mrb[0].mxu0
        %v2221 = vadd.f32 %v1948, %v2220
        %v2222 = vpop.f32.mrb[0].mxu0
        %v2223 = vadd.f32 %v1950, %v2222
        %v2224 = vpop.f32.mrb[0].mxu0
        %v2225 = vadd.f32 %v1952, %v2224
        %2226 = vdwg.mxu0
        %s2227 = scalar_lea.vmem %s5, 512
        %v2228 = vld [vmem:[%s2227] sm:$0xff]
        %v2229 = vld [vmem:[%s2227 + $0x8] sm:$0xff]
        %v2230 = vld [vmem:[%s2227 + $0x10] sm:$0xff]
        %v2231 = vld [vmem:[%s2227 + $0x18] sm:$0xff]
        %v2232 = vld [vmem:[%s2227 + $0x20] sm:$0xff]
        %v2233 = vld [vmem:[%s2227 + $0x28] sm:$0xff]
        %v2234 = vld [vmem:[%s2227 + $0x30] sm:$0xff]
        %v2235 = vld [vmem:[%s2227 + $0x38] sm:$0xff]
        %v2236 = vld [vmem:[%s2227 + $0x40] sm:$0xff]
        %v2237 = vld [vmem:[%s2227 + $0x48] sm:$0xff]
        %v2238 = vld [vmem:[%s2227 + $0x50] sm:$0xff]
        %v2239 = vld [vmem:[%s2227 + $0x58] sm:$0xff]
        %v2240 = vld [vmem:[%s2227 + $0x60] sm:$0xff]
        %v2241 = vld [vmem:[%s2227 + $0x68] sm:$0xff]
        %v2242 = vld [vmem:[%s2227 + $0x70] sm:$0xff]
        %v2243 = vld [vmem:[%s2227 + $0x78] sm:$0xff]
        %v2244 = vld [vmem:[%s2227 + $0x80] sm:$0xff]
        %v2245 = vld [vmem:[%s2227 + $0x88] sm:$0xff]
        %v2246 = vld [vmem:[%s2227 + $0x90] sm:$0xff]
        %v2247 = vld [vmem:[%s2227 + $0x98] sm:$0xff]
        %v2248 = vld [vmem:[%s2227 + $0xa0] sm:$0xff]
        %v2249 = vld [vmem:[%s2227 + $0xa8] sm:$0xff]
        %v2250 = vld [vmem:[%s2227 + $0xb0] sm:$0xff]
        %v2251 = vld [vmem:[%s2227 + $0xb8] sm:$0xff]
        %v2252 = vld [vmem:[%s2227 + $0xc0] sm:$0xff]
        %v2253 = vld [vmem:[%s2227 + $0xc8] sm:$0xff]
        %v2254 = vld [vmem:[%s2227 + $0xd0] sm:$0xff]
        %v2255 = vld [vmem:[%s2227 + $0xd8] sm:$0xff]
        %v2256 = vld [vmem:[%s2227 + $0xe0] sm:$0xff]
        %v2257 = vld [vmem:[%s2227 + $0xe8] sm:$0xff]
        %v2258 = vld [vmem:[%s2227 + $0xf0] sm:$0xff]
        %v2259 = vld [vmem:[%s2227 + $0xf8] sm:$0xff]
        %v2292 = vunpack.c.l.b16 %v2228
        %v2293 = vunpack.c.h.b16 %v2228
        %v2294 = vunpack.c.l.b16 %v2229
        %v2295 = vunpack.c.h.b16 %v2229
        %v2296 = vunpack.c.l.b16 %v2230
        %v2297 = vunpack.c.h.b16 %v2230
        %v2298 = vunpack.c.l.b16 %v2231
        %v2299 = vunpack.c.h.b16 %v2231
        %v2300 = vunpack.c.l.b16 %v2232
        %v2301 = vunpack.c.h.b16 %v2232
        %v2302 = vunpack.c.l.b16 %v2233
        %v2303 = vunpack.c.h.b16 %v2233
        %v2304 = vunpack.c.l.b16 %v2234
        %v2305 = vunpack.c.h.b16 %v2234
        %v2306 = vunpack.c.l.b16 %v2235
        %v2307 = vunpack.c.h.b16 %v2235
        %v2308 = vunpack.c.l.b16 %v2236
        %v2309 = vunpack.c.h.b16 %v2236
        %v2310 = vunpack.c.l.b16 %v2237
        %v2311 = vunpack.c.h.b16 %v2237
        %v2312 = vunpack.c.l.b16 %v2238
        %v2313 = vunpack.c.h.b16 %v2238
        %v2314 = vunpack.c.l.b16 %v2239
        %v2315 = vunpack.c.h.b16 %v2239
        %v2316 = vunpack.c.l.b16 %v2240
        %v2317 = vunpack.c.h.b16 %v2240
        %v2318 = vunpack.c.l.b16 %v2241
        %v2319 = vunpack.c.h.b16 %v2241
        %v2320 = vunpack.c.l.b16 %v2242
        %v2321 = vunpack.c.h.b16 %v2242
        %v2322 = vunpack.c.l.b16 %v2243
        %v2323 = vunpack.c.h.b16 %v2243
        %v2324 = vunpack.c.l.b16 %v2244
        %v2325 = vunpack.c.h.b16 %v2244
        %v2326 = vunpack.c.l.b16 %v2245
        %v2327 = vunpack.c.h.b16 %v2245
        %v2328 = vunpack.c.l.b16 %v2246
        %v2329 = vunpack.c.h.b16 %v2246
        %v2330 = vunpack.c.l.b16 %v2247
        %v2331 = vunpack.c.h.b16 %v2247
        %v2332 = vunpack.c.l.b16 %v2248
        %v2333 = vunpack.c.h.b16 %v2248
        %v2334 = vunpack.c.l.b16 %v2249
        %v2335 = vunpack.c.h.b16 %v2249
        %v2336 = vunpack.c.l.b16 %v2250
        %v2337 = vunpack.c.h.b16 %v2250
        %v2338 = vunpack.c.l.b16 %v2251
        %v2339 = vunpack.c.h.b16 %v2251
        %v2340 = vunpack.c.l.b16 %v2252
        %v2341 = vunpack.c.h.b16 %v2252
        %v2342 = vunpack.c.l.b16 %v2253
        %v2343 = vunpack.c.h.b16 %v2253
        %v2344 = vunpack.c.l.b16 %v2254
        %v2345 = vunpack.c.h.b16 %v2254
        %v2346 = vunpack.c.l.b16 %v2255
        %v2347 = vunpack.c.h.b16 %v2255
        %v2348 = vunpack.c.l.b16 %v2256
        %v2349 = vunpack.c.h.b16 %v2256
        %v2350 = vunpack.c.l.b16 %v2257
        %v2351 = vunpack.c.h.b16 %v2257
        %v2352 = vunpack.c.l.b16 %v2258
        %v2353 = vunpack.c.h.b16 %v2258
        %v2354 = vunpack.c.l.b16 %v2259
        %v2355 = vunpack.c.h.b16 %v2259
        %v2356 = vpack.c.b16 %v2294, %v2292
        %v2357 = vpack.c.b16 %v2295, %v2293
        %v2358 = vpack.c.b16 %v2298, %v2296
        %v2359 = vpack.c.b16 %v2299, %v2297
        %v2360 = vpack.c.b16 %v2302, %v2300
        %v2361 = vpack.c.b16 %v2303, %v2301
        %v2362 = vpack.c.b16 %v2306, %v2304
        %v2363 = vpack.c.b16 %v2307, %v2305
        %v2364 = vpack.c.b16 %v2310, %v2308
        %v2365 = vpack.c.b16 %v2311, %v2309
        %v2366 = vpack.c.b16 %v2314, %v2312
        %v2367 = vpack.c.b16 %v2315, %v2313
        %v2368 = vpack.c.b16 %v2318, %v2316
        %v2369 = vpack.c.b16 %v2319, %v2317
        %v2370 = vpack.c.b16 %v2322, %v2320
        %v2371 = vpack.c.b16 %v2323, %v2321
        %v2372 = vpack.c.b16 %v2326, %v2324
        %v2373 = vpack.c.b16 %v2327, %v2325
        %v2374 = vpack.c.b16 %v2330, %v2328
        %v2375 = vpack.c.b16 %v2331, %v2329
        %v2376 = vpack.c.b16 %v2334, %v2332
        %v2377 = vpack.c.b16 %v2335, %v2333
        %v2378 = vpack.c.b16 %v2338, %v2336
        %v2379 = vpack.c.b16 %v2339, %v2337
        %v2380 = vpack.c.b16 %v2342, %v2340
        %v2381 = vpack.c.b16 %v2343, %v2341
        %v2382 = vpack.c.b16 %v2346, %v2344
        %v2383 = vpack.c.b16 %v2347, %v2345
        %v2384 = vpack.c.b16 %v2350, %v2348
        %v2385 = vpack.c.b16 %v2351, %v2349
        %v2386 = vpack.c.b16 %v2354, %v2352
        %v2387 = vpack.c.b16 %v2355, %v2353
        %2420 = vmatprep.subr.bf16.mxu0 %v2357
        %2421 = vmatpush1.bf16.msra.mxu0 %v2356
        %2422 = vmatprep.subr.bf16.mxu0 %v2359
        %2423 = vmatpush1.bf16.msra.mxu0 %v2358
        %2424 = vmatprep.subr.bf16.mxu0 %v2361
        %2425 = vmatpush1.bf16.msra.mxu0 %v2360
        %2426 = vmatprep.subr.bf16.mxu0 %v2363
        %2427 = vmatpush1.bf16.msra.mxu0 %v2362
        %2428 = vmatprep.subr.bf16.mxu0 %v2365
        %2429 = vmatpush1.bf16.msra.mxu0 %v2364
        %2430 = vmatprep.subr.bf16.mxu0 %v2367
        %2431 = vmatpush1.bf16.msra.mxu0 %v2366
        %2432 = vmatprep.subr.bf16.mxu0 %v2369
        %2433 = vmatpush1.bf16.msra.mxu0 %v2368
        %2434 = vmatprep.subr.bf16.mxu0 %v2371
        %2435 = vmatpush1.bf16.msra.mxu0 %v2370
        %2436 = vmatprep.subr.bf16.mxu0 %v2373
        %2437 = vmatpush1.bf16.msra.mxu0 %v2372
        %2438 = vmatprep.subr.bf16.mxu0 %v2375
        %2439 = vmatpush1.bf16.msra.mxu0 %v2374
        %2440 = vmatprep.subr.bf16.mxu0 %v2377
        %2441 = vmatpush1.bf16.msra.mxu0 %v2376
        %2442 = vmatprep.subr.bf16.mxu0 %v2379
        %2443 = vmatpush1.bf16.msra.mxu0 %v2378
        %2444 = vmatprep.subr.bf16.mxu0 %v2381
        %2445 = vmatpush1.bf16.msra.mxu0 %v2380
        %2446 = vmatprep.subr.bf16.mxu0 %v2383
        %2447 = vmatpush1.bf16.msra.mxu0 %v2382
        %2448 = vmatprep.subr.bf16.mxu0 %v2385
        %2449 = vmatpush1.bf16.msra.mxu0 %v2384
        %2450 = vmatprep.subr.bf16.mxu0 %v2387
        %2451 = vmatpush1.bf16.msra.mxu0 %v2386
        %2452 = vmatprep.mubr.bf16.mxu0 %v1603
        %2453 = vmatmul.mubr.bf16.gmra.mrb[0].mxu0 %v1602
        %v2454 = vpop.f32.mrb[0].mxu0
        %v2455 = vadd.f32 0.0, %v2454
        %v2456 = vpop.f32.mrb[0].mxu0
        %v2457 = vadd.f32 0.0, %v2456
        %v2458 = vpop.f32.mrb[0].mxu0
        %v2459 = vadd.f32 0.0, %v2458
        %v2460 = vpop.f32.mrb[0].mxu0
        %v2461 = vadd.f32 0.0, %v2460
        %2462 = vmatprep.mubr.bf16.mxu0 %v1605
        %2463 = vmatmul.mubr.bf16.gmra.mrb[0].mxu0 %v1604
        %v2464 = vpop.f32.mrb[0].mxu0
        %v2465 = vadd.f32 0.0, %v2464
        %v2466 = vpop.f32.mrb[0].mxu0
        %v2467 = vadd.f32 0.0, %v2466
        %v2468 = vpop.f32.mrb[0].mxu0
        %v2469 = vadd.f32 0.0, %v2468
        %v2470 = vpop.f32.mrb[0].mxu0
        %v2471 = vadd.f32 0.0, %v2470
        %2472 = vmatprep.mubr.bf16.mxu0 %v1607
        %2473 = vmatmul.mubr.bf16.gmra.mrb[0].mxu0 %v1606
        %v2474 = vpop.f32.mrb[0].mxu0
        %v2475 = vadd.f32 0.0, %v2474
        %v2476 = vpop.f32.mrb[0].mxu0
        %v2477 = vadd.f32 0.0, %v2476
        %v2478 = vpop.f32.mrb[0].mxu0
        %v2479 = vadd.f32 0.0, %v2478
        %v2480 = vpop.f32.mrb[0].mxu0
        %v2481 = vadd.f32 0.0, %v2480
        %2482 = vmatprep.mubr.bf16.mxu0 %v1609
        %2483 = vmatmul.mubr.bf16.gmra.mrb[0].mxu0 %v1608
        %v2484 = vpop.f32.mrb[0].mxu0
        %v2485 = vadd.f32 0.0, %v2484
        %v2486 = vpop.f32.mrb[0].mxu0
        %v2487 = vadd.f32 0.0, %v2486
        %v2488 = vpop.f32.mrb[0].mxu0
        %v2489 = vadd.f32 0.0, %v2488
        %v2490 = vpop.f32.mrb[0].mxu0
        %v2491 = vadd.f32 0.0, %v2490
        %2492 = vmatprep.mubr.bf16.mxu0 %v1611
        %2493 = vmatmul.mubr.bf16.gmra.mrb[0].mxu0 %v1610
        %v2494 = vpop.f32.mrb[0].mxu0
        %v2495 = vadd.f32 0.0, %v2494
        %v2496 = vpop.f32.mrb[0].mxu0
        %v2497 = vadd.f32 0.0, %v2496
        %v2498 = vpop.f32.mrb[0].mxu0
        %v2499 = vadd.f32 0.0, %v2498
        %v2500 = vpop.f32.mrb[0].mxu0
        %v2501 = vadd.f32 0.0, %v2500
        %2502 = vmatprep.mubr.bf16.mxu0 %v1613
        %2503 = vmatmul.mubr.bf16.gmra.mrb[0].mxu0 %v1612
        %v2504 = vpop.f32.mrb[0].mxu0
        %v2505 = vadd.f32 0.0, %v2504
        %v2506 = vpop.f32.mrb[0].mxu0
        %v2507 = vadd.f32 0.0, %v2506
        %v2508 = vpop.f32.mrb[0].mxu0
        %v2509 = vadd.f32 0.0, %v2508
        %v2510 = vpop.f32.mrb[0].mxu0
        %v2511 = vadd.f32 0.0, %v2510
        %2512 = vmatprep.mubr.bf16.mxu0 %v1647
        %2513 = vmatmul.mubr.bf16.gmra.mrb[0].mxu0 %v1646
        %v2514 = vpop.f32.mrb[0].mxu0
        %v2515 = vadd.f32 0.0, %v2514
        %v2516 = vpop.f32.mrb[0].mxu0
        %v2517 = vadd.f32 0.0, %v2516
        %v2518 = vpop.f32.mrb[0].mxu0
        %v2519 = vadd.f32 0.0, %v2518
        %v2520 = vpop.f32.mrb[0].mxu0
        %v2521 = vadd.f32 0.0, %v2520
        %2522 = vmatprep.mubr.bf16.mxu0 %v422
        %2523 = vmatmul.mubr.bf16.gmra.mrb[0].mxu0 %v422
        %v2524 = vpop.f32.mrb[0].mxu0
        %v2525 = vadd.f32 0.0, %v2524
        %v2526 = vpop.f32.mrb[0].mxu0
        %v2527 = vadd.f32 0.0, %v2526
        %v2528 = vpop.f32.mrb[0].mxu0
        %v2529 = vadd.f32 0.0, %v2528
        %v2530 = vpop.f32.mrb[0].mxu0
        %v2531 = vadd.f32 0.0, %v2530
        %2532 = vdwg.mxu0
        %v2533 = vadd.f32 %v2149, %v2455
        %v2534 = vadd.f32 %v2151, %v2457
        %v2535 = vadd.f32 %v2153, %v2459
        %v2536 = vadd.f32 %v2155, %v2461
        %v2537 = vadd.f32 %v2159, %v2465
        %v2538 = vadd.f32 %v2161, %v2467
        %v2539 = vadd.f32 %v2163, %v2469
        %v2540 = vadd.f32 %v2165, %v2471
        %v2541 = vadd.f32 %v2169, %v2475
        %v2542 = vadd.f32 %v2171, %v2477
        %v2543 = vadd.f32 %v2173, %v2479
        %v2544 = vadd.f32 %v2175, %v2481
        %v2545 = vadd.f32 %v2179, %v2485
        %v2546 = vadd.f32 %v2181, %v2487
        %v2547 = vadd.f32 %v2183, %v2489
        %v2548 = vadd.f32 %v2185, %v2491
        %v2549 = vadd.f32 %v2189, %v2495
        %v2550 = vadd.f32 %v2191, %v2497
        %v2551 = vadd.f32 %v2193, %v2499
        %v2552 = vadd.f32 %v2195, %v2501
        %v2553 = vadd.f32 %v2199, %v2505
        %v2554 = vadd.f32 %v2201, %v2507
        %v2555 = vadd.f32 %v2203, %v2509
        %v2556 = vadd.f32 %v2205, %v2511
        %v2557 = vadd.f32 %v2209, %v2515
        %v2558 = vadd.f32 %v2211, %v2517
        %v2559 = vadd.f32 %v2213, %v2519
        %v2560 = vadd.f32 %v2215, %v2521
        %v2561 = vadd.f32 %v2219, %v2525
        %v2562 = vadd.f32 %v2221, %v2527
        %v2563 = vadd.f32 %v2223, %v2529
        %v2564 = vadd.f32 %v2225, %v2531
        %v2565 = vld [vmem:[%s6] sm:$0x3]
        %v2567 = vlaneseq
        %v2568 = vshrl.u32 %v2567, 7
        %v2569 = vsub.s32 0, %v2568
        %v2570 = vrot.slane %v2565, %v2569
        %v2571 = vlaneseq
        %v2572 = vshrl.u32 %v2571, 7
        %v2573 = vsub.s32 1, %v2572
        %v2574 = vrot.slane %v2565, %v2573
        %v2577 = vadd.f32 %v2533, %v2570
        %v2578 = vadd.f32 %v2534, %v2574
        %v2579 = vadd.f32 %v2535, %v2570
        %v2580 = vadd.f32 %v2536, %v2574
        %v2581 = vadd.f32 %v2537, %v2570
        %v2582 = vadd.f32 %v2538, %v2574
        %v2583 = vadd.f32 %v2539, %v2570
        %v2584 = vadd.f32 %v2540, %v2574
        %v2585 = vadd.f32 %v2541, %v2570
        %v2586 = vadd.f32 %v2542, %v2574
        %v2587 = vadd.f32 %v2543, %v2570
        %v2588 = vadd.f32 %v2544, %v2574
        %v2589 = vadd.f32 %v2545, %v2570
        %v2590 = vadd.f32 %v2546, %v2574
        %v2591 = vadd.f32 %v2547, %v2570
        %v2592 = vadd.f32 %v2548, %v2574
        %v2593 = vadd.f32 %v2549, %v2570
        %v2594 = vadd.f32 %v2550, %v2574
        %v2595 = vadd.f32 %v2551, %v2570
        %v2596 = vadd.f32 %v2552, %v2574
        %v2597 = vadd.f32 %v2553, %v2570
        %v2598 = vadd.f32 %v2554, %v2574
        %v2599 = vadd.f32 %v2555, %v2570
        %v2600 = vadd.f32 %v2556, %v2574
        %v2601 = vadd.f32 %v2557, %v2570
        %v2602 = vadd.f32 %v2558, %v2574
        %v2603 = vadd.f32 %v2559, %v2570
        %v2604 = vadd.f32 %v2560, %v2574
        %v2605 = vadd.f32 %v2561, %v2570
        %v2606 = vadd.f32 %v2562, %v2574
        %v2607 = vadd.f32 %v2563, %v2570
        %v2608 = vadd.f32 %v2564, %v2574
        %v2609 = vmax.f32 %v2577, 0.0
        %v2610 = vmax.f32 %v2578, 0.0
        %v2611 = vmax.f32 %v2579, 0.0
        %v2612 = vmax.f32 %v2580, 0.0
        %v2613 = vmax.f32 %v2581, 0.0
        %v2614 = vmax.f32 %v2582, 0.0
        %v2615 = vmax.f32 %v2583, 0.0
        %v2616 = vmax.f32 %v2584, 0.0
        %v2617 = vmax.f32 %v2585, 0.0
        %v2618 = vmax.f32 %v2586, 0.0
        %v2619 = vmax.f32 %v2587, 0.0
        %v2620 = vmax.f32 %v2588, 0.0
        %v2621 = vmax.f32 %v2589, 0.0
        %v2622 = vmax.f32 %v2590, 0.0
        %v2623 = vmax.f32 %v2591, 0.0
        %v2624 = vmax.f32 %v2592, 0.0
        %v2625 = vmax.f32 %v2593, 0.0
        %v2626 = vmax.f32 %v2594, 0.0
        %v2627 = vmax.f32 %v2595, 0.0
        %v2628 = vmax.f32 %v2596, 0.0
        %v2629 = vmax.f32 %v2597, 0.0
        %v2630 = vmax.f32 %v2598, 0.0
        %v2631 = vmax.f32 %v2599, 0.0
        %v2632 = vmax.f32 %v2600, 0.0
        %v2633 = vmax.f32 %v2601, 0.0
        %v2634 = vmax.f32 %v2602, 0.0
        %v2635 = vmax.f32 %v2603, 0.0
        %v2636 = vmax.f32 %v2604, 0.0
        %v2637 = vmax.f32 %v2605, 0.0
        %v2638 = vmax.f32 %v2606, 0.0
        %v2639 = vmax.f32 %v2607, 0.0
        %v2640 = vmax.f32 %v2608, 0.0
        %v2641 = vpack.c.bf16 %v2611, %v2609
        %v2642 = vpack.c.bf16 %v2612, %v2610
        %v2643 = vld [vmem:[%s7] sm:$0xf]
        %v2644 = vld [vmem:[%s7 + $0x4] sm:$0xf]
        %v2645 = vld [vmem:[%s7 + $0x8] sm:$0xf]
        %v2646 = vld [vmem:[%s7 + $0xc] sm:$0xf]
        %v2647 = vld [vmem:[%s7 + $0x10] sm:$0xf]
        %v2648 = vld [vmem:[%s7 + $0x14] sm:$0xf]
        %v2649 = vld [vmem:[%s7 + $0x18] sm:$0xf]
        %v2650 = vld [vmem:[%s7 + $0x1c] sm:$0xf]
        %v2651 = vld [vmem:[%s7 + $0x20] sm:$0xf]
        %v2652 = vld [vmem:[%s7 + $0x24] sm:$0xf]
        %v2653 = vld [vmem:[%s7 + $0x28] sm:$0xf]
        %v2654 = vld [vmem:[%s7 + $0x2c] sm:$0xf]
        %v2655 = vld [vmem:[%s7 + $0x30] sm:$0xf]
        %v2656 = vld [vmem:[%s7 + $0x34] sm:$0xf]
        %v2657 = vld [vmem:[%s7 + $0x38] sm:$0xf]
        %v2658 = vld [vmem:[%s7 + $0x3c] sm:$0xf]
        %v2659 = vld [vmem:[%s7 + $0x40] sm:$0xf]
        %v2660 = vld [vmem:[%s7 + $0x44] sm:$0xf]
        %v2661 = vld [vmem:[%s7 + $0x48] sm:$0xf]
        %v2662 = vld [vmem:[%s7 + $0x4c] sm:$0xf]
        %v2663 = vld [vmem:[%s7 + $0x50] sm:$0xf]
        %v2664 = vld [vmem:[%s7 + $0x54] sm:$0xf]
        %v2665 = vld [vmem:[%s7 + $0x58] sm:$0xf]
        %v2666 = vld [vmem:[%s7 + $0x5c] sm:$0xf]
        %v2667 = vld [vmem:[%s7 + $0x60] sm:$0xf]
        %v2668 = vld [vmem:[%s7 + $0x64] sm:$0xf]
        %v2669 = vld [vmem:[%s7 + $0x68] sm:$0xf]
        %v2670 = vld [vmem:[%s7 + $0x6c] sm:$0xf]
        %v2671 = vld [vmem:[%s7 + $0x70] sm:$0xf]
        %v2672 = vld [vmem:[%s7 + $0x74] sm:$0xf]
        %v2673 = vld [vmem:[%s7 + $0x78] sm:$0xf]
        %v2674 = vld [vmem:[%s7 + $0x7c] sm:$0xf]
        %v2675 = vpack.c.bf16 %v2615, %v2613
        %v2676 = vpack.c.bf16 %v2616, %v2614
        %s2677 = scalar_lea.vmem %s7, 128
        %v2678 = vld [vmem:[%s2677] sm:$0xf]
        %v2679 = vld [vmem:[%s2677 + $0x4] sm:$0xf]
        %v2680 = vld [vmem:[%s2677 + $0x8] sm:$0xf]
        %v2681 = vld [vmem:[%s2677 + $0xc] sm:$0xf]
        %v2682 = vld [vmem:[%s2677 + $0x10] sm:$0xf]
        %v2683 = vld [vmem:[%s2677 + $0x14] sm:$0xf]
        %v2684 = vld [vmem:[%s2677 + $0x18] sm:$0xf]
        %v2685 = vld [vmem:[%s2677 + $0x1c] sm:$0xf]
        %v2686 = vld [vmem:[%s2677 + $0x20] sm:$0xf]
        %v2687 = vld [vmem:[%s2677 + $0x24] sm:$0xf]
        %v2688 = vld [vmem:[%s2677 + $0x28] sm:$0xf]
        %v2689 = vld [vmem:[%s2677 + $0x2c] sm:$0xf]
        %v2690 = vld [vmem:[%s2677 + $0x30] sm:$0xf]
        %v2691 = vld [vmem:[%s2677 + $0x34] sm:$0xf]
        %v2692 = vld [vmem:[%s2677 + $0x38] sm:$0xf]
        %v2693 = vld [vmem:[%s2677 + $0x3c] sm:$0xf]
        %v2694 = vld [vmem:[%s2677 + $0x40] sm:$0xf]
        %v2695 = vld [vmem:[%s2677 + $0x44] sm:$0xf]
        %v2696 = vld [vmem:[%s2677 + $0x48] sm:$0xf]
        %v2697 = vld [vmem:[%s2677 + $0x4c] sm:$0xf]
        %v2698 = vld [vmem:[%s2677 + $0x50] sm:$0xf]
        %v2699 = vld [vmem:[%s2677 + $0x54] sm:$0xf]
        %v2700 = vld [vmem:[%s2677 + $0x58] sm:$0xf]
        %v2701 = vld [vmem:[%s2677 + $0x5c] sm:$0xf]
        %v2702 = vld [vmem:[%s2677 + $0x60] sm:$0xf]
        %v2703 = vld [vmem:[%s2677 + $0x64] sm:$0xf]
        %v2704 = vld [vmem:[%s2677 + $0x68] sm:$0xf]
        %v2705 = vld [vmem:[%s2677 + $0x6c] sm:$0xf]
        %v2706 = vld [vmem:[%s2677 + $0x70] sm:$0xf]
        %v2707 = vld [vmem:[%s2677 + $0x74] sm:$0xf]
        %v2708 = vld [vmem:[%s2677 + $0x78] sm:$0xf]
        %v2709 = vld [vmem:[%s2677 + $0x7c] sm:$0xf]
        %v2742 = vunpack.c.l.b16 %v2678
        %v2743 = vunpack.c.l.b16 %v2679
        %v2744 = vunpack.c.l.b16 %v2680
        %v2745 = vunpack.c.l.b16 %v2681
        %v2746 = vunpack.c.l.b16 %v2682
        %v2747 = vunpack.c.l.b16 %v2683
        %v2748 = vunpack.c.l.b16 %v2684
        %v2749 = vunpack.c.l.b16 %v2685
        %v2750 = vunpack.c.l.b16 %v2686
        %v2751 = vunpack.c.l.b16 %v2687
        %v2752 = vunpack.c.l.b16 %v2688
        %v2753 = vunpack.c.l.b16 %v2689
        %v2754 = vunpack.c.l.b16 %v2690
        %v2755 = vunpack.c.l.b16 %v2691
        %v2756 = vunpack.c.l.b16 %v2692
        %v2757 = vunpack.c.l.b16 %v2693
        %v2758 = vunpack.c.l.b16 %v2694
        %v2759 = vunpack.c.l.b16 %v2695
        %v2760 = vunpack.c.l.b16 %v2696
        %v2761 = vunpack.c.l.b16 %v2697
        %v2762 = vunpack.c.l.b16 %v2698
        %v2763 = vunpack.c.l.b16 %v2699
        %v2764 = vunpack.c.l.b16 %v2700
        %v2765 = vunpack.c.l.b16 %v2701
        %v2766 = vunpack.c.l.b16 %v2702
        %v2767 = vunpack.c.l.b16 %v2703
        %v2768 = vunpack.c.l.b16 %v2704
        %v2769 = vunpack.c.l.b16 %v2705
        %v2770 = vunpack.c.l.b16 %v2706
        %v2771 = vunpack.c.l.b16 %v2707
        %v2772 = vunpack.c.l.b16 %v2708
        %v2773 = vunpack.c.l.b16 %v2709
        %v2774 = vpack.c.b16 %v2743, %v2742
        %v2775 = vpack.c.b16 %v2745, %v2744
        %v2776 = vpack.c.b16 %v2747, %v2746
        %v2777 = vpack.c.b16 %v2749, %v2748
        %v2778 = vpack.c.b16 %v2751, %v2750
        %v2779 = vpack.c.b16 %v2753, %v2752
        %v2780 = vpack.c.b16 %v2755, %v2754
        %v2781 = vpack.c.b16 %v2757, %v2756
        %v2782 = vpack.c.b16 %v2759, %v2758
        %v2783 = vpack.c.b16 %v2761, %v2760
        %v2784 = vpack.c.b16 %v2763, %v2762
        %v2785 = vpack.c.b16 %v2765, %v2764
        %v2786 = vpack.c.b16 %v2767, %v2766
        %v2787 = vpack.c.b16 %v2769, %v2768
        %v2788 = vpack.c.b16 %v2771, %v2770
        %v2789 = vpack.c.b16 %v2773, %v2772
        %2806 = vmatprep.subr.bf16.mxu0 0
        %2807 = vmatpush1.bf16.msra.mxu0 %v2774
        %2808 = vmatprep.subr.bf16.mxu0 0
        %2809 = vmatpush1.bf16.msra.mxu0 %v2775
        %2810 = vmatprep.subr.bf16.mxu0 0
        %2811 = vmatpush1.bf16.msra.mxu0 %v2776
        %2812 = vmatprep.subr.bf16.mxu0 0
        %2813 = vmatpush1.bf16.msra.mxu0 %v2777
        %2814 = vmatprep.subr.bf16.mxu0 0
        %2815 = vmatpush1.bf16.msra.mxu0 %v2778
        %2816 = vmatprep.subr.bf16.mxu0 0
        %2817 = vmatpush1.bf16.msra.mxu0 %v2779
        %2818 = vmatprep.subr.bf16.mxu0 0
        %2819 = vmatpush1.bf16.msra.mxu0 %v2780
        %2820 = vmatprep.subr.bf16.mxu0 0
        %2821 = vmatpush1.bf16.msra.mxu0 %v2781
        %2822 = vmatprep.subr.bf16.mxu0 0
        %2823 = vmatpush1.bf16.msra.mxu0 %v2782
        %2824 = vmatprep.subr.bf16.mxu0 0
        %2825 = vmatpush1.bf16.msra.mxu0 %v2783
        %2826 = vmatprep.subr.bf16.mxu0 0
        %2827 = vmatpush1.bf16.msra.mxu0 %v2784
        %2828 = vmatprep.subr.bf16.mxu0 0
        %2829 = vmatpush1.bf16.msra.mxu0 %v2785
        %2830 = vmatprep.subr.bf16.mxu0 0
        %2831 = vmatpush1.bf16.msra.mxu0 %v2786
        %2832 = vmatprep.subr.bf16.mxu0 0
        %2833 = vmatpush1.bf16.msra.mxu0 %v2787
        %2834 = vmatprep.subr.bf16.mxu0 0
        %2835 = vmatpush1.bf16.msra.mxu0 %v2788
        %2836 = vmatprep.subr.bf16.mxu0 0
        %2837 = vmatpush1.bf16.msra.mxu0 %v2789
        %2838 = vmatprep.mubr.bf16.mxu0 %v2676
        %2839 = vmatmul.mubr.bf16.gmra.mrb[0].mxu0 %v2675
        %v2840 = vpop.f32.mrb[0].mxu0
        %v2841 = vadd.f32 0.0, %v2840
        %v2842 = vpop.f32.mrb[0].mxu0
        %v2843 = vpop.f32.mrb[0].mxu0
        %v2844 = vadd.f32 0.0, %v2843
        %v2845 = vpop.f32.mrb[0].mxu0
        %2846 = vdwg.mxu0
        %v2879 = vunpack.c.l.b16 %v2643
        %v2880 = vunpack.c.l.b16 %v2644
        %v2881 = vunpack.c.l.b16 %v2645
        %v2882 = vunpack.c.l.b16 %v2646
        %v2883 = vunpack.c.l.b16 %v2647
        %v2884 = vunpack.c.l.b16 %v2648
        %v2885 = vunpack.c.l.b16 %v2649
        %v2886 = vunpack.c.l.b16 %v2650
        %v2887 = vunpack.c.l.b16 %v2651
        %v2888 = vunpack.c.l.b16 %v2652
        %v2889 = vunpack.c.l.b16 %v2653
        %v2890 = vunpack.c.l.b16 %v2654
        %v2891 = vunpack.c.l.b16 %v2655
        %v2892 = vunpack.c.l.b16 %v2656
        %v2893 = vunpack.c.l.b16 %v2657
        %v2894 = vunpack.c.l.b16 %v2658
        %v2895 = vunpack.c.l.b16 %v2659
        %v2896 = vunpack.c.l.b16 %v2660
        %v2897 = vunpack.c.l.b16 %v2661
        %v2898 = vunpack.c.l.b16 %v2662
        %v2899 = vunpack.c.l.b16 %v2663
        %v2900 = vunpack.c.l.b16 %v2664
        %v2901 = vunpack.c.l.b16 %v2665
        %v2902 = vunpack.c.l.b16 %v2666
        %v2903 = vunpack.c.l.b16 %v2667
        %v2904 = vunpack.c.l.b16 %v2668
        %v2905 = vunpack.c.l.b16 %v2669
        %v2906 = vunpack.c.l.b16 %v2670
        %v2907 = vunpack.c.l.b16 %v2671
        %v2908 = vunpack.c.l.b16 %v2672
        %v2909 = vunpack.c.l.b16 %v2673
        %v2910 = vunpack.c.l.b16 %v2674
        %v2911 = vpack.c.b16 %v2880, %v2879
        %v2912 = vpack.c.b16 %v2882, %v2881
        %v2913 = vpack.c.b16 %v2884, %v2883
        %v2914 = vpack.c.b16 %v2886, %v2885
        %v2915 = vpack.c.b16 %v2888, %v2887
        %v2916 = vpack.c.b16 %v2890, %v2889
        %v2917 = vpack.c.b16 %v2892, %v2891
        %v2918 = vpack.c.b16 %v2894, %v2893
        %v2919 = vpack.c.b16 %v2896, %v2895
        %v2920 = vpack.c.b16 %v2898, %v2897
        %v2921 = vpack.c.b16 %v2900, %v2899
        %v2922 = vpack.c.b16 %v2902, %v2901
        %v2923 = vpack.c.b16 %v2904, %v2903
        %v2924 = vpack.c.b16 %v2906, %v2905
        %v2925 = vpack.c.b16 %v2908, %v2907
        %v2926 = vpack.c.b16 %v2910, %v2909
        %2943 = vmatprep.subr.bf16.mxu0 0
        %2944 = vmatpush1.bf16.msra.mxu0 %v2911
        %2945 = vmatprep.subr.bf16.mxu0 0
        %2946 = vmatpush1.bf16.msra.mxu0 %v2912
        %2947 = vmatprep.subr.bf16.mxu0 0
        %2948 = vmatpush1.bf16.msra.mxu0 %v2913
        %2949 = vmatprep.subr.bf16.mxu0 0
        %2950 = vmatpush1.bf16.msra.mxu0 %v2914
        %2951 = vmatprep.subr.bf16.mxu0 0
        %2952 = vmatpush1.bf16.msra.mxu0 %v2915
        %2953 = vmatprep.subr.bf16.mxu0 0
        %2954 = vmatpush1.bf16.msra.mxu0 %v2916
        %2955 = vmatprep.subr.bf16.mxu0 0
        %2956 = vmatpush1.bf16.msra.mxu0 %v2917
        %2957 = vmatprep.subr.bf16.mxu0 0
        %2958 = vmatpush1.bf16.msra.mxu0 %v2918
        %2959 = vmatprep.subr.bf16.mxu0 0
        %2960 = vmatpush1.bf16.msra.mxu0 %v2919
        %2961 = vmatprep.subr.bf16.mxu0 0
        %2962 = vmatpush1.bf16.msra.mxu0 %v2920
        %2963 = vmatprep.subr.bf16.mxu0 0
        %2964 = vmatpush1.bf16.msra.mxu0 %v2921
        %2965 = vmatprep.subr.bf16.mxu0 0
        %2966 = vmatpush1.bf16.msra.mxu0 %v2922
        %2967 = vmatprep.subr.bf16.mxu0 0
        %2968 = vmatpush1.bf16.msra.mxu0 %v2923
        %2969 = vmatprep.subr.bf16.mxu0 0
        %2970 = vmatpush1.bf16.msra.mxu0 %v2924
        %2971 = vmatprep.subr.bf16.mxu0 0
        %2972 = vmatpush1.bf16.msra.mxu0 %v2925
        %2973 = vmatprep.subr.bf16.mxu0 0
        %2974 = vmatpush1.bf16.msra.mxu0 %v2926
        %2975 = vmatprep.mubr.bf16.mxu0 %v2642
        %2976 = vmatmul.mubr.bf16.gmra.mrb[0].mxu0 %v2641
        %v2977 = vpop.f32.mrb[0].mxu0
        %v2978 = vadd.f32 %v2841, %v2977
        %v2979 = vpop.f32.mrb[0].mxu0
        %v2980 = vpop.f32.mrb[0].mxu0
        %v2981 = vadd.f32 %v2844, %v2980
        %v2982 = vpop.f32.mrb[0].mxu0
        %2983 = vdwg.mxu0
        %v2984 = vpack.c.bf16 %v2619, %v2617
        %v2985 = vpack.c.bf16 %v2620, %v2618
        %s2986 = scalar_lea.vmem %s7, 256
        %v2987 = vld [vmem:[%s2986] sm:$0xf]
        %v2988 = vld [vmem:[%s2986 + $0x4] sm:$0xf]
        %v2989 = vld [vmem:[%s2986 + $0x8] sm:$0xf]
        %v2990 = vld [vmem:[%s2986 + $0xc] sm:$0xf]
        %v2991 = vld [vmem:[%s2986 + $0x10] sm:$0xf]
        %v2992 = vld [vmem:[%s2986 + $0x14] sm:$0xf]
        %v2993 = vld [vmem:[%s2986 + $0x18] sm:$0xf]
        %v2994 = vld [vmem:[%s2986 + $0x1c] sm:$0xf]
        %v2995 = vld [vmem:[%s2986 + $0x20] sm:$0xf]
        %v2996 = vld [vmem:[%s2986 + $0x24] sm:$0xf]
        %v2997 = vld [vmem:[%s2986 + $0x28] sm:$0xf]
        %v2998 = vld [vmem:[%s2986 + $0x2c] sm:$0xf]
        %v2999 = vld [vmem:[%s2986 + $0x30] sm:$0xf]
        %v3000 = vld [vmem:[%s2986 + $0x34] sm:$0xf]
        %v3001 = vld [vmem:[%s2986 + $0x38] sm:$0xf]
        %v3002 = vld [vmem:[%s2986 + $0x3c] sm:$0xf]
        %v3003 = vld [vmem:[%s2986 + $0x40] sm:$0xf]
        %v3004 = vld [vmem:[%s2986 + $0x44] sm:$0xf]
        %v3005 = vld [vmem:[%s2986 + $0x48] sm:$0xf]
        %v3006 = vld [vmem:[%s2986 + $0x4c] sm:$0xf]
        %v3007 = vld [vmem:[%s2986 + $0x50] sm:$0xf]
        %v3008 = vld [vmem:[%s2986 + $0x54] sm:$0xf]
        %v3009 = vld [vmem:[%s2986 + $0x58] sm:$0xf]
        %v3010 = vld [vmem:[%s2986 + $0x5c] sm:$0xf]
        %v3011 = vld [vmem:[%s2986 + $0x60] sm:$0xf]
        %v3012 = vld [vmem:[%s2986 + $0x64] sm:$0xf]
        %v3013 = vld [vmem:[%s2986 + $0x68] sm:$0xf]
        %v3014 = vld [vmem:[%s2986 + $0x6c] sm:$0xf]
        %v3015 = vld [vmem:[%s2986 + $0x70] sm:$0xf]
        %v3016 = vld [vmem:[%s2986 + $0x74] sm:$0xf]
        %v3017 = vld [vmem:[%s2986 + $0x78] sm:$0xf]
        %v3018 = vld [vmem:[%s2986 + $0x7c] sm:$0xf]
        %v3051 = vunpack.c.l.b16 %v2987
        %v3052 = vunpack.c.l.b16 %v2988
        %v3053 = vunpack.c.l.b16 %v2989
        %v3054 = vunpack.c.l.b16 %v2990
        %v3055 = vunpack.c.l.b16 %v2991
        %v3056 = vunpack.c.l.b16 %v2992
        %v3057 = vunpack.c.l.b16 %v2993
        %v3058 = vunpack.c.l.b16 %v2994
        %v3059 = vunpack.c.l.b16 %v2995
        %v3060 = vunpack.c.l.b16 %v2996
        %v3061 = vunpack.c.l.b16 %v2997
        %v3062 = vunpack.c.l.b16 %v2998
        %v3063 = vunpack.c.l.b16 %v2999
        %v3064 = vunpack.c.l.b16 %v3000
        %v3065 = vunpack.c.l.b16 %v3001
        %v3066 = vunpack.c.l.b16 %v3002
        %v3067 = vunpack.c.l.b16 %v3003
        %v3068 = vunpack.c.l.b16 %v3004
        %v3069 = vunpack.c.l.b16 %v3005
        %v3070 = vunpack.c.l.b16 %v3006
        %v3071 = vunpack.c.l.b16 %v3007
        %v3072 = vunpack.c.l.b16 %v3008
        %v3073 = vunpack.c.l.b16 %v3009
        %v3074 = vunpack.c.l.b16 %v3010
        %v3075 = vunpack.c.l.b16 %v3011
        %v3076 = vunpack.c.l.b16 %v3012
        %v3077 = vunpack.c.l.b16 %v3013
        %v3078 = vunpack.c.l.b16 %v3014
        %v3079 = vunpack.c.l.b16 %v3015
        %v3080 = vunpack.c.l.b16 %v3016
        %v3081 = vunpack.c.l.b16 %v3017
        %v3082 = vunpack.c.l.b16 %v3018
        %v3083 = vpack.c.b16 %v3052, %v3051
        %v3084 = vpack.c.b16 %v3054, %v3053
        %v3085 = vpack.c.b16 %v3056, %v3055
        %v3086 = vpack.c.b16 %v3058, %v3057
        %v3087 = vpack.c.b16 %v3060, %v3059
        %v3088 = vpack.c.b16 %v3062, %v3061
        %v3089 = vpack.c.b16 %v3064, %v3063
        %v3090 = vpack.c.b16 %v3066, %v3065
        %v3091 = vpack.c.b16 %v3068, %v3067
        %v3092 = vpack.c.b16 %v3070, %v3069
        %v3093 = vpack.c.b16 %v3072, %v3071
        %v3094 = vpack.c.b16 %v3074, %v3073
        %v3095 = vpack.c.b16 %v3076, %v3075
        %v3096 = vpack.c.b16 %v3078, %v3077
        %v3097 = vpack.c.b16 %v3080, %v3079
        %v3098 = vpack.c.b16 %v3082, %v3081
        %3115 = vmatprep.subr.bf16.mxu0 0
        %3116 = vmatpush1.bf16.msra.mxu0 %v3083
        %3117 = vmatprep.subr.bf16.mxu0 0
        %3118 = vmatpush1.bf16.msra.mxu0 %v3084
        %3119 = vmatprep.subr.bf16.mxu0 0
        %3120 = vmatpush1.bf16.msra.mxu0 %v3085
        %3121 = vmatprep.subr.bf16.mxu0 0
        %3122 = vmatpush1.bf16.msra.mxu0 %v3086
        %3123 = vmatprep.subr.bf16.mxu0 0
        %3124 = vmatpush1.bf16.msra.mxu0 %v3087
        %3125 = vmatprep.subr.bf16.mxu0 0
        %3126 = vmatpush1.bf16.msra.mxu0 %v3088
        %3127 = vmatprep.subr.bf16.mxu0 0
        %3128 = vmatpush1.bf16.msra.mxu0 %v3089
        %3129 = vmatprep.subr.bf16.mxu0 0
        %3130 = vmatpush1.bf16.msra.mxu0 %v3090
        %3131 = vmatprep.subr.bf16.mxu0 0
        %3132 = vmatpush1.bf16.msra.mxu0 %v3091
        %3133 = vmatprep.subr.bf16.mxu0 0
        %3134 = vmatpush1.bf16.msra.mxu0 %v3092
        %3135 = vmatprep.subr.bf16.mxu0 0
        %3136 = vmatpush1.bf16.msra.mxu0 %v3093
        %3137 = vmatprep.subr.bf16.mxu0 0
        %3138 = vmatpush1.bf16.msra.mxu0 %v3094
        %3139 = vmatprep.subr.bf16.mxu0 0
        %3140 = vmatpush1.bf16.msra.mxu0 %v3095
        %3141 = vmatprep.subr.bf16.mxu0 0
        %3142 = vmatpush1.bf16.msra.mxu0 %v3096
        %3143 = vmatprep.subr.bf16.mxu0 0
        %3144 = vmatpush1.bf16.msra.mxu0 %v3097
        %3145 = vmatprep.subr.bf16.mxu0 0
        %3146 = vmatpush1.bf16.msra.mxu0 %v3098
        %3147 = vmatprep.mubr.bf16.mxu0 %v2985
        %3148 = vmatmul.mubr.bf16.gmra.mrb[0].mxu0 %v2984
        %v3149 = vpop.f32.mrb[0].mxu0
        %v3150 = vadd.f32 0.0, %v3149
        %v3151 = vpop.f32.mrb[0].mxu0
        %v3152 = vpop.f32.mrb[0].mxu0
        %v3153 = vadd.f32 0.0, %v3152
        %v3154 = vpop.f32.mrb[0].mxu0
        %3155 = vdwg.mxu0
        %v3156 = vadd.f32 %v2978, %v3150
        %v3157 = vadd.f32 %v2981, %v3153
        %v3158 = vpack.c.bf16 %v2623, %v2621
        %v3159 = vpack.c.bf16 %v2624, %v2622
        %s3160 = scalar_lea.vmem %s7, 384
        %v3161 = vld [vmem:[%s3160] sm:$0xf]
        %v3162 = vld [vmem:[%s3160 + $0x4] sm:$0xf]
        %v3163 = vld [vmem:[%s3160 + $0x8] sm:$0xf]
        %v3164 = vld [vmem:[%s3160 + $0xc] sm:$0xf]
        %v3165 = vld [vmem:[%s3160 + $0x10] sm:$0xf]
        %v3166 = vld [vmem:[%s3160 + $0x14] sm:$0xf]
        %v3167 = vld [vmem:[%s3160 + $0x18] sm:$0xf]
        %v3168 = vld [vmem:[%s3160 + $0x1c] sm:$0xf]
        %v3169 = vld [vmem:[%s3160 + $0x20] sm:$0xf]
        %v3170 = vld [vmem:[%s3160 + $0x24] sm:$0xf]
        %v3171 = vld [vmem:[%s3160 + $0x28] sm:$0xf]
        %v3172 = vld [vmem:[%s3160 + $0x2c] sm:$0xf]
        %v3173 = vld [vmem:[%s3160 + $0x30] sm:$0xf]
        %v3174 = vld [vmem:[%s3160 + $0x34] sm:$0xf]
        %v3175 = vld [vmem:[%s3160 + $0x38] sm:$0xf]
        %v3176 = vld [vmem:[%s3160 + $0x3c] sm:$0xf]
        %v3177 = vld [vmem:[%s3160 + $0x40] sm:$0xf]
        %v3178 = vld [vmem:[%s3160 + $0x44] sm:$0xf]
        %v3179 = vld [vmem:[%s3160 + $0x48] sm:$0xf]
        %v3180 = vld [vmem:[%s3160 + $0x4c] sm:$0xf]
        %v3181 = vld [vmem:[%s3160 + $0x50] sm:$0xf]
        %v3182 = vld [vmem:[%s3160 + $0x54] sm:$0xf]
        %v3183 = vld [vmem:[%s3160 + $0x58] sm:$0xf]
        %v3184 = vld [vmem:[%s3160 + $0x5c] sm:$0xf]
        %v3185 = vld [vmem:[%s3160 + $0x60] sm:$0xf]
        %v3186 = vld [vmem:[%s3160 + $0x64] sm:$0xf]
        %v3187 = vld [vmem:[%s3160 + $0x68] sm:$0xf]
        %v3188 = vld [vmem:[%s3160 + $0x6c] sm:$0xf]
        %v3189 = vld [vmem:[%s3160 + $0x70] sm:$0xf]
        %v3190 = vld [vmem:[%s3160 + $0x74] sm:$0xf]
        %v3191 = vld [vmem:[%s3160 + $0x78] sm:$0xf]
        %v3192 = vld [vmem:[%s3160 + $0x7c] sm:$0xf]
        %v3225 = vunpack.c.l.b16 %v3161
        %v3226 = vunpack.c.l.b16 %v3162
        %v3227 = vunpack.c.l.b16 %v3163
        %v3228 = vunpack.c.l.b16 %v3164
        %v3229 = vunpack.c.l.b16 %v3165
        %v3230 = vunpack.c.l.b16 %v3166
        %v3231 = vunpack.c.l.b16 %v3167
        %v3232 = vunpack.c.l.b16 %v3168
        %v3233 = vunpack.c.l.b16 %v3169
        %v3234 = vunpack.c.l.b16 %v3170
        %v3235 = vunpack.c.l.b16 %v3171
        %v3236 = vunpack.c.l.b16 %v3172
        %v3237 = vunpack.c.l.b16 %v3173
        %v3238 = vunpack.c.l.b16 %v3174
        %v3239 = vunpack.c.l.b16 %v3175
        %v3240 = vunpack.c.l.b16 %v3176
        %v3241 = vunpack.c.l.b16 %v3177
        %v3242 = vunpack.c.l.b16 %v3178
        %v3243 = vunpack.c.l.b16 %v3179
        %v3244 = vunpack.c.l.b16 %v3180
        %v3245 = vunpack.c.l.b16 %v3181
        %v3246 = vunpack.c.l.b16 %v3182
        %v3247 = vunpack.c.l.b16 %v3183
        %v3248 = vunpack.c.l.b16 %v3184
        %v3249 = vunpack.c.l.b16 %v3185
        %v3250 = vunpack.c.l.b16 %v3186
        %v3251 = vunpack.c.l.b16 %v3187
        %v3252 = vunpack.c.l.b16 %v3188
        %v3253 = vunpack.c.l.b16 %v3189
        %v3254 = vunpack.c.l.b16 %v3190
        %v3255 = vunpack.c.l.b16 %v3191
        %v3256 = vunpack.c.l.b16 %v3192
        %v3257 = vpack.c.b16 %v3226, %v3225
        %v3258 = vpack.c.b16 %v3228, %v3227
        %v3259 = vpack.c.b16 %v3230, %v3229
        %v3260 = vpack.c.b16 %v3232, %v3231
        %v3261 = vpack.c.b16 %v3234, %v3233
        %v3262 = vpack.c.b16 %v3236, %v3235
        %v3263 = vpack.c.b16 %v3238, %v3237
        %v3264 = vpack.c.b16 %v3240, %v3239
        %v3265 = vpack.c.b16 %v3242, %v3241
        %v3266 = vpack.c.b16 %v3244, %v3243
        %v3267 = vpack.c.b16 %v3246, %v3245
        %v3268 = vpack.c.b16 %v3248, %v3247
        %v3269 = vpack.c.b16 %v3250, %v3249
        %v3270 = vpack.c.b16 %v3252, %v3251
        %v3271 = vpack.c.b16 %v3254, %v3253
        %v3272 = vpack.c.b16 %v3256, %v3255
        %3289 = vmatprep.subr.bf16.mxu0 0
        %3290 = vmatpush1.bf16.msra.mxu0 %v3257
        %3291 = vmatprep.subr.bf16.mxu0 0
        %3292 = vmatpush1.bf16.msra.mxu0 %v3258
        %3293 = vmatprep.subr.bf16.mxu0 0
        %3294 = vmatpush1.bf16.msra.mxu0 %v3259
        %3295 = vmatprep.subr.bf16.mxu0 0
        %3296 = vmatpush1.bf16.msra.mxu0 %v3260
        %3297 = vmatprep.subr.bf16.mxu0 0
        %3298 = vmatpush1.bf16.msra.mxu0 %v3261
        %3299 = vmatprep.subr.bf16.mxu0 0
        %3300 = vmatpush1.bf16.msra.mxu0 %v3262
        %3301 = vmatprep.subr.bf16.mxu0 0
        %3302 = vmatpush1.bf16.msra.mxu0 %v3263
        %3303 = vmatprep.subr.bf16.mxu0 0
        %3304 = vmatpush1.bf16.msra.mxu0 %v3264
        %3305 = vmatprep.subr.bf16.mxu0 0
        %3306 = vmatpush1.bf16.msra.mxu0 %v3265
        %3307 = vmatprep.subr.bf16.mxu0 0
        %3308 = vmatpush1.bf16.msra.mxu0 %v3266
        %3309 = vmatprep.subr.bf16.mxu0 0
        %3310 = vmatpush1.bf16.msra.mxu0 %v3267
        %3311 = vmatprep.subr.bf16.mxu0 0
        %3312 = vmatpush1.bf16.msra.mxu0 %v3268
        %3313 = vmatprep.subr.bf16.mxu0 0
        %3314 = vmatpush1.bf16.msra.mxu0 %v3269
        %3315 = vmatprep.subr.bf16.mxu0 0
        %3316 = vmatpush1.bf16.msra.mxu0 %v3270
        %3317 = vmatprep.subr.bf16.mxu0 0
        %3318 = vmatpush1.bf16.msra.mxu0 %v3271
        %3319 = vmatprep.subr.bf16.mxu0 0
        %3320 = vmatpush1.bf16.msra.mxu0 %v3272
        %3321 = vmatprep.mubr.bf16.mxu0 %v3159
        %3322 = vmatmul.mubr.bf16.gmra.mrb[0].mxu0 %v3158
        %v3323 = vpop.f32.mrb[0].mxu0
        %v3324 = vadd.f32 0.0, %v3323
        %v3325 = vpop.f32.mrb[0].mxu0
        %v3326 = vpop.f32.mrb[0].mxu0
        %v3327 = vadd.f32 0.0, %v3326
        %v3328 = vpop.f32.mrb[0].mxu0
        %3329 = vdwg.mxu0
        %v3330 = vadd.f32 %v3156, %v3324
        %v3331 = vadd.f32 %v3157, %v3327
        %v3332 = vpack.c.bf16 %v2627, %v2625
        %v3333 = vpack.c.bf16 %v2628, %v2626
        %s3334 = scalar_lea.vmem %s7, 512
        %v3335 = vld [vmem:[%s3334] sm:$0xf]
        %v3336 = vld [vmem:[%s3334 + $0x4] sm:$0xf]
        %v3337 = vld [vmem:[%s3334 + $0x8] sm:$0xf]
        %v3338 = vld [vmem:[%s3334 + $0xc] sm:$0xf]
        %v3339 = vld [vmem:[%s3334 + $0x10] sm:$0xf]
        %v3340 = vld [vmem:[%s3334 + $0x14] sm:$0xf]
        %v3341 = vld [vmem:[%s3334 + $0x18] sm:$0xf]
        %v3342 = vld [vmem:[%s3334 + $0x1c] sm:$0xf]
        %v3343 = vld [vmem:[%s3334 + $0x20] sm:$0xf]
        %v3344 = vld [vmem:[%s3334 + $0x24] sm:$0xf]
        %v3345 = vld [vmem:[%s3334 + $0x28] sm:$0xf]
        %v3346 = vld [vmem:[%s3334 + $0x2c] sm:$0xf]
        %v3347 = vld [vmem:[%s3334 + $0x30] sm:$0xf]
        %v3348 = vld [vmem:[%s3334 + $0x34] sm:$0xf]
        %v3349 = vld [vmem:[%s3334 + $0x38] sm:$0xf]
        %v3350 = vld [vmem:[%s3334 + $0x3c] sm:$0xf]
        %v3351 = vld [vmem:[%s3334 + $0x40] sm:$0xf]
        %v3352 = vld [vmem:[%s3334 + $0x44] sm:$0xf]
        %v3353 = vld [vmem:[%s3334 + $0x48] sm:$0xf]
        %v3354 = vld [vmem:[%s3334 + $0x4c] sm:$0xf]
        %v3355 = vld [vmem:[%s3334 + $0x50] sm:$0xf]
        %v3356 = vld [vmem:[%s3334 + $0x54] sm:$0xf]
        %v3357 = vld [vmem:[%s3334 + $0x58] sm:$0xf]
        %v3358 = vld [vmem:[%s3334 + $0x5c] sm:$0xf]
        %v3359 = vld [vmem:[%s3334 + $0x60] sm:$0xf]
        %v3360 = vld [vmem:[%s3334 + $0x64] sm:$0xf]
        %v3361 = vld [vmem:[%s3334 + $0x68] sm:$0xf]
        %v3362 = vld [vmem:[%s3334 + $0x6c] sm:$0xf]
        %v3363 = vld [vmem:[%s3334 + $0x70] sm:$0xf]
        %v3364 = vld [vmem:[%s3334 + $0x74] sm:$0xf]
        %v3365 = vld [vmem:[%s3334 + $0x78] sm:$0xf]
        %v3366 = vld [vmem:[%s3334 + $0x7c] sm:$0xf]
        %v3399 = vunpack.c.l.b16 %v3335
        %v3400 = vunpack.c.l.b16 %v3336
        %v3401 = vunpack.c.l.b16 %v3337
        %v3402 = vunpack.c.l.b16 %v3338
        %v3403 = vunpack.c.l.b16 %v3339
        %v3404 = vunpack.c.l.b16 %v3340
        %v3405 = vunpack.c.l.b16 %v3341
        %v3406 = vunpack.c.l.b16 %v3342
        %v3407 = vunpack.c.l.b16 %v3343
        %v3408 = vunpack.c.l.b16 %v3344
        %v3409 = vunpack.c.l.b16 %v3345
        %v3410 = vunpack.c.l.b16 %v3346
        %v3411 = vunpack.c.l.b16 %v3347
        %v3412 = vunpack.c.l.b16 %v3348
        %v3413 = vunpack.c.l.b16 %v3349
        %v3414 = vunpack.c.l.b16 %v3350
        %v3415 = vunpack.c.l.b16 %v3351
        %v3416 = vunpack.c.l.b16 %v3352
        %v3417 = vunpack.c.l.b16 %v3353
        %v3418 = vunpack.c.l.b16 %v3354
        %v3419 = vunpack.c.l.b16 %v3355
        %v3420 = vunpack.c.l.b16 %v3356
        %v3421 = vunpack.c.l.b16 %v3357
        %v3422 = vunpack.c.l.b16 %v3358
        %v3423 = vunpack.c.l.b16 %v3359
        %v3424 = vunpack.c.l.b16 %v3360
        %v3425 = vunpack.c.l.b16 %v3361
        %v3426 = vunpack.c.l.b16 %v3362
        %v3427 = vunpack.c.l.b16 %v3363
        %v3428 = vunpack.c.l.b16 %v3364
        %v3429 = vunpack.c.l.b16 %v3365
        %v3430 = vunpack.c.l.b16 %v3366
        %v3431 = vpack.c.b16 %v3400, %v3399
        %v3432 = vpack.c.b16 %v3402, %v3401
        %v3433 = vpack.c.b16 %v3404, %v3403
        %v3434 = vpack.c.b16 %v3406, %v3405
        %v3435 = vpack.c.b16 %v3408, %v3407
        %v3436 = vpack.c.b16 %v3410, %v3409
        %v3437 = vpack.c.b16 %v3412, %v3411
        %v3438 = vpack.c.b16 %v3414, %v3413
        %v3439 = vpack.c.b16 %v3416, %v3415
        %v3440 = vpack.c.b16 %v3418, %v3417
        %v3441 = vpack.c.b16 %v3420, %v3419
        %v3442 = vpack.c.b16 %v3422, %v3421
        %v3443 = vpack.c.b16 %v3424, %v3423
        %v3444 = vpack.c.b16 %v3426, %v3425
        %v3445 = vpack.c.b16 %v3428, %v3427
        %v3446 = vpack.c.b16 %v3430, %v3429
        %3463 = vmatprep.subr.bf16.mxu0 0
        %3464 = vmatpush1.bf16.msra.mxu0 %v3431
        %3465 = vmatprep.subr.bf16.mxu0 0
        %3466 = vmatpush1.bf16.msra.mxu0 %v3432
        %3467 = vmatprep.subr.bf16.mxu0 0
        %3468 = vmatpush1.bf16.msra.mxu0 %v3433
        %3469 = vmatprep.subr.bf16.mxu0 0
        %3470 = vmatpush1.bf16.msra.mxu0 %v3434
        %3471 = vmatprep.subr.bf16.mxu0 0
        %3472 = vmatpush1.bf16.msra.mxu0 %v3435
        %3473 = vmatprep.subr.bf16.mxu0 0
        %3474 = vmatpush1.bf16.msra.mxu0 %v3436
        %3475 = vmatprep.subr.bf16.mxu0 0
        %3476 = vmatpush1.bf16.msra.mxu0 %v3437
        %3477 = vmatprep.subr.bf16.mxu0 0
        %3478 = vmatpush1.bf16.msra.mxu0 %v3438
        %3479 = vmatprep.subr.bf16.mxu0 0
        %3480 = vmatpush1.bf16.msra.mxu0 %v3439
        %3481 = vmatprep.subr.bf16.mxu0 0
        %3482 = vmatpush1.bf16.msra.mxu0 %v3440
        %3483 = vmatprep.subr.bf16.mxu0 0
        %3484 = vmatpush1.bf16.msra.mxu0 %v3441
        %3485 = vmatprep.subr.bf16.mxu0 0
        %3486 = vmatpush1.bf16.msra.mxu0 %v3442
        %3487 = vmatprep.subr.bf16.mxu0 0
        %3488 = vmatpush1.bf16.msra.mxu0 %v3443
        %3489 = vmatprep.subr.bf16.mxu0 0
        %3490 = vmatpush1.bf16.msra.mxu0 %v3444
        %3491 = vmatprep.subr.bf16.mxu0 0
        %3492 = vmatpush1.bf16.msra.mxu0 %v3445
        %3493 = vmatprep.subr.bf16.mxu0 0
        %3494 = vmatpush1.bf16.msra.mxu0 %v3446
        %3495 = vmatprep.mubr.bf16.mxu0 %v3333
        %3496 = vmatmul.mubr.bf16.gmra.mrb[0].mxu0 %v3332
        %v3497 = vpop.f32.mrb[0].mxu0
        %v3498 = vadd.f32 0.0, %v3497
        %v3499 = vpop.f32.mrb[0].mxu0
        %v3500 = vpop.f32.mrb[0].mxu0
        %v3501 = vadd.f32 0.0, %v3500
        %v3502 = vpop.f32.mrb[0].mxu0
        %3503 = vdwg.mxu0
        %v3504 = vadd.f32 %v3330, %v3498
        %v3505 = vadd.f32 %v3331, %v3501
        %v3506 = vpack.c.bf16 %v2631, %v2629
        %v3507 = vpack.c.bf16 %v2632, %v2630
        %s3508 = scalar_lea.vmem %s7, 640
        %v3509 = vld [vmem:[%s3508] sm:$0xf]
        %v3510 = vld [vmem:[%s3508 + $0x4] sm:$0xf]
        %v3511 = vld [vmem:[%s3508 + $0x8] sm:$0xf]
        %v3512 = vld [vmem:[%s3508 + $0xc] sm:$0xf]
        %v3513 = vld [vmem:[%s3508 + $0x10] sm:$0xf]
        %v3514 = vld [vmem:[%s3508 + $0x14] sm:$0xf]
        %v3515 = vld [vmem:[%s3508 + $0x18] sm:$0xf]
        %v3516 = vld [vmem:[%s3508 + $0x1c] sm:$0xf]
        %v3517 = vld [vmem:[%s3508 + $0x20] sm:$0xf]
        %v3518 = vld [vmem:[%s3508 + $0x24] sm:$0xf]
        %v3519 = vld [vmem:[%s3508 + $0x28] sm:$0xf]
        %v3520 = vld [vmem:[%s3508 + $0x2c] sm:$0xf]
        %v3521 = vld [vmem:[%s3508 + $0x30] sm:$0xf]
        %v3522 = vld [vmem:[%s3508 + $0x34] sm:$0xf]
        %v3523 = vld [vmem:[%s3508 + $0x38] sm:$0xf]
        %v3524 = vld [vmem:[%s3508 + $0x3c] sm:$0xf]
        %v3525 = vld [vmem:[%s3508 + $0x40] sm:$0xf]
        %v3526 = vld [vmem:[%s3508 + $0x44] sm:$0xf]
        %v3527 = vld [vmem:[%s3508 + $0x48] sm:$0xf]
        %v3528 = vld [vmem:[%s3508 + $0x4c] sm:$0xf]
        %v3529 = vld [vmem:[%s3508 + $0x50] sm:$0xf]
        %v3530 = vld [vmem:[%s3508 + $0x54] sm:$0xf]
        %v3531 = vld [vmem:[%s3508 + $0x58] sm:$0xf]
        %v3532 = vld [vmem:[%s3508 + $0x5c] sm:$0xf]
        %v3533 = vld [vmem:[%s3508 + $0x60] sm:$0xf]
        %v3534 = vld [vmem:[%s3508 + $0x64] sm:$0xf]
        %v3535 = vld [vmem:[%s3508 + $0x68] sm:$0xf]
        %v3536 = vld [vmem:[%s3508 + $0x6c] sm:$0xf]
        %v3537 = vld [vmem:[%s3508 + $0x70] sm:$0xf]
        %v3538 = vld [vmem:[%s3508 + $0x74] sm:$0xf]
        %v3539 = vld [vmem:[%s3508 + $0x78] sm:$0xf]
        %v3540 = vld [vmem:[%s3508 + $0x7c] sm:$0xf]
        %v3573 = vunpack.c.l.b16 %v3509
        %v3574 = vunpack.c.l.b16 %v3510
        %v3575 = vunpack.c.l.b16 %v3511
        %v3576 = vunpack.c.l.b16 %v3512
        %v3577 = vunpack.c.l.b16 %v3513
        %v3578 = vunpack.c.l.b16 %v3514
        %v3579 = vunpack.c.l.b16 %v3515
        %v3580 = vunpack.c.l.b16 %v3516
        %v3581 = vunpack.c.l.b16 %v3517
        %v3582 = vunpack.c.l.b16 %v3518
        %v3583 = vunpack.c.l.b16 %v3519
        %v3584 = vunpack.c.l.b16 %v3520
        %v3585 = vunpack.c.l.b16 %v3521
        %v3586 = vunpack.c.l.b16 %v3522
        %v3587 = vunpack.c.l.b16 %v3523
        %v3588 = vunpack.c.l.b16 %v3524
        %v3589 = vunpack.c.l.b16 %v3525
        %v3590 = vunpack.c.l.b16 %v3526
        %v3591 = vunpack.c.l.b16 %v3527
        %v3592 = vunpack.c.l.b16 %v3528
        %v3593 = vunpack.c.l.b16 %v3529
        %v3594 = vunpack.c.l.b16 %v3530
        %v3595 = vunpack.c.l.b16 %v3531
        %v3596 = vunpack.c.l.b16 %v3532
        %v3597 = vunpack.c.l.b16 %v3533
        %v3598 = vunpack.c.l.b16 %v3534
        %v3599 = vunpack.c.l.b16 %v3535
        %v3600 = vunpack.c.l.b16 %v3536
        %v3601 = vunpack.c.l.b16 %v3537
        %v3602 = vunpack.c.l.b16 %v3538
        %v3603 = vunpack.c.l.b16 %v3539
        %v3604 = vunpack.c.l.b16 %v3540
        %v3605 = vpack.c.b16 %v3574, %v3573
        %v3606 = vpack.c.b16 %v3576, %v3575
        %v3607 = vpack.c.b16 %v3578, %v3577
        %v3608 = vpack.c.b16 %v3580, %v3579
        %v3609 = vpack.c.b16 %v3582, %v3581
        %v3610 = vpack.c.b16 %v3584, %v3583
        %v3611 = vpack.c.b16 %v3586, %v3585
        %v3612 = vpack.c.b16 %v3588, %v3587
        %v3613 = vpack.c.b16 %v3590, %v3589
        %v3614 = vpack.c.b16 %v3592, %v3591
        %v3615 = vpack.c.b16 %v3594, %v3593
        %v3616 = vpack.c.b16 %v3596, %v3595
        %v3617 = vpack.c.b16 %v3598, %v3597
        %v3618 = vpack.c.b16 %v3600, %v3599
        %v3619 = vpack.c.b16 %v3602, %v3601
        %v3620 = vpack.c.b16 %v3604, %v3603
        %3637 = vmatprep.subr.bf16.mxu0 0
        %3638 = vmatpush1.bf16.msra.mxu0 %v3605
        %3639 = vmatprep.subr.bf16.mxu0 0
        %3640 = vmatpush1.bf16.msra.mxu0 %v3606
        %3641 = vmatprep.subr.bf16.mxu0 0
        %3642 = vmatpush1.bf16.msra.mxu0 %v3607
        %3643 = vmatprep.subr.bf16.mxu0 0
        %3644 = vmatpush1.bf16.msra.mxu0 %v3608
        %3645 = vmatprep.subr.bf16.mxu0 0
        %3646 = vmatpush1.bf16.msra.mxu0 %v3609
        %3647 = vmatprep.subr.bf16.mxu0 0
        %3648 = vmatpush1.bf16.msra.mxu0 %v3610
        %3649 = vmatprep.subr.bf16.mxu0 0
        %3650 = vmatpush1.bf16.msra.mxu0 %v3611
        %3651 = vmatprep.subr.bf16.mxu0 0
        %3652 = vmatpush1.bf16.msra.mxu0 %v3612
        %3653 = vmatprep.subr.bf16.mxu0 0
        %3654 = vmatpush1.bf16.msra.mxu0 %v3613
        %3655 = vmatprep.subr.bf16.mxu0 0
        %3656 = vmatpush1.bf16.msra.mxu0 %v3614
        %3657 = vmatprep.subr.bf16.mxu0 0
        %3658 = vmatpush1.bf16.msra.mxu0 %v3615
        %3659 = vmatprep.subr.bf16.mxu0 0
        %3660 = vmatpush1.bf16.msra.mxu0 %v3616
        %3661 = vmatprep.subr.bf16.mxu0 0
        %3662 = vmatpush1.bf16.msra.mxu0 %v3617
        %3663 = vmatprep.subr.bf16.mxu0 0
        %3664 = vmatpush1.bf16.msra.mxu0 %v3618
        %3665 = vmatprep.subr.bf16.mxu0 0
        %3666 = vmatpush1.bf16.msra.mxu0 %v3619
        %3667 = vmatprep.subr.bf16.mxu0 0
        %3668 = vmatpush1.bf16.msra.mxu0 %v3620
        %3669 = vmatprep.mubr.bf16.mxu0 %v3507
        %3670 = vmatmul.mubr.bf16.gmra.mrb[0].mxu0 %v3506
        %v3671 = vpop.f32.mrb[0].mxu0
        %v3672 = vadd.f32 0.0, %v3671
        %v3673 = vpop.f32.mrb[0].mxu0
        %v3674 = vpop.f32.mrb[0].mxu0
        %v3675 = vadd.f32 0.0, %v3674
        %v3676 = vpop.f32.mrb[0].mxu0
        %3677 = vdwg.mxu0
        %v3678 = vadd.f32 %v3504, %v3672
        %v3679 = vadd.f32 %v3505, %v3675
        %v3680 = vpack.c.bf16 %v2635, %v2633
        %v3681 = vpack.c.bf16 %v2636, %v2634
        %s3682 = scalar_lea.vmem %s7, 768
        %v3683 = vld [vmem:[%s3682] sm:$0xf]
        %v3684 = vld [vmem:[%s3682 + $0x4] sm:$0xf]
        %v3685 = vld [vmem:[%s3682 + $0x8] sm:$0xf]
        %v3686 = vld [vmem:[%s3682 + $0xc] sm:$0xf]
        %v3687 = vld [vmem:[%s3682 + $0x10] sm:$0xf]
        %v3688 = vld [vmem:[%s3682 + $0x14] sm:$0xf]
        %v3689 = vld [vmem:[%s3682 + $0x18] sm:$0xf]
        %v3690 = vld [vmem:[%s3682 + $0x1c] sm:$0xf]
        %v3691 = vld [vmem:[%s3682 + $0x20] sm:$0xf]
        %v3692 = vld [vmem:[%s3682 + $0x24] sm:$0xf]
        %v3693 = vld [vmem:[%s3682 + $0x28] sm:$0xf]
        %v3694 = vld [vmem:[%s3682 + $0x2c] sm:$0xf]
        %v3695 = vld [vmem:[%s3682 + $0x30] sm:$0xf]
        %v3696 = vld [vmem:[%s3682 + $0x34] sm:$0xf]
        %v3697 = vld [vmem:[%s3682 + $0x38] sm:$0xf]
        %v3698 = vld [vmem:[%s3682 + $0x3c] sm:$0xf]
        %v3699 = vld [vmem:[%s3682 + $0x40] sm:$0xf]
        %v3700 = vld [vmem:[%s3682 + $0x44] sm:$0xf]
        %v3701 = vld [vmem:[%s3682 + $0x48] sm:$0xf]
        %v3702 = vld [vmem:[%s3682 + $0x4c] sm:$0xf]
        %v3703 = vld [vmem:[%s3682 + $0x50] sm:$0xf]
        %v3704 = vld [vmem:[%s3682 + $0x54] sm:$0xf]
        %v3705 = vld [vmem:[%s3682 + $0x58] sm:$0xf]
        %v3706 = vld [vmem:[%s3682 + $0x5c] sm:$0xf]
        %v3707 = vld [vmem:[%s3682 + $0x60] sm:$0xf]
        %v3708 = vld [vmem:[%s3682 + $0x64] sm:$0xf]
        %v3709 = vld [vmem:[%s3682 + $0x68] sm:$0xf]
        %v3710 = vld [vmem:[%s3682 + $0x6c] sm:$0xf]
        %v3711 = vld [vmem:[%s3682 + $0x70] sm:$0xf]
        %v3712 = vld [vmem:[%s3682 + $0x74] sm:$0xf]
        %v3713 = vld [vmem:[%s3682 + $0x78] sm:$0xf]
        %v3714 = vld [vmem:[%s3682 + $0x7c] sm:$0xf]
        %v3747 = vunpack.c.l.b16 %v3683
        %v3748 = vunpack.c.l.b16 %v3684
        %v3749 = vunpack.c.l.b16 %v3685
        %v3750 = vunpack.c.l.b16 %v3686
        %v3751 = vunpack.c.l.b16 %v3687
        %v3752 = vunpack.c.l.b16 %v3688
        %v3753 = vunpack.c.l.b16 %v3689
        %v3754 = vunpack.c.l.b16 %v3690
        %v3755 = vunpack.c.l.b16 %v3691
        %v3756 = vunpack.c.l.b16 %v3692
        %v3757 = vunpack.c.l.b16 %v3693
        %v3758 = vunpack.c.l.b16 %v3694
        %v3759 = vunpack.c.l.b16 %v3695
        %v3760 = vunpack.c.l.b16 %v3696
        %v3761 = vunpack.c.l.b16 %v3697
        %v3762 = vunpack.c.l.b16 %v3698
        %v3763 = vunpack.c.l.b16 %v3699
        %v3764 = vunpack.c.l.b16 %v3700
        %v3765 = vunpack.c.l.b16 %v3701
        %v3766 = vunpack.c.l.b16 %v3702
        %v3767 = vunpack.c.l.b16 %v3703
        %v3768 = vunpack.c.l.b16 %v3704
        %v3769 = vunpack.c.l.b16 %v3705
        %v3770 = vunpack.c.l.b16 %v3706
        %v3771 = vunpack.c.l.b16 %v3707
        %v3772 = vunpack.c.l.b16 %v3708
        %v3773 = vunpack.c.l.b16 %v3709
        %v3774 = vunpack.c.l.b16 %v3710
        %v3775 = vunpack.c.l.b16 %v3711
        %v3776 = vunpack.c.l.b16 %v3712
        %v3777 = vunpack.c.l.b16 %v3713
        %v3778 = vunpack.c.l.b16 %v3714
        %v3779 = vpack.c.b16 %v3748, %v3747
        %v3780 = vpack.c.b16 %v3750, %v3749
        %v3781 = vpack.c.b16 %v3752, %v3751
        %v3782 = vpack.c.b16 %v3754, %v3753
        %v3783 = vpack.c.b16 %v3756, %v3755
        %v3784 = vpack.c.b16 %v3758, %v3757
        %v3785 = vpack.c.b16 %v3760, %v3759
        %v3786 = vpack.c.b16 %v3762, %v3761
        %v3787 = vpack.c.b16 %v3764, %v3763
        %v3788 = vpack.c.b16 %v3766, %v3765
        %v3789 = vpack.c.b16 %v3768, %v3767
        %v3790 = vpack.c.b16 %v3770, %v3769
        %v3791 = vpack.c.b16 %v3772, %v3771
        %v3792 = vpack.c.b16 %v3774, %v3773
        %v3793 = vpack.c.b16 %v3776, %v3775
        %v3794 = vpack.c.b16 %v3778, %v3777
        %3811 = vmatprep.subr.bf16.mxu0 0
        %3812 = vmatpush1.bf16.msra.mxu0 %v3779
        %3813 = vmatprep.subr.bf16.mxu0 0
        %3814 = vmatpush1.bf16.msra.mxu0 %v3780
        %3815 = vmatprep.subr.bf16.mxu0 0
        %3816 = vmatpush1.bf16.msra.mxu0 %v3781
        %3817 = vmatprep.subr.bf16.mxu0 0
        %3818 = vmatpush1.bf16.msra.mxu0 %v3782
        %3819 = vmatprep.subr.bf16.mxu0 0
        %3820 = vmatpush1.bf16.msra.mxu0 %v3783
        %3821 = vmatprep.subr.bf16.mxu0 0
        %3822 = vmatpush1.bf16.msra.mxu0 %v3784
        %3823 = vmatprep.subr.bf16.mxu0 0
        %3824 = vmatpush1.bf16.msra.mxu0 %v3785
        %3825 = vmatprep.subr.bf16.mxu0 0
        %3826 = vmatpush1.bf16.msra.mxu0 %v3786
        %3827 = vmatprep.subr.bf16.mxu0 0
        %3828 = vmatpush1.bf16.msra.mxu0 %v3787
        %3829 = vmatprep.subr.bf16.mxu0 0
        %3830 = vmatpush1.bf16.msra.mxu0 %v3788
        %3831 = vmatprep.subr.bf16.mxu0 0
        %3832 = vmatpush1.bf16.msra.mxu0 %v3789
        %3833 = vmatprep.subr.bf16.mxu0 0
        %3834 = vmatpush1.bf16.msra.mxu0 %v3790
        %3835 = vmatprep.subr.bf16.mxu0 0
        %3836 = vmatpush1.bf16.msra.mxu0 %v3791
        %3837 = vmatprep.subr.bf16.mxu0 0
        %3838 = vmatpush1.bf16.msra.mxu0 %v3792
        %3839 = vmatprep.subr.bf16.mxu0 0
        %3840 = vmatpush1.bf16.msra.mxu0 %v3793
        %3841 = vmatprep.subr.bf16.mxu0 0
        %3842 = vmatpush1.bf16.msra.mxu0 %v3794
        %3843 = vmatprep.mubr.bf16.mxu0 %v3681
        %3844 = vmatmul.mubr.bf16.gmra.mrb[0].mxu0 %v3680
        %v3845 = vpop.f32.mrb[0].mxu0
        %v3846 = vadd.f32 0.0, %v3845
        %v3847 = vpop.f32.mrb[0].mxu0
        %v3848 = vpop.f32.mrb[0].mxu0
        %v3849 = vadd.f32 0.0, %v3848
        %v3850 = vpop.f32.mrb[0].mxu0
        %3851 = vdwg.mxu0
        %v3852 = vadd.f32 %v3678, %v3846
        %v3853 = vadd.f32 %v3679, %v3849
        %v3854 = vpack.c.bf16 %v2639, %v2637
        %v3855 = vpack.c.bf16 %v2640, %v2638
        %s3856 = scalar_lea.vmem %s7, 896
        %v3857 = vld [vmem:[%s3856] sm:$0xf]
        %v3858 = vld [vmem:[%s3856 + $0x4] sm:$0xf]
        %v3859 = vld [vmem:[%s3856 + $0x8] sm:$0xf]
        %v3860 = vld [vmem:[%s3856 + $0xc] sm:$0xf]
        %v3861 = vld [vmem:[%s3856 + $0x10] sm:$0xf]
        %v3862 = vld [vmem:[%s3856 + $0x14] sm:$0xf]
        %v3863 = vld [vmem:[%s3856 + $0x18] sm:$0xf]
        %v3864 = vld [vmem:[%s3856 + $0x1c] sm:$0xf]
        %v3865 = vld [vmem:[%s3856 + $0x20] sm:$0xf]
        %v3866 = vld [vmem:[%s3856 + $0x24] sm:$0xf]
        %v3867 = vld [vmem:[%s3856 + $0x28] sm:$0xf]
        %v3868 = vld [vmem:[%s3856 + $0x2c] sm:$0xf]
        %v3869 = vld [vmem:[%s3856 + $0x30] sm:$0xf]
        %v3870 = vld [vmem:[%s3856 + $0x34] sm:$0xf]
        %v3871 = vld [vmem:[%s3856 + $0x38] sm:$0xf]
        %v3872 = vld [vmem:[%s3856 + $0x3c] sm:$0xf]
        %v3873 = vld [vmem:[%s3856 + $0x40] sm:$0xf]
        %v3874 = vld [vmem:[%s3856 + $0x44] sm:$0xf]
        %v3875 = vld [vmem:[%s3856 + $0x48] sm:$0xf]
        %v3876 = vld [vmem:[%s3856 + $0x4c] sm:$0xf]
        %v3877 = vld [vmem:[%s3856 + $0x50] sm:$0xf]
        %v3878 = vld [vmem:[%s3856 + $0x54] sm:$0xf]
        %v3879 = vld [vmem:[%s3856 + $0x58] sm:$0xf]
        %v3880 = vld [vmem:[%s3856 + $0x5c] sm:$0xf]
        %v3881 = vld [vmem:[%s3856 + $0x60] sm:$0xf]
        %v3882 = vld [vmem:[%s3856 + $0x64] sm:$0xf]
        %v3883 = vld [vmem:[%s3856 + $0x68] sm:$0xf]
        %v3884 = vld [vmem:[%s3856 + $0x6c] sm:$0xf]
        %v3885 = vld [vmem:[%s3856 + $0x70] sm:$0xf]
        %v3886 = vld [vmem:[%s3856 + $0x74] sm:$0xf]
        %v3887 = vld [vmem:[%s3856 + $0x78] sm:$0xf]
        %v3888 = vld [vmem:[%s3856 + $0x7c] sm:$0xf]
        %v3921 = vunpack.c.l.b16 %v3857
        %v3922 = vunpack.c.l.b16 %v3858
        %v3923 = vunpack.c.l.b16 %v3859
        %v3924 = vunpack.c.l.b16 %v3860
        %v3925 = vunpack.c.l.b16 %v3861
        %v3926 = vunpack.c.l.b16 %v3862
        %v3927 = vunpack.c.l.b16 %v3863
        %v3928 = vunpack.c.l.b16 %v3864
        %v3929 = vunpack.c.l.b16 %v3865
        %v3930 = vunpack.c.l.b16 %v3866
        %v3931 = vunpack.c.l.b16 %v3867
        %v3932 = vunpack.c.l.b16 %v3868
        %v3933 = vunpack.c.l.b16 %v3869
        %v3934 = vunpack.c.l.b16 %v3870
        %v3935 = vunpack.c.l.b16 %v3871
        %v3936 = vunpack.c.l.b16 %v3872
        %v3937 = vunpack.c.l.b16 %v3873
        %v3938 = vunpack.c.l.b16 %v3874
        %v3939 = vunpack.c.l.b16 %v3875
        %v3940 = vunpack.c.l.b16 %v3876
        %v3941 = vunpack.c.l.b16 %v3877
        %v3942 = vunpack.c.l.b16 %v3878
        %v3943 = vunpack.c.l.b16 %v3879
        %v3944 = vunpack.c.l.b16 %v3880
        %v3945 = vunpack.c.l.b16 %v3881
        %v3946 = vunpack.c.l.b16 %v3882
        %v3947 = vunpack.c.l.b16 %v3883
        %v3948 = vunpack.c.l.b16 %v3884
        %v3949 = vunpack.c.l.b16 %v3885
        %v3950 = vunpack.c.l.b16 %v3886
        %v3951 = vunpack.c.l.b16 %v3887
        %v3952 = vunpack.c.l.b16 %v3888
        %v3953 = vpack.c.b16 %v3922, %v3921
        %v3954 = vpack.c.b16 %v3924, %v3923
        %v3955 = vpack.c.b16 %v3926, %v3925
        %v3956 = vpack.c.b16 %v3928, %v3927
        %v3957 = vpack.c.b16 %v3930, %v3929
        %v3958 = vpack.c.b16 %v3932, %v3931
        %v3959 = vpack.c.b16 %v3934, %v3933
        %v3960 = vpack.c.b16 %v3936, %v3935
        %v3961 = vpack.c.b16 %v3938, %v3937
        %v3962 = vpack.c.b16 %v3940, %v3939
        %v3963 = vpack.c.b16 %v3942, %v3941
        %v3964 = vpack.c.b16 %v3944, %v3943
        %v3965 = vpack.c.b16 %v3946, %v3945
        %v3966 = vpack.c.b16 %v3948, %v3947
        %v3967 = vpack.c.b16 %v3950, %v3949
        %v3968 = vpack.c.b16 %v3952, %v3951
        %3985 = vmatprep.subr.bf16.mxu0 0
        %3986 = vmatpush1.bf16.msra.mxu0 %v3953
        %3987 = vmatprep.subr.bf16.mxu0 0
        %3988 = vmatpush1.bf16.msra.mxu0 %v3954
        %3989 = vmatprep.subr.bf16.mxu0 0
        %3990 = vmatpush1.bf16.msra.mxu0 %v3955
        %3991 = vmatprep.subr.bf16.mxu0 0
        %3992 = vmatpush1.bf16.msra.mxu0 %v3956
        %3993 = vmatprep.subr.bf16.mxu0 0
        %3994 = vmatpush1.bf16.msra.mxu0 %v3957
        %3995 = vmatprep.subr.bf16.mxu0 0
        %3996 = vmatpush1.bf16.msra.mxu0 %v3958
        %3997 = vmatprep.subr.bf16.mxu0 0
        %3998 = vmatpush1.bf16.msra.mxu0 %v3959
        %3999 = vmatprep.subr.bf16.mxu0 0
        %4000 = vmatpush1.bf16.msra.mxu0 %v3960
        %4001 = vmatprep.subr.bf16.mxu0 0
        %4002 = vmatpush1.bf16.msra.mxu0 %v3961
        %4003 = vmatprep.subr.bf16.mxu0 0
        %4004 = vmatpush1.bf16.msra.mxu0 %v3962
        %4005 = vmatprep.subr.bf16.mxu0 0
        %4006 = vmatpush1.bf16.msra.mxu0 %v3963
        %4007 = vmatprep.subr.bf16.mxu0 0
        %4008 = vmatpush1.bf16.msra.mxu0 %v3964
        %4009 = vmatprep.subr.bf16.mxu0 0
        %4010 = vmatpush1.bf16.msra.mxu0 %v3965
        %4011 = vmatprep.subr.bf16.mxu0 0
        %4012 = vmatpush1.bf16.msra.mxu0 %v3966
        %4013 = vmatprep.subr.bf16.mxu0 0
        %4014 = vmatpush1.bf16.msra.mxu0 %v3967
        %4015 = vmatprep.subr.bf16.mxu0 0
        %4016 = vmatpush1.bf16.msra.mxu0 %v3968
        %4017 = vmatprep.mubr.bf16.mxu0 %v3855
        %4018 = vmatmul.mubr.bf16.gmra.mrb[0].mxu0 %v3854
        %v4019 = vpop.f32.mrb[0].mxu0
        %v4020 = vadd.f32 0.0, %v4019
        %v4021 = vpop.f32.mrb[0].mxu0
        %v4022 = vpop.f32.mrb[0].mxu0
        %v4023 = vadd.f32 0.0, %v4022
        %v4024 = vpop.f32.mrb[0].mxu0
        %4025 = vdwg.mxu0
        %v4026 = vadd.f32 %v3852, %v4020
        %v4027 = vadd.f32 %v3853, %v4023
        %v4028 = vld [vmem:[%s8] sm:$0x1]
        %v4030 = vlaneseq
        %v4031 = vshrl.u32 %v4030, 7
        %v4032 = vsub.s32 0, %v4031
        %v4033 = vrot.slane %v4028, %v4032
        %v4035 = vadd.f32 %v4026, %v4033
        %v4036 = vadd.f32 %v4027, %v4033
        %v4037 = vmax.f32 %v4035, 0.0
        %v4038 = vmax.f32 %v4036, 0.0
        %v4039 = vpack.c.bf16 %v4038, %v4037
        %v4040 = vld [vmem:[%s9] sm:$0xf]
        %v4041 = vld [vmem:[%s9 + $0x4] sm:$0xf]
        %v4042 = vld [vmem:[%s9 + $0x8] sm:$0xf]
        %v4043 = vld [vmem:[%s9 + $0xc] sm:$0xf]
        %v4044 = vld [vmem:[%s9 + $0x10] sm:$0xf]
        %v4045 = vld [vmem:[%s9 + $0x14] sm:$0xf]
        %v4046 = vld [vmem:[%s9 + $0x18] sm:$0xf]
        %v4047 = vld [vmem:[%s9 + $0x1c] sm:$0xf]
        %v4048 = vld [vmem:[%s9 + $0x20] sm:$0xf]
        %v4049 = vld [vmem:[%s9 + $0x24] sm:$0xf]
        %v4050 = vld [vmem:[%s9 + $0x28] sm:$0xf]
        %v4051 = vld [vmem:[%s9 + $0x2c] sm:$0xf]
        %v4052 = vld [vmem:[%s9 + $0x30] sm:$0xf]
        %v4053 = vld [vmem:[%s9 + $0x34] sm:$0xf]
        %v4054 = vld [vmem:[%s9 + $0x38] sm:$0xf]
        %v4055 = vld [vmem:[%s9 + $0x3c] sm:$0xf]
        %v4056 = vld [vmem:[%s10] sm:$0x1]
        %v4058 = vlaneseq
        %v4059 = vshrl.u32 %v4058, 7
        %v4060 = vsub.s32 0, %v4059
        %v4061 = vrot.slane %v4056, %v4060
        %v4079 = vunpack.c.l.b16 %v4040
        %v4080 = vunpack.c.l.b16 %v4041
        %v4081 = vunpack.c.l.b16 %v4042
        %v4082 = vunpack.c.l.b16 %v4043
        %v4083 = vunpack.c.l.b16 %v4044
        %v4084 = vunpack.c.l.b16 %v4045
        %v4085 = vunpack.c.l.b16 %v4046
        %v4086 = vunpack.c.l.b16 %v4047
        %v4087 = vunpack.c.l.b16 %v4048
        %v4088 = vunpack.c.l.b16 %v4049
        %v4089 = vunpack.c.l.b16 %v4050
        %v4090 = vunpack.c.l.b16 %v4051
        %v4091 = vunpack.c.l.b16 %v4052
        %v4092 = vunpack.c.l.b16 %v4053
        %v4093 = vunpack.c.l.b16 %v4054
        %v4094 = vunpack.c.l.b16 %v4055
        %v4095 = vpack.c.b16 %v4080, %v4079
        %v4096 = vpack.c.b16 %v4082, %v4081
        %v4097 = vpack.c.b16 %v4084, %v4083
        %v4098 = vpack.c.b16 %v4086, %v4085
        %v4099 = vpack.c.b16 %v4088, %v4087
        %v4100 = vpack.c.b16 %v4090, %v4089
        %v4101 = vpack.c.b16 %v4092, %v4091
        %v4102 = vpack.c.b16 %v4094, %v4093
        %4111 = vmatprep.subr.bf16.mxu0 0
        %4112 = vmatpush1.bf16.msra.mxu0 %v4095
        %4113 = vmatprep.subr.bf16.mxu0 0
        %4114 = vmatpush1.bf16.msra.mxu0 %v4096
        %4115 = vmatprep.subr.bf16.mxu0 0
        %4116 = vmatpush1.bf16.msra.mxu0 %v4097
        %4117 = vmatprep.subr.bf16.mxu0 0
        %4118 = vmatpush1.bf16.msra.mxu0 %v4098
        %4119 = vmatprep.subr.bf16.mxu0 0
        %4120 = vmatpush1.bf16.msra.mxu0 %v4099
        %4121 = vmatprep.subr.bf16.mxu0 0
        %4122 = vmatpush1.bf16.msra.mxu0 %v4100
        %4123 = vmatprep.subr.bf16.mxu0 0
        %4124 = vmatpush1.bf16.msra.mxu0 %v4101
        %4125 = vmatprep.subr.bf16.mxu0 0
        %4126 = vmatpush1.bf16.msra.mxu0 %v4102
        %4127 = vmatprep.subr.bf16.mxu0 0
        %4128 = vmatpush1.bf16.msra.mxu0 0
        %4129 = vmatprep.subr.bf16.mxu0 0
        %4130 = vmatpush1.bf16.msra.mxu0 0
        %4131 = vmatprep.subr.bf16.mxu0 0
        %4132 = vmatpush1.bf16.msra.mxu0 0
        %4133 = vmatprep.subr.bf16.mxu0 0
        %4134 = vmatpush1.bf16.msra.mxu0 0
        %4135 = vmatprep.subr.bf16.mxu0 0
        %4136 = vmatpush1.bf16.msra.mxu0 0
        %4137 = vmatprep.subr.bf16.mxu0 0
        %4138 = vmatpush1.bf16.msra.mxu0 0
        %4139 = vmatprep.subr.bf16.mxu0 0
        %4140 = vmatpush1.bf16.msra.mxu0 0
        %4141 = vmatprep.subr.bf16.mxu0 0
        %4142 = vmatpush1.bf16.msra.mxu0 0
        %4143 = vmatprep.mubr.bf16.mxu0 0
        %4144 = vmatmul.mubr.bf16.gmra.mrb[0].mxu0 %v4039
        %v4145 = vpop.f32.mrb[0].mxu0
        %v4146 = vadd.f32 %v4061, %v4145
        %v4147 = vpop.f32.mrb[0].mxu0
        %v4148 = vpop.f32.mrb[0].mxu0
        %v4149 = vadd.f32 %v4061, %v4148
        %v4150 = vpop.f32.mrb[0].mxu0
        %4151 = vdwg.mxu0
        %vm4152 = vcmask 48128
        %4153 = vst.msk [vmem:[%s403] sm:$0xff] %vm4152, %v4146
        %4154 = vst.msk [vmem:[%s403 + $0x8] sm:$0xff] %vm4152, %v4149
        %s4155 = smul.u32 2, %s23
        %p4156 = scmp.lt.s32.totalorder %s4155, 3
        %s4157 = scalar_select %p4156, %s4155, 3
        %s4158 = smul.addr %s4157, 8
        %s4159 = scalar_lea.vmem %s11, %s4158
        // Predicated region
        $region69: #{cnn_forward.1} parent=63 // pred_check
          %p4160 = pneg %p277
        $region70: #{cnn_forward.1} parent=63 // pred_check_branch
          %4162 = sbr.rel (%p4160) target = $region72
        $region71: #{cnn_forward.1} parent=63 // pred_region
          %s4163 = smul.u32 2, %s23
        $region72: #{cnn_forward.1} parent=63 // pred_fallthru
          _
      $region64: #{cnn_forward.1} parent=5 // pred_fallthru
        _
      %p4164 = scmp.le.s32.totalorder 2, %s18
      // Predicated region
      $region73: #{cnn_forward.1} parent=5 // pred_check
        %p4165 = pneg %p4164
      $region74: #{cnn_forward.1} parent=5 // pred_check_branch
        %4167 = sbr.rel (%p4165) target = $region76
      $region75: #{cnn_forward.1} parent=5 // pred_region
        %s4168 = ssub.s32 %s18, 2
        // Predicated region
        $region77: #{cnn_forward.1} parent=75 // pred_check
          %p4169 = pneg %p283
        $region78: #{cnn_forward.1} parent=75 // pred_check_branch
          %4171 = sbr.rel (%p4169) target = $region80
        $region79: #{cnn_forward.1} parent=75 // pred_region
          %s4172 = smul.u32 2, %s24
          %p4173 = scmp.lt.s32.totalorder %s4172, 3
          %s4174 = scalar_select %p4173, %s4172, 3
          %s4175 = smul.addr %s4174, 8
          %s4176 = scalar_lea.vmem %s11, %s4175
        $region80: #{cnn_forward.1} parent=75 // pred_fallthru
          _
      $region76: #{cnn_forward.1} parent=5 // pred_fallthru
        _
    $region6: #{cnn_forward.1} parent=1 // loop_footer
      %s22 = sadd.s32 1, %s18
    $region7: #{cnn_forward.1} parent=1 // loop_footer_branch
      %17 = sbr.rel target = $region3
    $region8: #{cnn_forward.1} parent=1 // loop_exit
      _
    %4177 = vsyncpa [#allocation3], 1
    %s4178 = scalar_lea.sflag [#allocation3], 1
    %4179 = vsyncpa %s4178, 1

</llo_original>
